<compile_context>
chip_gen: v7x
topology: tpu7x:2x2x1
jax: 0.10.0
libtpu: 0.0.40
codegen_flags: <defaults>
</compile_context>

<pallas_src>
import functools

import numpy as np
import jax
import jax.numpy as jnp
from jax import lax
from jax.experimental import pallas as pl
from jax.experimental.pallas import tpu as pltpu

# -----------------------------------------------------------------------------
# Small, module-consistent configuration
# -----------------------------------------------------------------------------
B, S, C_IN, H_IMG, W_IMG = 2, 2, 3, 32, 32
Z_VOX, Y_VOX, X_VOX = 8, 4, 8
LATENT = 32                    # latent_dim == feat2d_dim
N_CLASSES = 8                  # train_task == 'both' -> Decoder(n_classes=8)

VOX_BOUNDS = (-8.0, 8.0, -2.0, 2.0, 2.0, 10.0)   # XMIN,XMAX, YMIN,YMAX, ZMIN,ZMAX

_IMAGENET_MEAN = np.array([0.485, 0.456, 0.406], np.float32)
_IMAGENET_STD = np.array([0.229, 0.224, 0.225], np.float32)
# (x + 0.5 - mean)/std == (x + (0.5 - mean)) * (1/std); the scale is folded into
# conv1's weights, the shift stays on the input (zero padding exactness).
_RGB_SHIFT = jnp.asarray((0.5 - _IMAGENET_MEAN).reshape(1, 1, 1, 3))
_RGB_INV_STD = jnp.asarray(1.0 / _IMAGENET_STD)


def _round_up(x, m):
    return ((x + m - 1) // m) * m


def _pad_ch(c):
    return _round_up(c, 128)


@functools.lru_cache(maxsize=1)
def _wide_tile_cap():
    # v6e/v7x MXU is 256-wide (bf16) -> allow 256 tiles; v5e is 4x128^2 -> 128.
    try:
        kind = jax.devices()[0].device_kind.lower()
    except Exception:
        return 256
    return 128 if "v5" in kind else 256


# -----------------------------------------------------------------------------
# Pallas kernel 1: fused conv matmul
#   (M, K) bf16 x (K, tn) bf16 -> f32, epilogue fuses:
#   bias | BatchNorm(gamma,beta) or InstanceNorm(per-sample) | residual | ReLU
#   Single K step (tk == K), grid only over N tiles, no accumulator scratch.
# -----------------------------------------------------------------------------
def _fused_conv_kernel(*refs, has_bias, norm, has_res, act, ns, eps):
    idx = 0
    a_ref = refs[idx]; idx += 1
    w_ref = refs[idx]; idx += 1
    bias_ref = None
    if has_bias:
        bias_ref = refs[idx]; idx += 1
    g_ref = b_ref = None
    if norm == "batch":
        g_ref = refs[idx]; idx += 1
        b_ref = refs[idx]; idx += 1
    r_ref = None
    if has_res:
        r_ref = refs[idx]; idx += 1
    o_ref = refs[idx]

    acc = jnp.dot(a_ref[...], w_ref[...], preferred_element_type=jnp.float32)
    if has_bias:
        acc = acc + bias_ref[...]

    if norm == "batch":
        # training-mode BatchNorm2d: per-channel stats over all M rows
        mean = jnp.mean(acc, axis=0, keepdims=True)
        var = jnp.mean(jnp.square(acc - mean), axis=0, keepdims=True)
        acc = (acc - mean) * lax.rsqrt(var + eps) * g_ref[...] + b_ref[...]
    elif norm == "instance":
        # InstanceNorm2d (affine=False): per-sample, per-channel stats; samples
        # are contiguous equal-length row groups (M == ns * H*W).
        m_rows = acc.shape[0]
        seg = m_rows // ns
        row = lax.broadcasted_iota(jnp.int32, acc.shape, 0)
        out = jnp.zeros_like(acc)
        for s_i in range(ns):
            msk = ((row >= s_i * seg) & (row < (s_i + 1) * seg)).astype(jnp.float32)
            mean = jnp.sum(acc * msk, axis=0, keepdims=True) * (1.0 / seg)
            var = jnp.sum(jnp.square(acc - mean) * msk, axis=0,
                          keepdims=True) * (1.0 / seg)
            out = out + msk * ((acc - mean) * lax.rsqrt(var + eps))
        acc = out

    if has_res:
        acc = acc + r_ref[...].astype(jnp.float32)
    if act == "relu":
        acc = jnp.maximum(acc, 0.0)
    o_ref[...] = acc.astype(o_ref.dtype)


def pallas_conv_matmul(a, wp, *, norm="none", bn=None, residual=None,
                       act="none", ns=1, out_dtype=jnp.bfloat16):
    """a: (M, K) bf16 im2col activations; wp['w']: (K, Np) bf16 weights."""
    M, K = a.shape
    Kw, Np = wp["w"].shape
    assert K == Kw, (K, Kw)
    cap = _wide_tile_cap()
    tn = 256 if (cap >= 256 and Np % 256 == 0 and Np >= 512) else 128
    grid = (Np // tn,)

    in_specs = [pl.BlockSpec((M, K), lambda j: (0, 0)),
                pl.BlockSpec((K, tn), lambda j: (0, j))]
    args = [a, wp["w"]]

    has_bias = wp["bias"] is not None
    if has_bias:
        in_specs.append(pl.BlockSpec((1, tn), lambda j: (0, j)))
        args.append(wp["bias"])
    if norm == "batch":
        gamma, beta = bn
        in_specs.append(pl.BlockSpec((1, tn), lambda j: (0, j)))
        args.append(gamma)
        in_specs.append(pl.BlockSpec((1, tn), lambda j: (0, j)))
        args.append(beta)
    has_res = residual is not None
    if has_res:
        assert residual.shape == (M, Np), (residual.shape, (M, Np))
        in_specs.append(pl.BlockSpec((M, tn), lambda j: (0, j)))
        args.append(residual)

    kernel = functools.partial(_fused_conv_kernel, has_bias=has_bias, norm=norm,
                               has_res=has_res, act=act, ns=ns, eps=1e-5)

    # explicit VMEM budget (double-buffering counted): biggest case is the
    # UpsamplingConcat conv (K=13824, tn=256 -> ~7 MiB weight tile).
    res_bytes = M * Np * residual.dtype.itemsize if has_res else 0
    need = 2 * (M * K * a.dtype.itemsize + K * tn * 2 + M * tn * 4
                + res_bytes + 3 * tn * 4)
    vmem_limit = int(need) + (16 << 20)

    out = pl.pallas_call(
        kernel,
        out_shape=jax.ShapeDtypeStruct((M, Np), out_dtype),
        grid=grid,
        in_specs=in_specs,
        out_specs=pl.BlockSpec((M, tn), lambda j: (0, j)),
        compiler_params=pltpu.CompilerParams(
            dimension_semantics=("parallel",),
            vmem_limit_bytes=vmem_limit),
    )(*args)
    return out


# -----------------------------------------------------------------------------
# Pallas kernel 2: reduce_masked_mean over the camera dim
#   feat: (B, S, N), mask = (|feat| > 0), mean = sum(f*m, S) / (1e-6 + sum(m, S))
# -----------------------------------------------------------------------------
def _masked_mean_kernel(x_ref, o_ref):
    x = x_ref[...]                                        # (1, S, N)
    mask = (jnp.abs(x) > 0).astype(jnp.float32)
    num = jnp.sum(x * mask, axis=1, keepdims=True)
    den = jnp.sum(mask, axis=1, keepdims=True)
    o_ref[...] = num / (1e-6 + den)


def pallas_masked_mean(x):
    Bb, Ss, N = x.shape
    out = pl.pallas_call(
        _masked_mean_kernel,
        out_shape=jax.ShapeDtypeStruct((Bb, 1, N), jnp.float32),
        grid=(Bb,),
        in_specs=[pl.BlockSpec((1, Ss, N), lambda i: (i, 0, 0))],
        out_specs=pl.BlockSpec((1, 1, N), lambda i: (i, 0, 0)),
    )(x)
    return out[:, 0, :]


# -----------------------------------------------------------------------------
# Conv2d = im2col (XLA glue) + fused Pallas matmul.
# Weights pre-embedded for padded input channels, pre-padded on N, bf16.
# -----------------------------------------------------------------------------
def prep_conv(w, *, stride=1, padding=0, bias=None, cin_total=None, in_scale=None):
    Cout, Cin, kh, kw = w.shape
    if cin_total is None:
        cin_total = _pad_ch(Cin)          # activations arrive channel-padded
    if in_scale is not None:              # fold per-input-channel scale (conv1)
        w = w * in_scale.reshape(1, Cin, 1, 1)
    Np = _pad_ch(Cout)
    wt = jnp.transpose(w, (2, 3, 1, 0))                       # (kh, kw, Cin, Cout)
    w_full = jnp.zeros((kh, kw, cin_total, Np), jnp.float32)
    w_full = w_full.at[:, :, :Cin, :Cout].set(wt)
    w_flat = w_full.reshape(kh * kw * cin_total, Np).astype(jnp.bfloat16)
    b_pad = None
    if bias is not None:
        b_pad = jnp.zeros((1, Np), jnp.float32).at[0, :Cout].set(
            bias.astype(jnp.float32))
    return {"w": w_flat, "bias": b_pad, "kh": kh, "kw": kw, "stride": stride,
            "padding": padding, "cin_total": cin_total, "cout": Cout, "n_pad": Np}


def conv2d(x, wp, *, norm="none", bn=None, residual=None, act="none",
           ns=1, out_dtype=jnp.bfloat16):
    Bb, Hh, Ww, Cin = x.shape
    assert Cin == wp["cin_total"], (Cin, wp["cin_total"])
    kh, kw = wp["kh"], wp["kw"]
    stride, padding = wp["stride"], wp["padding"]
    x_bf = x.astype(jnp.bfloat16)
    if kh == 1 and kw == 1 and padding == 0:
        xs = x_bf[:, ::stride, ::stride, :]
        Ho, Wo = xs.shape[1], xs.shape[2]
        a = xs.reshape(Bb * Ho * Wo, Cin)                 # no im2col for 1x1
    else:
        # TODO(synk): fold the kh*kw taps into the matmul K loop (in-kernel
        # pl.ds over a padded VMEM tile) to avoid materializing shifted copies.
        xp = jnp.pad(x_bf, ((0, 0), (padding, padding), (padding, padding), (0, 0)))
        Ho = (Hh + 2 * padding - kh) // stride + 1
        Wo = (Ww + 2 * padding - kw) // stride + 1
        cols = [xp[:, i:i + stride * (Ho - 1) + 1:stride,
                   j:j + stride * (Wo - 1) + 1:stride, :]
                for i in range(kh) for j in range(kw)]
        a = jnp.concatenate(cols, axis=-1).reshape(Bb * Ho * Wo, kh * kw * Cin)
    r2 = None
    if residual is not None:
        r2 = residual.reshape(Bb * Ho * Wo, residual.shape[-1])
    out = pallas_conv_matmul(a, wp, norm=norm, bn=bn, residual=r2, act=act,
                             ns=ns, out_dtype=out_dtype)
    return out.reshape(Bb, Ho, Wo, wp["n_pad"])


def maxpool2d_3x3_s2_p1(x):
    # elementwise max of 9 shifted slices (resnet stem maxpool); XLA glue
    Bb, Hh, Ww, Cc = x.shape
    xp = jnp.pad(x, ((0, 0), (1, 1), (1, 1), (0, 0)), constant_values=-np.inf)
    Ho = (Hh + 2 - 3) // 2 + 1
    Wo = (Ww + 2 - 3) // 2 + 1
    out = None
    for i in range(3):
        for j in range(3):
            s = xp[:, i:i + 2 * (Ho - 1) + 1:2, j:j + 2 * (Wo - 1) + 1:2, :]
            out = s if out is None else jnp.maximum(out, s)
    return out


def _resize_indices(out_size, in_size):
    o = np.arange(out_size, dtype=np.float64)
    src = np.maximum((o + 0.5) * (in_size / out_size) - 0.5, 0.0)
    i0 = np.minimum(np.floor(src).astype(np.int32), in_size - 1)
    i1 = np.minimum(i0 + 1, in_size - 1)
    w1 = (src - i0).astype(np.float32)
    w0 = (1.0 - w1).astype(np.float32)
    return i0, i1, w0, w1


def resize_bilinear(x, out_h, out_w):
    # nn.Upsample(mode='bilinear', align_corners=False) semantics
    _, Hh, Ww, _ = x.shape
    hi0, hi1, hw0, hw1 = _resize_indices(out_h, Hh)
    wi0, wi1, ww0, ww1 = _resize_indices(out_w, Ww)
    xf = x.astype(jnp.float32)
    xh = (xf[:, hi0, :, :] * hw0[None, :, None, None]
          + xf[:, hi1, :, :] * hw1[None, :, None, None])
    y = (xh[:, :, wi0, :] * ww0[None, None, :, None]
         + xh[:, :, wi1, :] * ww1[None, None, :, None])
    return y.astype(x.dtype)


# -----------------------------------------------------------------------------
# Geometry glue (utils.geom / vox_util stand-ins)
# -----------------------------------------------------------------------------
def safe_inverse(T):
    R = T[:, :3, :3]
    t = T[:, :3, 3:4]
    Rt = jnp.swapaxes(R, 1, 2)
    tinv = -jnp.einsum("bij,bjk->bik", Rt, t)
    top = jnp.concatenate([Rt, tinv], axis=2)
    bot = jnp.broadcast_to(jnp.array([[[0.0, 0.0, 0.0, 1.0]]], jnp.float32),
                           (T.shape[0], 1, 4))
    return jnp.concatenate([top, bot], axis=1)


def scale_intrinsics(K, sx, sy):
    scale = jnp.diag(jnp.array([sx, sy, 1.0, 1.0], jnp.float32))
    return jnp.einsum("ij,bjk->bik", scale, K)


def unproject_image_to_mem(feat_nhwc, featpix_T_cam0):
    # TODO(synk): stand-in for vox_util.unproject_image_to_mem (pinhole projection
    # of metric voxel centers + bilinear sampling, zeros outside / behind camera).
    BS, Hf, Wf, Cc = feat_nhwc.shape
    xmin, xmax, ymin, ymax, zmin, zmax = VOX_BOUNDS
    zs = zmin + (jnp.arange(Z_VOX, dtype=jnp.float32) + 0.5) * (zmax - zmin) / Z_VOX
    ys = ymin + (jnp.arange(Y_VOX, dtype=jnp.float32) + 0.5) * (ymax - ymin) / Y_VOX
    xs = xmin + (jnp.arange(X_VOX, dtype=jnp.float32) + 0.5) * (xmax - xmin) / X_VOX
    zg, yg, xg = jnp.meshgrid(zs, ys, xs, indexing="ij")
    xyz1 = jnp.stack([xg, yg, zg, jnp.ones_like(xg)], -1).reshape(-1, 4)
    p = jnp.einsum("bij,nj->bni", featpix_T_cam0, xyz1)       # (BS, N, 4)
    depth = p[..., 2]
    valid = depth > 1e-4
    safe_z = jnp.maximum(depth, 1e-4)
    u = p[..., 0] / safe_z
    v = p[..., 1] / safe_z

    def sample_one(feat_b, ub, vb, valb):
        u0 = jnp.floor(ub)
        v0 = jnp.floor(vb)
        du = ub - u0
        dv = vb - v0
        out = 0.0
        for ui, wu in ((u0, 1.0 - du), (u0 + 1.0, du)):
            for vi, wv in ((v0, 1.0 - dv), (v0 + 1.0, dv)):
                inb = (ui >= 0) & (ui <= Wf - 1) & (vi >= 0) & (vi <= Hf - 1)
                uic = jnp.clip(ui, 0, Wf - 1).astype(jnp.int32)
                vic = jnp.clip(vi, 0, Hf - 1).astype(jnp.int32)
                vals = feat_b[vic, uic, :]
                out = out + vals * (wu * wv * inb.astype(jnp.float32))[:, None]
        return out * valb.astype(jnp.float32)[:, None]

    sampled = jax.vmap(sample_one)(feat_nhwc, u, v, valid)    # (BS, N, C)
    return sampled.reshape(BS, Z_VOX, Y_VOX, X_VOX, Cc)


# -----------------------------------------------------------------------------
# Deterministic parameter construction (weights pre-baked for the MXU path)
# -----------------------------------------------------------------------------
class ParamGen:
    def __init__(self, seed):
        self._key = jax.random.PRNGKey(seed)
        self._n = 0

    def _next(self):
        self._n += 1
        return jax.random.fold_in(self._key, self._n)

    def conv(self, cout, cin, kh, kw):
        fan_in = cin * kh * kw
        w = jax.random.normal(self._next(), (cout, cin, kh, kw), jnp.float32)
        return w * np.sqrt(2.0 / fan_in)

    def bias(self, n):
        return jax.random.normal(self._next(), (n,), jnp.float32) * 0.01


def _bn(c, zero_gamma=False):
    # gamma/beta stored padded to Np so padded channels stay exactly zero
    Np = _pad_ch(c)
    g = jnp.zeros((1, Np), jnp.float32)
    if not zero_gamma:
        g = g.at[0, :c].set(1.0)
    b = jnp.zeros((1, Np), jnp.float32)
    return (g, b)


def init_bottleneck(pg, cin, width, stride):
    p = {}
    p["w1"] = prep_conv(pg.conv(width, cin, 1, 1))
    p["bn1"] = _bn(width)
    p["w2"] = prep_conv(pg.conv(width, width, 3, 3), stride=stride, padding=1)
    p["bn2"] = _bn(width)
    p["w3"] = prep_conv(pg.conv(width * 4, width, 1, 1))
    p["bn3"] = _bn(width * 4)
    if stride != 1 or cin != width * 4:
        p["wd"] = prep_conv(pg.conv(width * 4, cin, 1, 1), stride=stride)
        p["bnd"] = _bn(width * 4)
    return p


def init_res_layer(pg, cin, width, blocks, stride):
    layers = [init_bottleneck(pg, cin, width, stride)]
    for _ in range(blocks - 1):
        layers.append(init_bottleneck(pg, width * 4, width, 1))
    return layers


def init_basic_block(pg, cin, cout, stride):
    p = {}
    p["w1"] = prep_conv(pg.conv(cout, cin, 3, 3), stride=stride, padding=1)
    p["bn1"] = _bn(cout)
    p["w2"] = prep_conv(pg.conv(cout, cout, 3, 3), padding=1)
    p["bn2"] = _bn(cout, zero_gamma=True)  # zero_init_residual
    if stride != 1 or cin != cout:
        p["wd"] = prep_conv(pg.conv(cout, cin, 1, 1), stride=stride)
        p["bnd"] = _bn(cout)
    return p


def init_basic_layer(pg, cin, cout, blocks, stride):
    layers = [init_basic_block(pg, cin, cout, stride)]
    for _ in range(blocks - 1):
        layers.append(init_basic_block(pg, cout, cout, 1))
    return layers


def build_params(seed=0):
    pg = ParamGen(seed)
    P = {}
    # ---- Encoder_res101 ----
    enc = {}
    # 1/std folded into conv1 weights (exact); raw rgb has 3 real channels
    enc["conv1"] = prep_conv(pg.conv(64, 3, 7, 7), stride=2, padding=3,
                             cin_total=3, in_scale=_RGB_INV_STD)
    enc["bn1"] = _bn(64)
    enc["layer1"] = init_res_layer(pg, 64, 64, 3, 1)
    enc["layer2"] = init_res_layer(pg, 256, 128, 4, 2)
    enc["layer3"] = init_res_layer(pg, 512, 256, 23, 2)
    enc["uc_w1"] = prep_conv(pg.conv(512, 1536, 3, 3), padding=1)   # UpsamplingConcat
    enc["uc_w2"] = prep_conv(pg.conv(512, 512, 3, 3), padding=1)
    enc["depth"] = prep_conv(pg.conv(LATENT, 512, 1, 1), bias=pg.bias(LATENT))
    P["encoder"] = enc
    # ---- bev_compressor: Conv2d(feat2d_dim*Y, feat2d_dim, 3, pad=1, bias=False) ----
    P["bev_w"] = prep_conv(pg.conv(LATENT, LATENT * Y_VOX, 3, 3), padding=1)
    # ---- shared Decoder (resnet18 layers) ----
    dec = {}
    dec["first_conv"] = prep_conv(pg.conv(64, LATENT, 7, 7), stride=2, padding=3)
    dec["bn1"] = _bn(64)
    dec["layer1"] = init_basic_layer(pg, 64, 64, 2, 1)
    dec["layer2"] = init_basic_layer(pg, 64, 128, 2, 2)
    dec["layer3"] = init_basic_layer(pg, 128, 256, 2, 2)
    dec["up3_w"] = prep_conv(pg.conv(128, 256, 1, 1))
    dec["up2_w"] = prep_conv(pg.conv(64, 128, 1, 1))
    dec["up1_w"] = prep_conv(pg.conv(LATENT, 64, 1, 1))
    dec["sh_w1"] = prep_conv(pg.conv(LATENT, LATENT, 3, 3), padding=1)
    dec["sh_w2"] = prep_conv(pg.conv(LATENT, LATENT, 3, 3), padding=1)
    dec["sh_w3"] = prep_conv(pg.conv(N_CLASSES, LATENT, 1, 1), bias=pg.bias(N_CLASSES))
    P["decoder"] = dec
    return P


# -----------------------------------------------------------------------------
# Blocks / sub-networks (norm + residual + activation fused into the conv kernel)
# -----------------------------------------------------------------------------
def bottleneck_fwd(x, p):
    out = conv2d(x, p["w1"], norm="batch", bn=p["bn1"], act="relu")
    out = conv2d(out, p["w2"], norm="batch", bn=p["bn2"], act="relu")
    if "wd" in p:
        identity = conv2d(x, p["wd"], norm="batch", bn=p["bnd"])
    else:
        identity = x
    # conv3 + bn3 + residual add + relu in a single Pallas kernel
    return conv2d(out, p["w3"], norm="batch", bn=p["bn3"], act="relu",
                  residual=identity)


def basic_block_fwd(x, p):
    out = conv2d(x, p["w1"], norm="batch", bn=p["bn1"], act="relu")
    if "wd" in p:
        identity = conv2d(x, p["wd"], norm="batch", bn=p["bnd"])
    else:
        identity = x
    return conv2d(out, p["w2"], norm="batch", bn=p["bn2"], act="relu",
                  residual=identity)


def encoder_res101_fwd(x, enc, ns):
    # backbone[:-4] = conv1, bn1, relu, maxpool, layer1, layer2
    x = conv2d(x, enc["conv1"], norm="batch", bn=enc["bn1"], act="relu")
    x = maxpool2d_3x3_s2_p1(x)
    for p in enc["layer1"]:
        x = bottleneck_fwd(x, p)
    for p in enc["layer2"]:
        x = bottleneck_fwd(x, p)
    x1 = x                                                # (BS, H/8, W/8, 512)
    for p in enc["layer3"]:
        x = bottleneck_fwd(x, p)
    x2 = x                                                # (BS, H/16, W/16, 1024)
    # UpsamplingConcat(x2, x1): upsample x2 by 2, cat([x1, up(x2)], channel)
    x2u = resize_bilinear(x2, x1.shape[1], x1.shape[2])
    xc = jnp.concatenate([x1, x2u.astype(x1.dtype)], axis=-1)   # 1536 channels
    xc = conv2d(xc, enc["uc_w1"], norm="instance", act="relu", ns=ns)
    xc = conv2d(xc, enc["uc_w2"], norm="instance", act="relu", ns=ns)
    return conv2d(xc, enc["depth"], out_dtype=jnp.float32)  # bias fused in epilogue


def upsampling_add_fwd(x, x_skip, wp, ns):
    _, Hh, Ww, _ = x.shape
    xu = resize_bilinear(x, 2 * Hh, 2 * Ww)
    # 1x1 conv + InstanceNorm + skip add fused
    return conv2d(xu, wp, norm="instance", residual=x_skip, ns=ns)


def decoder_fwd(x, P, ns):
    skip1 = x
    x = conv2d(x, P["first_conv"], norm="batch", bn=P["bn1"], act="relu")
    for p in P["layer1"]:
        x = basic_block_fwd(x, p)
    skip2 = x
    for p in P["layer2"]:
        x = basic_block_fwd(x, p)
    skip3 = x
    for p in P["layer3"]:
        x = basic_block_fwd(x, p)
    x = upsampling_add_fwd(x, skip3, P["up3_w"], ns)
    x = upsampling_add_fwd(x, skip2, P["up2_w"], ns)
    x = upsampling_add_fwd(x, skip1, P["up1_w"], ns)
    # segmentation head
    x = conv2d(x, P["sh_w1"], norm="instance", act="relu", ns=ns)
    x = conv2d(x, P["sh_w2"], norm="instance", act="relu", ns=ns)
    return conv2d(x, P["sh_w3"], out_dtype=jnp.float32)    # bias fused in epilogue


# -----------------------------------------------------------------------------
# SegnetWithMap.forward
# -----------------------------------------------------------------------------
def segnet_forward(params, rgb_camXs, pix_T_cams, cam0_T_camXs):
    Bb, Ss, Cc, Hh, Ww = rgb_camXs.shape
    assert Cc == 3
    BS = Bb * Ss
    rgb_ = rgb_camXs.reshape(BS, Cc, Hh, Ww)              # __p pack_seqdim
    pix_ = pix_T_cams.reshape(BS, 4, 4)
    cam0_T_camXs_ = cam0_T_camXs.reshape(BS, 4, 4)
    camXs_T_cam0_ = safe_inverse(cam0_T_camXs_)

    x = jnp.transpose(rgb_, (0, 2, 3, 1))                 # NCHW -> NHWC
    # rgb normalization: only the per-channel shift remains here; the 1/std
    # scale is folded into conv1's weights (exact w.r.t. zero padding).
    x = x + _RGB_SHIFT

    feat_camXs_ = encoder_res101_fwd(x, params["encoder"], ns=BS)
    feat_camXs_ = feat_camXs_[..., :LATENT]               # drop padded channels
    Hf, Wf = feat_camXs_.shape[1], feat_camXs_.shape[2]
    sy, sx = Hf / float(Hh), Wf / float(Ww)
    featpix_T_cams_ = scale_intrinsics(pix_, sx, sy)
    featpix_T_cam0_ = jnp.einsum("bij,bjk->bik", featpix_T_cams_, camXs_T_cam0_)

    feat_mems_ = unproject_image_to_mem(feat_camXs_, featpix_T_cam0_)  # (BS,Z,Y,X,C)
    feat_mems = feat_mems_.reshape(Bb, Ss, Z_VOX, Y_VOX, X_VOX, LATENT)

    # reduce_masked_mean over cameras (Pallas reduction), mask = |feat| > 0
    feat_mem = pallas_masked_mean(feat_mems.reshape(Bb, Ss, -1)).reshape(
        Bb, Z_VOX, Y_VOX, X_VOX, LATENT)

    # do_rgbcompress: NCHW permute(0,1,3,2,4).reshape(B, C*Y, Z, X)
    #   == NHWC (B, Z, X, C*Y) with channel index c*Y + y
    feat_bev_ = jnp.transpose(feat_mem, (0, 1, 3, 4, 2)).reshape(
        Bb, Z_VOX, X_VOX, LATENT * Y_VOX)
    feat_bev = conv2d(feat_bev_, params["bev_w"], norm="instance", ns=Bb,
                      out_dtype=jnp.float32)
    # nn.GELU() default is exact erf; kept in XLA glue (erf lowering in-kernel
    # is not relied upon) — padded channels are 0 and GELU(0)=0.
    feat_bev = jax.nn.gelu(feat_bev, approximate=False)

    seg_nhwc = decoder_fwd(feat_bev, params["decoder"], ns=Bb)   # (B, Z, X, 128pad)
    seg_nhwc = seg_nhwc[..., :N_CLASSES]
    # train_task == 'both': cat([segmentation[:, :-1], segmentation[:, -1:]], dim=1)
    return jnp.transpose(seg_nhwc, (0, 3, 1, 2))          # (B, 8, Z, X) NCHW


# -----------------------------------------------------------------------------
if __name__ == "__main__":
    key = jax.random.PRNGKey(0)
    rgb_camXs = jax.random.uniform(key, (B, S, C_IN, H_IMG, W_IMG),
                                   jnp.float32, minval=-0.5, maxval=0.5)

    fx = fy = float(W_IMG)
    cx, cy = W_IMG / 2.0, H_IMG / 2.0
    K = jnp.array([[fx, 0, cx, 0],
                   [0, fy, cy, 0],
                   [0, 0, 1, 0],
                   [0, 0, 0, 1]], jnp.float32)
    pix_T_cams = jnp.broadcast_to(K, (B, S, 4, 4))

    th = 0.15
    cam0 = jnp.eye(4, dtype=jnp.float32)
    cam1 = jnp.array([[np.cos(th), 0.0, np.sin(th), 0.5],
                      [0.0, 1.0, 0.0, 0.1],
                      [-np.sin(th), 0.0, np.cos(th), 0.2],
                      [0.0, 0.0, 0.0, 1.0]], jnp.float32)
    cam0_T_camXs = jnp.broadcast_to(jnp.stack([cam0, cam1]), (B, S, 4, 4))

    params = build_params(seed=0)
    seg_e = segnet_forward(params, rgb_camXs, pix_T_cams, cam0_T_camXs)
    seg_e = jax.block_until_ready(seg_e)
    assert seg_e.shape == (B, N_CLASSES, Z_VOX, X_VOX)
    assert bool(jnp.all(jnp.isfinite(seg_e)))
    print("KERNEL_OK")
</pallas_src>

<mosaic_0001>
module attributes {stable_mosaic.version = 11 : i64} {
  func.func @_fused_conv_kernel(%arg0: i32, %arg1: memref<1024x147xbf16, #tpu.memory_space<vmem>>, %arg2: memref<147x128xbf16, #tpu.memory_space<vmem>>, %arg3: memref<1x128xf32, #tpu.memory_space<vmem>>, %arg4: memref<1x128xf32, #tpu.memory_space<vmem>>, %arg5: memref<1024x128xbf16, #tpu.memory_space<vmem>>) attributes {dimension_semantics = [#tpu.dimension_semantics<parallel>], iteration_bounds = array<i64: 1>, scalar_prefetch = 0 : i64, scratch_operands = 0 : i64, tpu.core_type = #tpu.core_type<tc>, window_params = [{pipeline_mode = #tpu.pipeline_mode<synchronous>, transform_indices = @transform_0, window_bounds = array<i64: 1024, 147>}, {transform_indices = @transform_1, window_bounds = array<i64: 147, 128>}, {transform_indices = @transform_2, window_bounds = array<i64: 1, 128>}, {transform_indices = @transform_3, window_bounds = array<i64: 1, 128>}, {transform_indices = @transform_4, window_bounds = array<i64: 1024, 128>}]} {
    %c0 = arith.constant 0 : index
    %c0_0 = arith.constant 0 : index
    %0 = vector.load %arg1[%c0, %c0_0] : memref<1024x147xbf16, #tpu.memory_space<vmem>>, vector<1024x147xbf16>
    %c0_1 = arith.constant 0 : index
    %c0_2 = arith.constant 0 : index
    %1 = vector.load %arg2[%c0_1, %c0_2] : memref<147x128xbf16, #tpu.memory_space<vmem>>, vector<147x128xbf16>
    %cst = arith.constant dense<0.000000e+00> : vector<1024x128xf32>
    %2 = tpu.matmul %0, %1, %cst {dimension_numbers = #tpu.dot_dimension_numbers<[1], [0], [0], [1], [0, 0, 1, 1], [], []>} : vector<1024x147xbf16>, vector<147x128xbf16>, vector<1024x128xf32> -> vector<1024x128xf32>
    %cst_3 = arith.constant dense<0.000000e+00> : vector<128xf32>
    %3 = vector.multi_reduction <add>, %2, %cst_3 [0] : vector<1024x128xf32> to vector<128xf32>
    %4 = vector.shape_cast %3 : vector<128xf32> to vector<1x128xf32>
    %cst_4 = arith.constant 1.024000e+03 : f32
    %5 = vector.broadcast %cst_4 : f32 to vector<1x128xf32>
    %6 = arith.divf %4, %5 : vector<1x128xf32>
    %7 = vector.broadcast %6 : vector<1x128xf32> to vector<1024x128xf32>
    %8 = arith.subf %2, %7 : vector<1024x128xf32>
    %9 = arith.mulf %8, %8 : vector<1024x128xf32>
    %cst_5 = arith.constant dense<0.000000e+00> : vector<128xf32>
    %10 = vector.multi_reduction <add>, %9, %cst_5 [0] : vector<1024x128xf32> to vector<128xf32>
    %11 = vector.shape_cast %10 : vector<128xf32> to vector<1x128xf32>
    %cst_6 = arith.constant 1.024000e+03 : f32
    %12 = vector.broadcast %cst_6 : f32 to vector<1x128xf32>
    %13 = arith.divf %11, %12 : vector<1x128xf32>
    %14 = vector.broadcast %6 : vector<1x128xf32> to vector<1024x128xf32>
    %15 = arith.subf %2, %14 : vector<1024x128xf32>
    %cst_7 = arith.constant 9.99999974E-6 : f32
    %16 = vector.broadcast %cst_7 : f32 to vector<1x128xf32>
    %17 = arith.addf %13, %16 : vector<1x128xf32>
    %18 = math.rsqrt %17 : vector<1x128xf32>
    %19 = vector.broadcast %18 : vector<1x128xf32> to vector<1024x128xf32>
    %20 = arith.mulf %15, %19 : vector<1024x128xf32>
    %c0_8 = arith.constant 0 : index
    %c0_9 = arith.constant 0 : index
    %21 = vector.load %arg3[%c0_8, %c0_9] : memref<1x128xf32, #tpu.memory_space<vmem>>, vector<1x128xf32>
    %22 = vector.broadcast %21 : vector<1x128xf32> to vector<1024x128xf32>
    %23 = arith.mulf %20, %22 : vector<1024x128xf32>
    %c0_10 = arith.constant 0 : index
    %c0_11 = arith.constant 0 : index
    %24 = vector.load %arg4[%c0_10, %c0_11] : memref<1x128xf32, #tpu.memory_space<vmem>>, vector<1x128xf32>
    %25 = vector.broadcast %24 : vector<1x128xf32> to vector<1024x128xf32>
    %26 = arith.addf %23, %25 : vector<1024x128xf32>
    %cst_12 = arith.constant 0.000000e+00 : f32
    %27 = vector.broadcast %cst_12 : f32 to vector<1024x128xf32>
    %28 = arith.maximumf %26, %27 : vector<1024x128xf32>
    %29 = arith.truncf %28 : vector<1024x128xf32> to vector<1024x128xbf16>
    %c0_13 = arith.constant 0 : index
    %c0_14 = arith.constant 0 : index
    %30 = vector.load %arg5[%c0_13, %c0_14] : memref<1024x128xbf16, #tpu.memory_space<vmem>>, vector<1024x128xbf16>
    tpu.vector_store %arg5[%c0_13, %c0_14], %29 {strides = array<i32>} : memref<1024x128xbf16, #tpu.memory_space<vmem>>, vector<1024x128xbf16>,
    return
  }
  func.func @transform_0(%arg0: i32) -> (i32, i32) {
    %c0_i32 = arith.constant 0 : i32
    %c0_i32_0 = arith.constant 0 : i32
    %c0_i32_1 = arith.constant 0 : i32
    return %c0_i32, %c0_i32_0 : i32, i32
  }
  func.func @transform_1(%arg0: i32) -> (i32, i32) {
    %c0_i32 = arith.constant 0 : i32
    %c0_i32_0 = arith.constant 0 : i32
    return %c0_i32, %arg0 : i32, i32
  }
  func.func @transform_2(%arg0: i32) -> (i32, i32) {
    %c0_i32 = arith.constant 0 : i32
    %c0_i32_0 = arith.constant 0 : i32
    return %c0_i32, %arg0 : i32, i32
  }
  func.func @transform_3(%arg0: i32) -> (i32, i32) {
    %c0_i32 = arith.constant 0 : i32
    %c0_i32_0 = arith.constant 0 : i32
    return %c0_i32, %arg0 : i32, i32
  }
  func.func @transform_4(%arg0: i32) -> (i32, i32) {
    %c0_i32 = arith.constant 0 : i32
    %c0_i32_0 = arith.constant 0 : i32
    return %c0_i32, %arg0 : i32, i32
  }
}

</mosaic_0001>

<llo_original>
// kernel: tpu_custom_call.1
$region0: #{tpu_custom_call.1}
  #allocation0 [shape = 'u32[]', space=smem, size = 0x4, offset = 0x4, fixed_abs, tag = 'smem constant byte address 0x4 - core index']
  #allocation1 [shape = 'u32[144,128]{1,0:T(1,128)}', space=vmem, size = 0x12000, scoped, tag = 'internal scratch']
  %s0 = inlined_call_operand.vmem [shape: bf16[1024,147], index: 0, kind: input, shape index: {}]
  %s1 = inlined_call_operand.vmem [shape: bf16[147,128], index: 1, kind: input, shape index: {}]
  %s2 = inlined_call_operand.vmem [shape: f32[1,128], index: 2, kind: input, shape index: {}]
  %s3 = inlined_call_operand.vmem [shape: f32[1,128], index: 3, kind: input, shape index: {}]
  %s4 = inlined_call_operand.hbm [shape: bf16[1024,128], index: 4, kind: output, shape index: {}]
  %s5 = sld [smem:[#allocation0]]
  $region26: #{tpu_custom_call.1} parent=0
    _
  %s7 = ssub.s32 1, %s5
  %s8 = scalar_select 0, %s7, %s5
  $region1: #{tpu_custom_call.1} parent=0
    #allocation2 [shape = 'u8[262144]{0}', space=vmem, size = 0x40000, scoped, tag = 'output window, operand 0, single buffered']
    #allocation3 [shape = 's32[1]{0}', space=sflag, size = 0x4, scoped, tag = 'scoped memory for tpu_custom_call.1']
    %9 = vsyncpa [#allocation3], 0
    // Predicated region
    $region2: #{tpu_custom_call.1} parent=1 // pred_check
      _
    $region3: #{tpu_custom_call.1} parent=1 // pred_check_branch
      %11 = sbr.rel (0) target = $region5
    $region4: #{tpu_custom_call.1} parent=1 // pred_region
      _
    $region5: #{tpu_custom_call.1} parent=1 // pred_fallthru
      _
    // Predicated region
    $region6: #{tpu_custom_call.1} parent=1 // pred_check
      _
    $region7: #{tpu_custom_call.1} parent=1 // pred_check_branch
      %13 = sbr.rel (0) target = $region9
    $region8: #{tpu_custom_call.1} parent=1 // pred_region
      _
    $region9: #{tpu_custom_call.1} parent=1 // pred_fallthru
      _
    // Predicated region
    $region10: #{tpu_custom_call.1} parent=1 // pred_check
      _
    $region11: #{tpu_custom_call.1} parent=1 // pred_check_branch
      %15 = sbr.rel (0) target = $region13
    $region12: #{tpu_custom_call.1} parent=1 // pred_region
      _
    $region13: #{tpu_custom_call.1} parent=1 // pred_fallthru
      _
    // Predicated region
    $region14: #{tpu_custom_call.1} parent=1 // pred_check
      _
    $region15: #{tpu_custom_call.1} parent=1 // pred_check_branch
      %17 = sbr.rel (0) target = $region17
    $region16: #{tpu_custom_call.1} parent=1 // pred_region
      _
    $region17: #{tpu_custom_call.1} parent=1 // pred_fallthru
      _
    %v19 = vld [vmem:[%s0] sm:$0xff]
    %v20 = vld [vmem:[%s0 + $0x8] sm:$0xff]
    %v21 = vld [vmem:[%s0 + $0x10] sm:$0xff]
    %v22 = vld [vmem:[%s0 + $0x18] sm:$0xff]
    %v23 = vld [vmem:[%s0 + $0x20] sm:$0xff]
    %v24 = vld [vmem:[%s0 + $0x28] sm:$0xff]
    %v25 = vld [vmem:[%s0 + $0x30] sm:$0xff]
    %v26 = vld [vmem:[%s0 + $0x38] sm:$0xff]
    %v27 = vld [vmem:[%s0 + $0x40] sm:$0xff]
    %v28 = vld [vmem:[%s0 + $0x48] sm:$0xff]
    %v29 = vld [vmem:[%s0 + $0x50] sm:$0xff]
    %v30 = vld [vmem:[%s0 + $0x58] sm:$0xff]
    %v31 = vld [vmem:[%s0 + $0x60] sm:$0xff]
    %v32 = vld [vmem:[%s0 + $0x68] sm:$0xff]
    %v33 = vld [vmem:[%s0 + $0x70] sm:$0xff]
    %v34 = vld [vmem:[%s0 + $0x78] sm:$0xff]
    %v35 = vld [vmem:[%s0 + $0x80] sm:$0xff]
    %v36 = vld [vmem:[%s0 + $0x88] sm:$0xff]
    %v37 = vld [vmem:[%s0 + $0x90] sm:$0xff]
    %v38 = vld [vmem:[%s0 + $0x98] sm:$0xff]
    %v39 = vld [vmem:[%s0 + $0xa0] sm:$0xff]
    %v40 = vld [vmem:[%s0 + $0xa8] sm:$0xff]
    %v41 = vld [vmem:[%s0 + $0xb0] sm:$0xff]
    %v42 = vld [vmem:[%s0 + $0xb8] sm:$0xff]
    %v43 = vld [vmem:[%s0 + $0xc0] sm:$0xff]
    %v44 = vld [vmem:[%s0 + $0xc8] sm:$0xff]
    %v45 = vld [vmem:[%s0 + $0xd0] sm:$0xff]
    %v46 = vld [vmem:[%s0 + $0xd8] sm:$0xff]
    %v47 = vld [vmem:[%s0 + $0xe0] sm:$0xff]
    %v48 = vld [vmem:[%s0 + $0xe8] sm:$0xff]
    %v49 = vld [vmem:[%s0 + $0xf0] sm:$0xff]
    %v50 = vld [vmem:[%s0 + $0xf8] sm:$0xff]
    %v51 = vld [vmem:[%s0 + $0x100] sm:$0xff]
    %v52 = vld [vmem:[%s0 + $0x108] sm:$0xff]
    %v53 = vld [vmem:[%s0 + $0x110] sm:$0xff]
    %v54 = vld [vmem:[%s0 + $0x118] sm:$0xff]
    %v55 = vld [vmem:[%s0 + $0x120] sm:$0xff]
    %v56 = vld [vmem:[%s0 + $0x128] sm:$0xff]
    %v57 = vld [vmem:[%s0 + $0x130] sm:$0xff]
    %v58 = vld [vmem:[%s0 + $0x138] sm:$0xff]
    %v59 = vld [vmem:[%s0 + $0x140] sm:$0xff]
    %v60 = vld [vmem:[%s0 + $0x148] sm:$0xff]
    %v61 = vld [vmem:[%s0 + $0x150] sm:$0xff]
    %v62 = vld [vmem:[%s0 + $0x158] sm:$0xff]
    %v63 = vld [vmem:[%s0 + $0x160] sm:$0xff]
    %v64 = vld [vmem:[%s0 + $0x168] sm:$0xff]
    %v65 = vld [vmem:[%s0 + $0x170] sm:$0xff]
    %v66 = vld [vmem:[%s0 + $0x178] sm:$0xff]
    %v67 = vld [vmem:[%s0 + $0x180] sm:$0xff]
    %v68 = vld [vmem:[%s0 + $0x188] sm:$0xff]
    %v69 = vld [vmem:[%s0 + $0x190] sm:$0xff]
    %v70 = vld [vmem:[%s0 + $0x198] sm:$0xff]
    %v71 = vld [vmem:[%s0 + $0x1a0] sm:$0xff]
    %v72 = vld [vmem:[%s0 + $0x1a8] sm:$0xff]
    %v73 = vld [vmem:[%s0 + $0x1b0] sm:$0xff]
    %v74 = vld [vmem:[%s0 + $0x1b8] sm:$0xff]
    %v75 = vld [vmem:[%s0 + $0x1c0] sm:$0xff]
    %v76 = vld [vmem:[%s0 + $0x1c8] sm:$0xff]
    %v77 = vld [vmem:[%s0 + $0x1d0] sm:$0xff]
    %v78 = vld [vmem:[%s0 + $0x1d8] sm:$0xff]
    %v79 = vld [vmem:[%s0 + $0x1e0] sm:$0xff]
    %v80 = vld [vmem:[%s0 + $0x1e8] sm:$0xff]
    %v81 = vld [vmem:[%s0 + $0x1f0] sm:$0xff]
    %v82 = vld [vmem:[%s0 + $0x1f8] sm:$0xff]
    %v83 = vld [vmem:[%s0 + $0x200] sm:$0xff]
    %v84 = vld [vmem:[%s0 + $0x208] sm:$0xff]
    %v85 = vld [vmem:[%s0 + $0x210] sm:$0xff]
    %v86 = vld [vmem:[%s0 + $0x218] sm:$0xff]
    %v87 = vld [vmem:[%s0 + $0x220] sm:$0xff]
    %v88 = vld [vmem:[%s0 + $0x228] sm:$0xff]
    %v89 = vld [vmem:[%s0 + $0x230] sm:$0xff]
    %v90 = vld [vmem:[%s0 + $0x238] sm:$0xff]
    %v91 = vld [vmem:[%s0 + $0x240] sm:$0xff]
    %v92 = vld [vmem:[%s0 + $0x248] sm:$0xff]
    %v93 = vld [vmem:[%s0 + $0x250] sm:$0xff]
    %v94 = vld [vmem:[%s0 + $0x258] sm:$0xff]
    %v95 = vld [vmem:[%s0 + $0x260] sm:$0xff]
    %v96 = vld [vmem:[%s0 + $0x268] sm:$0xff]
    %v97 = vld [vmem:[%s0 + $0x270] sm:$0xff]
    %v98 = vld [vmem:[%s0 + $0x278] sm:$0xff]
    %v99 = vld [vmem:[%s0 + $0x280] sm:$0xff]
    %v100 = vld [vmem:[%s0 + $0x288] sm:$0xff]
    %v101 = vld [vmem:[%s0 + $0x290] sm:$0xff]
    %v102 = vld [vmem:[%s0 + $0x298] sm:$0xff]
    %v103 = vld [vmem:[%s0 + $0x2a0] sm:$0xff]
    %v104 = vld [vmem:[%s0 + $0x2a8] sm:$0xff]
    %v105 = vld [vmem:[%s0 + $0x2b0] sm:$0xff]
    %v106 = vld [vmem:[%s0 + $0x2b8] sm:$0xff]
    %v107 = vld [vmem:[%s0 + $0x2c0] sm:$0xff]
    %v108 = vld [vmem:[%s0 + $0x2c8] sm:$0xff]
    %v109 = vld [vmem:[%s0 + $0x2d0] sm:$0xff]
    %v110 = vld [vmem:[%s0 + $0x2d8] sm:$0xff]
    %v111 = vld [vmem:[%s0 + $0x2e0] sm:$0xff]
    %v112 = vld [vmem:[%s0 + $0x2e8] sm:$0xff]
    %v113 = vld [vmem:[%s0 + $0x2f0] sm:$0xff]
    %v114 = vld [vmem:[%s0 + $0x2f8] sm:$0xff]
    %v115 = vld [vmem:[%s0 + $0x300] sm:$0xff]
    %v116 = vld [vmem:[%s0 + $0x308] sm:$0xff]
    %v117 = vld [vmem:[%s0 + $0x310] sm:$0xff]
    %v118 = vld [vmem:[%s0 + $0x318] sm:$0xff]
    %v119 = vld [vmem:[%s0 + $0x320] sm:$0xff]
    %v120 = vld [vmem:[%s0 + $0x328] sm:$0xff]
    %v121 = vld [vmem:[%s0 + $0x330] sm:$0xff]
    %v122 = vld [vmem:[%s0 + $0x338] sm:$0xff]
    %v123 = vld [vmem:[%s0 + $0x340] sm:$0xff]
    %v124 = vld [vmem:[%s0 + $0x348] sm:$0xff]
    %v125 = vld [vmem:[%s0 + $0x350] sm:$0xff]
    %v126 = vld [vmem:[%s0 + $0x358] sm:$0xff]
    %v127 = vld [vmem:[%s0 + $0x360] sm:$0xff]
    %v128 = vld [vmem:[%s0 + $0x368] sm:$0xff]
    %v129 = vld [vmem:[%s0 + $0x370] sm:$0xff]
    %v130 = vld [vmem:[%s0 + $0x378] sm:$0xff]
    %v131 = vld [vmem:[%s0 + $0x380] sm:$0xff]
    %v132 = vld [vmem:[%s0 + $0x388] sm:$0xff]
    %v133 = vld [vmem:[%s0 + $0x390] sm:$0xff]
    %v134 = vld [vmem:[%s0 + $0x398] sm:$0xff]
    %v135 = vld [vmem:[%s0 + $0x3a0] sm:$0xff]
    %v136 = vld [vmem:[%s0 + $0x3a8] sm:$0xff]
    %v137 = vld [vmem:[%s0 + $0x3b0] sm:$0xff]
    %v138 = vld [vmem:[%s0 + $0x3b8] sm:$0xff]
    %v139 = vld [vmem:[%s0 + $0x3c0] sm:$0xff]
    %v140 = vld [vmem:[%s0 + $0x3c8] sm:$0xff]
    %v141 = vld [vmem:[%s0 + $0x3d0] sm:$0xff]
    %v142 = vld [vmem:[%s0 + $0x3d8] sm:$0xff]
    %v143 = vld [vmem:[%s0 + $0x3e0] sm:$0xff]
    %v144 = vld [vmem:[%s0 + $0x3e8] sm:$0xff]
    %v145 = vld [vmem:[%s0 + $0x3f0] sm:$0xff]
    %v146 = vld [vmem:[%s0 + $0x3f8] sm:$0xff]
    %v147 = vld [vmem:[%s1] sm:$0xf]
    %v148 = vld [vmem:[%s1 + $0x4] sm:$0xf]
    %v149 = vld [vmem:[%s1 + $0x8] sm:$0xf]
    %v150 = vld [vmem:[%s1 + $0xc] sm:$0xf]
    %v151 = vld [vmem:[%s1 + $0x10] sm:$0xf]
    %v152 = vld [vmem:[%s1 + $0x14] sm:$0xf]
    %v153 = vld [vmem:[%s1 + $0x18] sm:$0xf]
    %v154 = vld [vmem:[%s1 + $0x1c] sm:$0xf]
    %v155 = vld [vmem:[%s1 + $0x20] sm:$0xf]
    %v156 = vld [vmem:[%s1 + $0x24] sm:$0xf]
    %v157 = vld [vmem:[%s1 + $0x28] sm:$0xf]
    %v158 = vld [vmem:[%s1 + $0x2c] sm:$0xf]
    %v159 = vld [vmem:[%s1 + $0x30] sm:$0xf]
    %v160 = vld [vmem:[%s1 + $0x34] sm:$0xf]
    %v161 = vld [vmem:[%s1 + $0x38] sm:$0xf]
    %v162 = vld [vmem:[%s1 + $0x3c] sm:$0xf]
    %v163 = vld [vmem:[%s1 + $0x40] sm:$0xf]
    %v164 = vld [vmem:[%s1 + $0x44] sm:$0xf]
    %v165 = vld [vmem:[%s1 + $0x48] sm:$0x3]
    %v294 = vunpack.c.l.b16 %v19
    %v295 = vunpack.c.h.b16 %v19
    %v296 = vunpack.c.l.b16 %v20
    %v297 = vunpack.c.h.b16 %v20
    %v298 = vunpack.c.l.b16 %v21
    %v299 = vunpack.c.h.b16 %v21
    %v300 = vunpack.c.l.b16 %v22
    %v301 = vunpack.c.h.b16 %v22
    %v302 = vunpack.c.l.b16 %v23
    %v303 = vunpack.c.h.b16 %v23
    %v304 = vunpack.c.l.b16 %v24
    %v305 = vunpack.c.h.b16 %v24
    %v306 = vunpack.c.l.b16 %v25
    %v307 = vunpack.c.h.b16 %v25
    %v308 = vunpack.c.l.b16 %v26
    %v309 = vunpack.c.h.b16 %v26
    %v310 = vunpack.c.l.b16 %v27
    %v311 = vunpack.c.h.b16 %v27
    %v312 = vunpack.c.l.b16 %v28
    %v313 = vunpack.c.h.b16 %v28
    %v314 = vunpack.c.l.b16 %v29
    %v315 = vunpack.c.h.b16 %v29
    %v316 = vunpack.c.l.b16 %v30
    %v317 = vunpack.c.h.b16 %v30
    %v318 = vunpack.c.l.b16 %v31
    %v319 = vunpack.c.h.b16 %v31
    %v320 = vunpack.c.l.b16 %v32
    %v321 = vunpack.c.h.b16 %v32
    %v322 = vunpack.c.l.b16 %v33
    %v323 = vunpack.c.h.b16 %v33
    %v324 = vunpack.c.l.b16 %v34
    %v325 = vunpack.c.h.b16 %v34
    %v326 = vunpack.c.l.b16 %v35
    %v327 = vunpack.c.h.b16 %v35
    %v328 = vunpack.c.l.b16 %v36
    %v329 = vunpack.c.h.b16 %v36
    %v330 = vunpack.c.l.b16 %v37
    %v331 = vunpack.c.h.b16 %v37
    %v332 = vunpack.c.l.b16 %v38
    %v333 = vunpack.c.h.b16 %v38
    %v334 = vunpack.c.l.b16 %v39
    %v335 = vunpack.c.h.b16 %v39
    %v336 = vunpack.c.l.b16 %v40
    %v337 = vunpack.c.h.b16 %v40
    %v338 = vunpack.c.l.b16 %v41
    %v339 = vunpack.c.h.b16 %v41
    %v340 = vunpack.c.l.b16 %v42
    %v341 = vunpack.c.h.b16 %v42
    %v342 = vunpack.c.l.b16 %v43
    %v343 = vunpack.c.h.b16 %v43
    %v344 = vunpack.c.l.b16 %v44
    %v345 = vunpack.c.h.b16 %v44
    %v346 = vunpack.c.l.b16 %v45
    %v347 = vunpack.c.h.b16 %v45
    %v348 = vunpack.c.l.b16 %v46
    %v349 = vunpack.c.h.b16 %v46
    %v350 = vunpack.c.l.b16 %v47
    %v351 = vunpack.c.h.b16 %v47
    %v352 = vunpack.c.l.b16 %v48
    %v353 = vunpack.c.h.b16 %v48
    %v354 = vunpack.c.l.b16 %v49
    %v355 = vunpack.c.h.b16 %v49
    %v356 = vunpack.c.l.b16 %v50
    %v357 = vunpack.c.h.b16 %v50
    %v358 = vunpack.c.l.b16 %v51
    %v359 = vunpack.c.h.b16 %v51
    %v360 = vunpack.c.l.b16 %v52
    %v361 = vunpack.c.h.b16 %v52
    %v362 = vunpack.c.l.b16 %v53
    %v363 = vunpack.c.h.b16 %v53
    %v364 = vunpack.c.l.b16 %v54
    %v365 = vunpack.c.h.b16 %v54
    %v366 = vunpack.c.l.b16 %v55
    %v367 = vunpack.c.h.b16 %v55
    %v368 = vunpack.c.l.b16 %v56
    %v369 = vunpack.c.h.b16 %v56
    %v370 = vunpack.c.l.b16 %v57
    %v371 = vunpack.c.h.b16 %v57
    %v372 = vunpack.c.l.b16 %v58
    %v373 = vunpack.c.h.b16 %v58
    %v374 = vunpack.c.l.b16 %v59
    %v375 = vunpack.c.h.b16 %v59
    %v376 = vunpack.c.l.b16 %v60
    %v377 = vunpack.c.h.b16 %v60
    %v378 = vunpack.c.l.b16 %v61
    %v379 = vunpack.c.h.b16 %v61
    %v380 = vunpack.c.l.b16 %v62
    %v381 = vunpack.c.h.b16 %v62
    %v382 = vunpack.c.l.b16 %v63
    %v383 = vunpack.c.h.b16 %v63
    %v384 = vunpack.c.l.b16 %v64
    %v385 = vunpack.c.h.b16 %v64
    %v386 = vunpack.c.l.b16 %v65
    %v387 = vunpack.c.h.b16 %v65
    %v388 = vunpack.c.l.b16 %v66
    %v389 = vunpack.c.h.b16 %v66
    %v390 = vunpack.c.l.b16 %v67
    %v391 = vunpack.c.h.b16 %v67
    %v392 = vunpack.c.l.b16 %v68
    %v393 = vunpack.c.h.b16 %v68
    %v394 = vunpack.c.l.b16 %v69
    %v395 = vunpack.c.h.b16 %v69
    %v396 = vunpack.c.l.b16 %v70
    %v397 = vunpack.c.h.b16 %v70
    %v398 = vunpack.c.l.b16 %v71
    %v399 = vunpack.c.h.b16 %v71
    %v400 = vunpack.c.l.b16 %v72
    %v401 = vunpack.c.h.b16 %v72
    %v402 = vunpack.c.l.b16 %v73
    %v403 = vunpack.c.h.b16 %v73
    %v404 = vunpack.c.l.b16 %v74
    %v405 = vunpack.c.h.b16 %v74
    %v406 = vunpack.c.l.b16 %v75
    %v407 = vunpack.c.h.b16 %v75
    %v408 = vunpack.c.l.b16 %v76
    %v409 = vunpack.c.h.b16 %v76
    %v410 = vunpack.c.l.b16 %v77
    %v411 = vunpack.c.h.b16 %v77
    %v412 = vunpack.c.l.b16 %v78
    %v413 = vunpack.c.h.b16 %v78
    %v414 = vunpack.c.l.b16 %v79
    %v415 = vunpack.c.h.b16 %v79
    %v416 = vunpack.c.l.b16 %v80
    %v417 = vunpack.c.h.b16 %v80
    %v418 = vunpack.c.l.b16 %v81
    %v419 = vunpack.c.h.b16 %v81
    %v420 = vunpack.c.l.b16 %v82
    %v421 = vunpack.c.h.b16 %v82
    %v422 = vunpack.c.l.b16 %v83
    %v423 = vunpack.c.h.b16 %v83
    %v424 = vunpack.c.l.b16 %v84
    %v425 = vunpack.c.h.b16 %v84
    %v426 = vunpack.c.l.b16 %v85
    %v427 = vunpack.c.h.b16 %v85
    %v428 = vunpack.c.l.b16 %v86
    %v429 = vunpack.c.h.b16 %v86
    %v430 = vunpack.c.l.b16 %v87
    %v431 = vunpack.c.h.b16 %v87
    %v432 = vunpack.c.l.b16 %v88
    %v433 = vunpack.c.h.b16 %v88
    %v434 = vunpack.c.l.b16 %v89
    %v435 = vunpack.c.h.b16 %v89
    %v436 = vunpack.c.l.b16 %v90
    %v437 = vunpack.c.h.b16 %v90
    %v438 = vunpack.c.l.b16 %v91
    %v439 = vunpack.c.h.b16 %v91
    %v440 = vunpack.c.l.b16 %v92
    %v441 = vunpack.c.h.b16 %v92
    %v442 = vunpack.c.l.b16 %v93
    %v443 = vunpack.c.h.b16 %v93
    %v444 = vunpack.c.l.b16 %v94
    %v445 = vunpack.c.h.b16 %v94
    %v446 = vunpack.c.l.b16 %v95
    %v447 = vunpack.c.h.b16 %v95
    %v448 = vunpack.c.l.b16 %v96
    %v449 = vunpack.c.h.b16 %v96
    %v450 = vunpack.c.l.b16 %v97
    %v451 = vunpack.c.h.b16 %v97
    %v452 = vunpack.c.l.b16 %v98
    %v453 = vunpack.c.h.b16 %v98
    %v454 = vunpack.c.l.b16 %v99
    %v455 = vunpack.c.h.b16 %v99
    %v456 = vunpack.c.l.b16 %v100
    %v457 = vunpack.c.h.b16 %v100
    %v458 = vunpack.c.l.b16 %v101
    %v459 = vunpack.c.h.b16 %v101
    %v460 = vunpack.c.l.b16 %v102
    %v461 = vunpack.c.h.b16 %v102
    %v462 = vunpack.c.l.b16 %v103
    %v463 = vunpack.c.h.b16 %v103
    %v464 = vunpack.c.l.b16 %v104
    %v465 = vunpack.c.h.b16 %v104
    %v466 = vunpack.c.l.b16 %v105
    %v467 = vunpack.c.h.b16 %v105
    %v468 = vunpack.c.l.b16 %v106
    %v469 = vunpack.c.h.b16 %v106
    %v470 = vunpack.c.l.b16 %v107
    %v471 = vunpack.c.h.b16 %v107
    %v472 = vunpack.c.l.b16 %v108
    %v473 = vunpack.c.h.b16 %v108
    %v474 = vunpack.c.l.b16 %v109
    %v475 = vunpack.c.h.b16 %v109
    %v476 = vunpack.c.l.b16 %v110
    %v477 = vunpack.c.h.b16 %v110
    %v478 = vunpack.c.l.b16 %v111
    %v479 = vunpack.c.h.b16 %v111
    %v480 = vunpack.c.l.b16 %v112
    %v481 = vunpack.c.h.b16 %v112
    %v482 = vunpack.c.l.b16 %v113
    %v483 = vunpack.c.h.b16 %v113
    %v484 = vunpack.c.l.b16 %v114
    %v485 = vunpack.c.h.b16 %v114
    %v486 = vunpack.c.l.b16 %v115
    %v487 = vunpack.c.h.b16 %v115
    %v488 = vunpack.c.l.b16 %v116
    %v489 = vunpack.c.h.b16 %v116
    %v490 = vunpack.c.l.b16 %v117
    %v491 = vunpack.c.h.b16 %v117
    %v492 = vunpack.c.l.b16 %v118
    %v493 = vunpack.c.h.b16 %v118
    %v494 = vunpack.c.l.b16 %v119
    %v495 = vunpack.c.h.b16 %v119
    %v496 = vunpack.c.l.b16 %v120
    %v497 = vunpack.c.h.b16 %v120
    %v498 = vunpack.c.l.b16 %v121
    %v499 = vunpack.c.h.b16 %v121
    %v500 = vunpack.c.l.b16 %v122
    %v501 = vunpack.c.h.b16 %v122
    %v502 = vunpack.c.l.b16 %v123
    %v503 = vunpack.c.h.b16 %v123
    %v504 = vunpack.c.l.b16 %v124
    %v505 = vunpack.c.h.b16 %v124
    %v506 = vunpack.c.l.b16 %v125
    %v507 = vunpack.c.h.b16 %v125
    %v508 = vunpack.c.l.b16 %v126
    %v509 = vunpack.c.h.b16 %v126
    %v510 = vunpack.c.l.b16 %v127
    %v511 = vunpack.c.h.b16 %v127
    %v512 = vunpack.c.l.b16 %v128
    %v513 = vunpack.c.h.b16 %v128
    %v514 = vunpack.c.l.b16 %v129
    %v515 = vunpack.c.h.b16 %v129
    %v516 = vunpack.c.l.b16 %v130
    %v517 = vunpack.c.h.b16 %v130
    %v518 = vunpack.c.l.b16 %v131
    %v519 = vunpack.c.h.b16 %v131
    %v520 = vunpack.c.l.b16 %v132
    %v521 = vunpack.c.h.b16 %v132
    %v522 = vunpack.c.l.b16 %v133
    %v523 = vunpack.c.h.b16 %v133
    %v524 = vunpack.c.l.b16 %v134
    %v525 = vunpack.c.h.b16 %v134
    %v526 = vunpack.c.l.b16 %v135
    %v527 = vunpack.c.h.b16 %v135
    %v528 = vunpack.c.l.b16 %v136
    %v529 = vunpack.c.h.b16 %v136
    %v530 = vunpack.c.l.b16 %v137
    %v531 = vunpack.c.h.b16 %v137
    %v532 = vunpack.c.l.b16 %v138
    %v533 = vunpack.c.h.b16 %v138
    %v534 = vunpack.c.l.b16 %v139
    %v535 = vunpack.c.h.b16 %v139
    %v536 = vunpack.c.l.b16 %v140
    %v537 = vunpack.c.h.b16 %v140
    %v538 = vunpack.c.l.b16 %v141
    %v539 = vunpack.c.h.b16 %v141
    %v540 = vunpack.c.l.b16 %v142
    %v541 = vunpack.c.h.b16 %v142
    %v542 = vunpack.c.l.b16 %v143
    %v543 = vunpack.c.h.b16 %v143
    %v544 = vunpack.c.l.b16 %v144
    %v545 = vunpack.c.h.b16 %v144
    %v546 = vunpack.c.l.b16 %v145
    %v547 = vunpack.c.h.b16 %v145
    %v548 = vunpack.c.l.b16 %v146
    %v549 = vunpack.c.h.b16 %v146
    %v550 = vpack.c.b16 %v296, %v294
    %v551 = vpack.c.b16 %v297, %v295
    %v552 = vpack.c.b16 %v300, %v298
    %v553 = vpack.c.b16 %v301, %v299
    %v554 = vpack.c.b16 %v304, %v302
    %v555 = vpack.c.b16 %v305, %v303
    %v556 = vpack.c.b16 %v308, %v306
    %v557 = vpack.c.b16 %v309, %v307
    %v558 = vpack.c.b16 %v312, %v310
    %v559 = vpack.c.b16 %v313, %v311
    %v560 = vpack.c.b16 %v316, %v314
    %v561 = vpack.c.b16 %v317, %v315
    %v562 = vpack.c.b16 %v320, %v318
    %v563 = vpack.c.b16 %v321, %v319
    %v564 = vpack.c.b16 %v324, %v322
    %v565 = vpack.c.b16 %v325, %v323
    %v566 = vpack.c.b16 %v328, %v326
    %v567 = vpack.c.b16 %v329, %v327
    %v568 = vpack.c.b16 %v332, %v330
    %v569 = vpack.c.b16 %v333, %v331
    %v570 = vpack.c.b16 %v336, %v334
    %v571 = vpack.c.b16 %v337, %v335
    %v572 = vpack.c.b16 %v340, %v338
    %v573 = vpack.c.b16 %v341, %v339
    %v574 = vpack.c.b16 %v344, %v342
    %v575 = vpack.c.b16 %v345, %v343
    %v576 = vpack.c.b16 %v348, %v346
    %v577 = vpack.c.b16 %v349, %v347
    %v578 = vpack.c.b16 %v352, %v350
    %v579 = vpack.c.b16 %v353, %v351
    %v580 = vpack.c.b16 %v356, %v354
    %v581 = vpack.c.b16 %v357, %v355
    %v582 = vpack.c.b16 %v360, %v358
    %v583 = vpack.c.b16 %v361, %v359
    %v584 = vpack.c.b16 %v364, %v362
    %v585 = vpack.c.b16 %v365, %v363
    %v586 = vpack.c.b16 %v368, %v366
    %v587 = vpack.c.b16 %v369, %v367
    %v588 = vpack.c.b16 %v372, %v370
    %v589 = vpack.c.b16 %v373, %v371
    %v590 = vpack.c.b16 %v376, %v374
    %v591 = vpack.c.b16 %v377, %v375
    %v592 = vpack.c.b16 %v380, %v378
    %v593 = vpack.c.b16 %v381, %v379
    %v594 = vpack.c.b16 %v384, %v382
    %v595 = vpack.c.b16 %v385, %v383
    %v596 = vpack.c.b16 %v388, %v386
    %v597 = vpack.c.b16 %v389, %v387
    %v598 = vpack.c.b16 %v392, %v390
    %v599 = vpack.c.b16 %v393, %v391
    %v600 = vpack.c.b16 %v396, %v394
    %v601 = vpack.c.b16 %v397, %v395
    %v602 = vpack.c.b16 %v400, %v398
    %v603 = vpack.c.b16 %v401, %v399
    %v604 = vpack.c.b16 %v404, %v402
    %v605 = vpack.c.b16 %v405, %v403
    %v606 = vpack.c.b16 %v408, %v406
    %v607 = vpack.c.b16 %v409, %v407
    %v608 = vpack.c.b16 %v412, %v410
    %v609 = vpack.c.b16 %v413, %v411
    %v610 = vpack.c.b16 %v416, %v414
    %v611 = vpack.c.b16 %v417, %v415
    %v612 = vpack.c.b16 %v420, %v418
    %v613 = vpack.c.b16 %v421, %v419
    %v614 = vpack.c.b16 %v424, %v422
    %v615 = vpack.c.b16 %v425, %v423
    %v616 = vpack.c.b16 %v428, %v426
    %v617 = vpack.c.b16 %v429, %v427
    %v618 = vpack.c.b16 %v432, %v430
    %v619 = vpack.c.b16 %v433, %v431
    %v620 = vpack.c.b16 %v436, %v434
    %v621 = vpack.c.b16 %v437, %v435
    %v622 = vpack.c.b16 %v440, %v438
    %v623 = vpack.c.b16 %v441, %v439
    %v624 = vpack.c.b16 %v444, %v442
    %v625 = vpack.c.b16 %v445, %v443
    %v626 = vpack.c.b16 %v448, %v446
    %v627 = vpack.c.b16 %v449, %v447
    %v628 = vpack.c.b16 %v452, %v450
    %v629 = vpack.c.b16 %v453, %v451
    %v630 = vpack.c.b16 %v456, %v454
    %v631 = vpack.c.b16 %v457, %v455
    %v632 = vpack.c.b16 %v460, %v458
    %v633 = vpack.c.b16 %v461, %v459
    %v634 = vpack.c.b16 %v464, %v462
    %v635 = vpack.c.b16 %v465, %v463
    %v636 = vpack.c.b16 %v468, %v466
    %v637 = vpack.c.b16 %v469, %v467
    %v638 = vpack.c.b16 %v472, %v470
    %v639 = vpack.c.b16 %v473, %v471
    %v640 = vpack.c.b16 %v476, %v474
    %v641 = vpack.c.b16 %v477, %v475
    %v642 = vpack.c.b16 %v480, %v478
    %v643 = vpack.c.b16 %v481, %v479
    %v644 = vpack.c.b16 %v484, %v482
    %v645 = vpack.c.b16 %v485, %v483
    %v646 = vpack.c.b16 %v488, %v486
    %v647 = vpack.c.b16 %v489, %v487
    %v648 = vpack.c.b16 %v492, %v490
    %v649 = vpack.c.b16 %v493, %v491
    %v650 = vpack.c.b16 %v496, %v494
    %v651 = vpack.c.b16 %v497, %v495
    %v652 = vpack.c.b16 %v500, %v498
    %v653 = vpack.c.b16 %v501, %v499
    %v654 = vpack.c.b16 %v504, %v502
    %v655 = vpack.c.b16 %v505, %v503
    %v656 = vpack.c.b16 %v508, %v506
    %v657 = vpack.c.b16 %v509, %v507
    %v658 = vpack.c.b16 %v512, %v510
    %v659 = vpack.c.b16 %v513, %v511
    %v660 = vpack.c.b16 %v516, %v514
    %v661 = vpack.c.b16 %v517, %v515
    %v662 = vpack.c.b16 %v520, %v518
    %v663 = vpack.c.b16 %v521, %v519
    %v664 = vpack.c.b16 %v524, %v522
    %v665 = vpack.c.b16 %v525, %v523
    %v666 = vpack.c.b16 %v528, %v526
    %v667 = vpack.c.b16 %v529, %v527
    %v668 = vpack.c.b16 %v532, %v530
    %v669 = vpack.c.b16 %v533, %v531
    %v670 = vpack.c.b16 %v536, %v534
    %v671 = vpack.c.b16 %v537, %v535
    %v672 = vpack.c.b16 %v540, %v538
    %v673 = vpack.c.b16 %v541, %v539
    %v674 = vpack.c.b16 %v544, %v542
    %v675 = vpack.c.b16 %v545, %v543
    %v676 = vpack.c.b16 %v548, %v546
    %v677 = vpack.c.b16 %v549, %v547
    %v761 = vunpack.c.l.b16 %v147
    %v762 = vunpack.c.l.b16 %v148
    %v763 = vunpack.c.l.b16 %v149
    %v764 = vunpack.c.l.b16 %v150
    %v765 = vunpack.c.l.b16 %v151
    %v766 = vunpack.c.l.b16 %v152
    %v767 = vunpack.c.l.b16 %v153
    %v768 = vunpack.c.l.b16 %v154
    %v769 = vunpack.c.l.b16 %v155
    %v770 = vunpack.c.l.b16 %v156
    %v771 = vunpack.c.l.b16 %v157
    %v772 = vunpack.c.l.b16 %v158
    %v773 = vunpack.c.l.b16 %v159
    %v774 = vunpack.c.l.b16 %v160
    %v775 = vunpack.c.l.b16 %v161
    %v776 = vunpack.c.l.b16 %v162
    %v777 = vunpack.c.l.b16 %v163
    %v778 = vunpack.c.l.b16 %v164
    %v779 = vunpack.c.l.b16 %v165
    %v780 = vpack.c.b16 %v762, %v761
    %v781 = vpack.c.b16 %v764, %v763
    %v782 = vpack.c.b16 %v766, %v765
    %v783 = vpack.c.b16 %v768, %v767
    %v784 = vpack.c.b16 %v770, %v769
    %v785 = vpack.c.b16 %v772, %v771
    %v786 = vpack.c.b16 %v774, %v773
    %v787 = vpack.c.b16 %v776, %v775
    %v788 = vpack.c.b16 %v778, %v777
    %v789 = vpack.c.b16 %v779, %v779
    %vm799 = vcmask 154624
    %v801 = vsel %vm799, %v551, 0
    %v804 = vsel %vm799, %v553, 0
    %v807 = vsel %vm799, %v555, 0
    %v810 = vsel %vm799, %v557, 0
    %v813 = vsel %vm799, %v559, 0
    %v816 = vsel %vm799, %v561, 0
    %v819 = vsel %vm799, %v563, 0
    %v822 = vsel %vm799, %v565, 0
    %v825 = vsel %vm799, %v567, 0
    %v828 = vsel %vm799, %v569, 0
    %v831 = vsel %vm799, %v571, 0
    %v834 = vsel %vm799, %v573, 0
    %v837 = vsel %vm799, %v575, 0
    %v840 = vsel %vm799, %v577, 0
    %v843 = vsel %vm799, %v579, 0
    %v846 = vsel %vm799, %v581, 0
    %v849 = vsel %vm799, %v583, 0
    %v852 = vsel %vm799, %v585, 0
    %v855 = vsel %vm799, %v587, 0
    %v858 = vsel %vm799, %v589, 0
    %v861 = vsel %vm799, %v591, 0
    %v864 = vsel %vm799, %v593, 0
    %v867 = vsel %vm799, %v595, 0
    %v870 = vsel %vm799, %v597, 0
    %v873 = vsel %vm799, %v599, 0
    %v876 = vsel %vm799, %v601, 0
    %v879 = vsel %vm799, %v603, 0
    %v882 = vsel %vm799, %v605, 0
    %v885 = vsel %vm799, %v607, 0
    %v888 = vsel %vm799, %v609, 0
    %v891 = vsel %vm799, %v611, 0
    %v894 = vsel %vm799, %v613, 0
    %v897 = vsel %vm799, %v615, 0
    %v900 = vsel %vm799, %v617, 0
    %v903 = vsel %vm799, %v619, 0
    %v906 = vsel %vm799, %v621, 0
    %v909 = vsel %vm799, %v623, 0
    %v912 = vsel %vm799, %v625, 0
    %v915 = vsel %vm799, %v627, 0
    %v918 = vsel %vm799, %v629, 0
    %v921 = vsel %vm799, %v631, 0
    %v924 = vsel %vm799, %v633, 0
    %v927 = vsel %vm799, %v635, 0
    %v930 = vsel %vm799, %v637, 0
    %v933 = vsel %vm799, %v639, 0
    %v936 = vsel %vm799, %v641, 0
    %v939 = vsel %vm799, %v643, 0
    %v942 = vsel %vm799, %v645, 0
    %v945 = vsel %vm799, %v647, 0
    %v948 = vsel %vm799, %v649, 0
    %v951 = vsel %vm799, %v651, 0
    %v954 = vsel %vm799, %v653, 0
    %v957 = vsel %vm799, %v655, 0
    %v960 = vsel %vm799, %v657, 0
    %v963 = vsel %vm799, %v659, 0
    %v966 = vsel %vm799, %v661, 0
    %v969 = vsel %vm799, %v663, 0
    %v972 = vsel %vm799, %v665, 0
    %v975 = vsel %vm799, %v667, 0
    %v978 = vsel %vm799, %v669, 0
    %v981 = vsel %vm799, %v671, 0
    %v984 = vsel %vm799, %v673, 0
    %v987 = vsel %vm799, %v675, 0
    %v990 = vsel %vm799, %v677, 0
    %vm992 = vcmask 1040384
    %vm993 = vcmask 1041408
    %v994 = vsel %vm992, 4294967295, 65535
    %v995 = vsel %vm993, %v994, 0
    %v997 = vand.u32 %v789, %v995
    %999 = vmatprep.subr.bf16.mxu0 0
    %1000 = vmatpush1.bf16.msra.mxu0 %v780
    %1001 = vmatprep.subr.bf16.mxu0 0
    %1002 = vmatpush1.bf16.msra.mxu0 %v781
    %1003 = vmatprep.subr.bf16.mxu0 0
    %1004 = vmatpush1.bf16.msra.mxu0 %v782
    %1005 = vmatprep.subr.bf16.mxu0 0
    %1006 = vmatpush1.bf16.msra.mxu0 %v783
    %1007 = vmatprep.subr.bf16.mxu0 0
    %1008 = vmatpush1.bf16.msra.mxu0 %v784
    %1009 = vmatprep.subr.bf16.mxu0 0
    %1010 = vmatpush1.bf16.msra.mxu0 %v785
    %1011 = vmatprep.subr.bf16.mxu0 0
    %1012 = vmatpush1.bf16.msra.mxu0 %v786
    %1013 = vmatprep.subr.bf16.mxu0 0
    %1014 = vmatpush1.bf16.msra.mxu0 %v787
    %1015 = vmatprep.subr.bf16.mxu0 0
    %1016 = vmatpush1.bf16.msra.mxu0 %v788
    %1017 = vmatprep.subr.bf16.mxu0 0
    %1018 = vmatpush1.bf16.msra.mxu0 %v997
    %1019 = vmatprep.subr.bf16.mxu0 0
    %1020 = vmatpush1.bf16.msra.mxu0 0
    %1021 = vmatprep.subr.bf16.mxu0 0
    %1022 = vmatpush1.bf16.msra.mxu0 0
    %1023 = vmatprep.subr.bf16.mxu0 0
    %1024 = vmatpush1.bf16.msra.mxu0 0
    %1025 = vmatprep.subr.bf16.mxu0 0
    %1026 = vmatpush1.bf16.msra.mxu0 0
    %1027 = vmatprep.subr.bf16.mxu0 0
    %1028 = vmatpush1.bf16.msra.mxu0 0
    %1029 = vmatprep.subr.bf16.mxu0 0
    %1030 = vmatpush1.bf16.msra.mxu0 0
    %1031 = vmatprep.mubr.bf16.mxu0 %v801
    %1032 = vmatmul.mubr.bf16.gmra.mrb[0].mxu0 %v550
    %v1033 = vpop.f32.mrb[0].mxu0
    %v1034 = vadd.f32 0.0, %v1033
    %v1035 = vpop.f32.mrb[0].mxu0
    %v1036 = vpop.f32.mrb[0].mxu0
    %v1037 = vadd.f32 0.0, %v1036
    %v1038 = vpop.f32.mrb[0].mxu0
    %1039 = vmatprep.mubr.bf16.mxu0 %v804
    %1040 = vmatmul.mubr.bf16.gmra.mrb[0].mxu0 %v552
    %v1041 = vpop.f32.mrb[0].mxu0
    %v1042 = vadd.f32 0.0, %v1041
    %v1043 = vpop.f32.mrb[0].mxu0
    %v1044 = vpop.f32.mrb[0].mxu0
    %v1045 = vadd.f32 0.0, %v1044
    %v1046 = vpop.f32.mrb[0].mxu0
    %1047 = vmatprep.mubr.bf16.mxu0 %v807
    %1048 = vmatmul.mubr.bf16.gmra.mrb[0].mxu0 %v554
    %v1049 = vpop.f32.mrb[0].mxu0
    %v1050 = vadd.f32 0.0, %v1049
    %v1051 = vpop.f32.mrb[0].mxu0
    %v1052 = vpop.f32.mrb[0].mxu0
    %v1053 = vadd.f32 0.0, %v1052
    %v1054 = vpop.f32.mrb[0].mxu0
    %1055 = vmatprep.mubr.bf16.mxu0 %v810
    %1056 = vmatmul.mubr.bf16.gmra.mrb[0].mxu0 %v556
    %v1057 = vpop.f32.mrb[0].mxu0
    %v1058 = vadd.f32 0.0, %v1057
    %v1059 = vpop.f32.mrb[0].mxu0
    %v1060 = vpop.f32.mrb[0].mxu0
    %v1061 = vadd.f32 0.0, %v1060
    %v1062 = vpop.f32.mrb[0].mxu0
    %1063 = vmatprep.mubr.bf16.mxu0 %v813
    %1064 = vmatmul.mubr.bf16.gmra.mrb[0].mxu0 %v558
    %v1065 = vpop.f32.mrb[0].mxu0
    %v1066 = vadd.f32 0.0, %v1065
    %v1067 = vpop.f32.mrb[0].mxu0
    %v1068 = vpop.f32.mrb[0].mxu0
    %v1069 = vadd.f32 0.0, %v1068
    %v1070 = vpop.f32.mrb[0].mxu0
    %1071 = vmatprep.mubr.bf16.mxu0 %v816
    %1072 = vmatmul.mubr.bf16.gmra.mrb[0].mxu0 %v560
    %v1073 = vpop.f32.mrb[0].mxu0
    %v1074 = vadd.f32 0.0, %v1073
    %v1075 = vpop.f32.mrb[0].mxu0
    %v1076 = vpop.f32.mrb[0].mxu0
    %v1077 = vadd.f32 0.0, %v1076
    %v1078 = vpop.f32.mrb[0].mxu0
    %1079 = vmatprep.mubr.bf16.mxu0 %v819
    %1080 = vmatmul.mubr.bf16.gmra.mrb[0].mxu0 %v562
    %v1081 = vpop.f32.mrb[0].mxu0
    %v1082 = vadd.f32 0.0, %v1081
    %v1083 = vpop.f32.mrb[0].mxu0
    %v1084 = vpop.f32.mrb[0].mxu0
    %v1085 = vadd.f32 0.0, %v1084
    %v1086 = vpop.f32.mrb[0].mxu0
    %1087 = vmatprep.mubr.bf16.mxu0 %v822
    %1088 = vmatmul.mubr.bf16.gmra.mrb[0].mxu0 %v564
    %v1089 = vpop.f32.mrb[0].mxu0
    %v1090 = vadd.f32 0.0, %v1089
    %v1091 = vpop.f32.mrb[0].mxu0
    %v1092 = vpop.f32.mrb[0].mxu0
    %v1093 = vadd.f32 0.0, %v1092
    %v1094 = vpop.f32.mrb[0].mxu0
    %1095 = vmatprep.mubr.bf16.mxu0 %v825
    %1096 = vmatmul.mubr.bf16.gmra.mrb[0].mxu0 %v566
    %v1097 = vpop.f32.mrb[0].mxu0
    %v1098 = vadd.f32 0.0, %v1097
    %v1099 = vpop.f32.mrb[0].mxu0
    %v1100 = vpop.f32.mrb[0].mxu0
    %v1101 = vadd.f32 0.0, %v1100
    %v1102 = vpop.f32.mrb[0].mxu0
    %1103 = vmatprep.mubr.bf16.mxu0 %v828
    %1104 = vmatmul.mubr.bf16.gmra.mrb[0].mxu0 %v568
    %v1105 = vpop.f32.mrb[0].mxu0
    %v1106 = vadd.f32 0.0, %v1105
    %v1107 = vpop.f32.mrb[0].mxu0
    %v1108 = vpop.f32.mrb[0].mxu0
    %v1109 = vadd.f32 0.0, %v1108
    %v1110 = vpop.f32.mrb[0].mxu0
    %1111 = vmatprep.mubr.bf16.mxu0 %v831
    %1112 = vmatmul.mubr.bf16.gmra.mrb[0].mxu0 %v570
    %v1113 = vpop.f32.mrb[0].mxu0
    %v1114 = vadd.f32 0.0, %v1113
    %v1115 = vpop.f32.mrb[0].mxu0
    %v1116 = vpop.f32.mrb[0].mxu0
    %v1117 = vadd.f32 0.0, %v1116
    %v1118 = vpop.f32.mrb[0].mxu0
    %1119 = vmatprep.mubr.bf16.mxu0 %v834
    %1120 = vmatmul.mubr.bf16.gmra.mrb[0].mxu0 %v572
    %v1121 = vpop.f32.mrb[0].mxu0
    %v1122 = vadd.f32 0.0, %v1121
    %v1123 = vpop.f32.mrb[0].mxu0
    %v1124 = vpop.f32.mrb[0].mxu0
    %v1125 = vadd.f32 0.0, %v1124
    %v1126 = vpop.f32.mrb[0].mxu0
    %1127 = vmatprep.mubr.bf16.mxu0 %v837
    %1128 = vmatmul.mubr.bf16.gmra.mrb[0].mxu0 %v574
    %v1129 = vpop.f32.mrb[0].mxu0
    %v1130 = vadd.f32 0.0, %v1129
    %v1131 = vpop.f32.mrb[0].mxu0
    %v1132 = vpop.f32.mrb[0].mxu0
    %v1133 = vadd.f32 0.0, %v1132
    %v1134 = vpop.f32.mrb[0].mxu0
    %1135 = vmatprep.mubr.bf16.mxu0 %v840
    %1136 = vmatmul.mubr.bf16.gmra.mrb[0].mxu0 %v576
    %v1137 = vpop.f32.mrb[0].mxu0
    %v1138 = vadd.f32 0.0, %v1137
    %v1139 = vpop.f32.mrb[0].mxu0
    %v1140 = vpop.f32.mrb[0].mxu0
    %v1141 = vadd.f32 0.0, %v1140
    %v1142 = vpop.f32.mrb[0].mxu0
    %1143 = vmatprep.mubr.bf16.mxu0 %v843
    %1144 = vmatmul.mubr.bf16.gmra.mrb[0].mxu0 %v578
    %v1145 = vpop.f32.mrb[0].mxu0
    %v1146 = vadd.f32 0.0, %v1145
    %v1147 = vpop.f32.mrb[0].mxu0
    %v1148 = vpop.f32.mrb[0].mxu0
    %v1149 = vadd.f32 0.0, %v1148
    %v1150 = vpop.f32.mrb[0].mxu0
    %1151 = vmatprep.mubr.bf16.mxu0 %v846
    %1152 = vmatmul.mubr.bf16.gmra.mrb[0].mxu0 %v580
    %v1153 = vpop.f32.mrb[0].mxu0
    %v1154 = vadd.f32 0.0, %v1153
    %v1155 = vpop.f32.mrb[0].mxu0
    %v1156 = vpop.f32.mrb[0].mxu0
    %v1157 = vadd.f32 0.0, %v1156
    %v1158 = vpop.f32.mrb[0].mxu0
    %1159 = vmatprep.mubr.bf16.mxu0 %v849
    %1160 = vmatmul.mubr.bf16.gmra.mrb[0].mxu0 %v582
    %v1161 = vpop.f32.mrb[0].mxu0
    %v1162 = vadd.f32 0.0, %v1161
    %v1163 = vpop.f32.mrb[0].mxu0
    %v1164 = vpop.f32.mrb[0].mxu0
    %v1165 = vadd.f32 0.0, %v1164
    %v1166 = vpop.f32.mrb[0].mxu0
    %1167 = vmatprep.mubr.bf16.mxu0 %v852
    %1168 = vmatmul.mubr.bf16.gmra.mrb[0].mxu0 %v584
    %v1169 = vpop.f32.mrb[0].mxu0
    %v1170 = vadd.f32 0.0, %v1169
    %v1171 = vpop.f32.mrb[0].mxu0
    %v1172 = vpop.f32.mrb[0].mxu0
    %v1173 = vadd.f32 0.0, %v1172
    %v1174 = vpop.f32.mrb[0].mxu0
    %1175 = vmatprep.mubr.bf16.mxu0 %v855
    %1176 = vmatmul.mubr.bf16.gmra.mrb[0].mxu0 %v586
    %v1177 = vpop.f32.mrb[0].mxu0
    %v1178 = vadd.f32 0.0, %v1177
    %v1179 = vpop.f32.mrb[0].mxu0
    %v1180 = vpop.f32.mrb[0].mxu0
    %v1181 = vadd.f32 0.0, %v1180
    %v1182 = vpop.f32.mrb[0].mxu0
    %1183 = vmatprep.mubr.bf16.mxu0 %v858
    %1184 = vmatmul.mubr.bf16.gmra.mrb[0].mxu0 %v588
    %v1185 = vpop.f32.mrb[0].mxu0
    %v1186 = vadd.f32 0.0, %v1185
    %v1187 = vpop.f32.mrb[0].mxu0
    %v1188 = vpop.f32.mrb[0].mxu0
    %v1189 = vadd.f32 0.0, %v1188
    %v1190 = vpop.f32.mrb[0].mxu0
    %1191 = vmatprep.mubr.bf16.mxu0 %v861
    %1192 = vmatmul.mubr.bf16.gmra.mrb[0].mxu0 %v590
    %v1193 = vpop.f32.mrb[0].mxu0
    %v1194 = vadd.f32 0.0, %v1193
    %v1195 = vpop.f32.mrb[0].mxu0
    %v1196 = vpop.f32.mrb[0].mxu0
    %v1197 = vadd.f32 0.0, %v1196
    %v1198 = vpop.f32.mrb[0].mxu0
    %1199 = vmatprep.mubr.bf16.mxu0 %v864
    %1200 = vmatmul.mubr.bf16.gmra.mrb[0].mxu0 %v592
    %v1201 = vpop.f32.mrb[0].mxu0
    %v1202 = vadd.f32 0.0, %v1201
    %v1203 = vpop.f32.mrb[0].mxu0
    %v1204 = vpop.f32.mrb[0].mxu0
    %v1205 = vadd.f32 0.0, %v1204
    %v1206 = vpop.f32.mrb[0].mxu0
    %1207 = vmatprep.mubr.bf16.mxu0 %v867
    %1208 = vmatmul.mubr.bf16.gmra.mrb[0].mxu0 %v594
    %v1209 = vpop.f32.mrb[0].mxu0
    %v1210 = vadd.f32 0.0, %v1209
    %v1211 = vpop.f32.mrb[0].mxu0
    %v1212 = vpop.f32.mrb[0].mxu0
    %v1213 = vadd.f32 0.0, %v1212
    %v1214 = vpop.f32.mrb[0].mxu0
    %1215 = vmatprep.mubr.bf16.mxu0 %v870
    %1216 = vmatmul.mubr.bf16.gmra.mrb[0].mxu0 %v596
    %v1217 = vpop.f32.mrb[0].mxu0
    %v1218 = vadd.f32 0.0, %v1217
    %v1219 = vpop.f32.mrb[0].mxu0
    %v1220 = vpop.f32.mrb[0].mxu0
    %v1221 = vadd.f32 0.0, %v1220
    %v1222 = vpop.f32.mrb[0].mxu0
    %1223 = vmatprep.mubr.bf16.mxu0 %v873
    %1224 = vmatmul.mubr.bf16.gmra.mrb[0].mxu0 %v598
    %v1225 = vpop.f32.mrb[0].mxu0
    %v1226 = vadd.f32 0.0, %v1225
    %v1227 = vpop.f32.mrb[0].mxu0
    %v1228 = vpop.f32.mrb[0].mxu0
    %v1229 = vadd.f32 0.0, %v1228
    %v1230 = vpop.f32.mrb[0].mxu0
    %1231 = vmatprep.mubr.bf16.mxu0 %v876
    %1232 = vmatmul.mubr.bf16.gmra.mrb[0].mxu0 %v600
    %v1233 = vpop.f32.mrb[0].mxu0
    %v1234 = vadd.f32 0.0, %v1233
    %v1235 = vpop.f32.mrb[0].mxu0
    %v1236 = vpop.f32.mrb[0].mxu0
    %v1237 = vadd.f32 0.0, %v1236
    %v1238 = vpop.f32.mrb[0].mxu0
    %1239 = vmatprep.mubr.bf16.mxu0 %v879
    %1240 = vmatmul.mubr.bf16.gmra.mrb[0].mxu0 %v602
    %v1241 = vpop.f32.mrb[0].mxu0
    %v1242 = vadd.f32 0.0, %v1241
    %v1243 = vpop.f32.mrb[0].mxu0
    %v1244 = vpop.f32.mrb[0].mxu0
    %v1245 = vadd.f32 0.0, %v1244
    %v1246 = vpop.f32.mrb[0].mxu0
    %1247 = vmatprep.mubr.bf16.mxu0 %v882
    %1248 = vmatmul.mubr.bf16.gmra.mrb[0].mxu0 %v604
    %v1249 = vpop.f32.mrb[0].mxu0
    %v1250 = vadd.f32 0.0, %v1249
    %v1251 = vpop.f32.mrb[0].mxu0
    %v1252 = vpop.f32.mrb[0].mxu0
    %v1253 = vadd.f32 0.0, %v1252
    %v1254 = vpop.f32.mrb[0].mxu0
    %1255 = vmatprep.mubr.bf16.mxu0 %v885
    %1256 = vmatmul.mubr.bf16.gmra.mrb[0].mxu0 %v606
    %v1257 = vpop.f32.mrb[0].mxu0
    %v1258 = vadd.f32 0.0, %v1257
    %v1259 = vpop.f32.mrb[0].mxu0
    %v1260 = vpop.f32.mrb[0].mxu0
    %v1261 = vadd.f32 0.0, %v1260
    %v1262 = vpop.f32.mrb[0].mxu0
    %1263 = vmatprep.mubr.bf16.mxu0 %v888
    %1264 = vmatmul.mubr.bf16.gmra.mrb[0].mxu0 %v608
    %v1265 = vpop.f32.mrb[0].mxu0
    %v1266 = vadd.f32 0.0, %v1265
    %v1267 = vpop.f32.mrb[0].mxu0
    %v1268 = vpop.f32.mrb[0].mxu0
    %v1269 = vadd.f32 0.0, %v1268
    %v1270 = vpop.f32.mrb[0].mxu0
    %1271 = vmatprep.mubr.bf16.mxu0 %v891
    %1272 = vmatmul.mubr.bf16.gmra.mrb[0].mxu0 %v610
    %v1273 = vpop.f32.mrb[0].mxu0
    %v1274 = vadd.f32 0.0, %v1273
    %v1275 = vpop.f32.mrb[0].mxu0
    %v1276 = vpop.f32.mrb[0].mxu0
    %v1277 = vadd.f32 0.0, %v1276
    %v1278 = vpop.f32.mrb[0].mxu0
    %1279 = vmatprep.mubr.bf16.mxu0 %v894
    %1280 = vmatmul.mubr.bf16.gmra.mrb[0].mxu0 %v612
    %v1281 = vpop.f32.mrb[0].mxu0
    %v1282 = vadd.f32 0.0, %v1281
    %v1283 = vpop.f32.mrb[0].mxu0
    %v1284 = vpop.f32.mrb[0].mxu0
    %v1285 = vadd.f32 0.0, %v1284
    %v1286 = vpop.f32.mrb[0].mxu0
    %1287 = vmatprep.mubr.bf16.mxu0 %v897
    %1288 = vmatmul.mubr.bf16.gmra.mrb[0].mxu0 %v614
    %v1289 = vpop.f32.mrb[0].mxu0
    %v1290 = vadd.f32 0.0, %v1289
    %v1291 = vpop.f32.mrb[0].mxu0
    %v1292 = vpop.f32.mrb[0].mxu0
    %v1293 = vadd.f32 0.0, %v1292
    %v1294 = vpop.f32.mrb[0].mxu0
    %1295 = vmatprep.mubr.bf16.mxu0 %v900
    %1296 = vmatmul.mubr.bf16.gmra.mrb[0].mxu0 %v616
    %v1297 = vpop.f32.mrb[0].mxu0
    %v1298 = vadd.f32 0.0, %v1297
    %v1299 = vpop.f32.mrb[0].mxu0
    %v1300 = vpop.f32.mrb[0].mxu0
    %v1301 = vadd.f32 0.0, %v1300
    %v1302 = vpop.f32.mrb[0].mxu0
    %1303 = vmatprep.mubr.bf16.mxu0 %v903
    %1304 = vmatmul.mubr.bf16.gmra.mrb[0].mxu0 %v618
    %v1305 = vpop.f32.mrb[0].mxu0
    %v1306 = vadd.f32 0.0, %v1305
    %v1307 = vpop.f32.mrb[0].mxu0
    %v1308 = vpop.f32.mrb[0].mxu0
    %v1309 = vadd.f32 0.0, %v1308
    %v1310 = vpop.f32.mrb[0].mxu0
    %1311 = vmatprep.mubr.bf16.mxu0 %v906
    %1312 = vmatmul.mubr.bf16.gmra.mrb[0].mxu0 %v620
    %v1313 = vpop.f32.mrb[0].mxu0
    %v1314 = vadd.f32 0.0, %v1313
    %v1315 = vpop.f32.mrb[0].mxu0
    %v1316 = vpop.f32.mrb[0].mxu0
    %v1317 = vadd.f32 0.0, %v1316
    %v1318 = vpop.f32.mrb[0].mxu0
    %1319 = vmatprep.mubr.bf16.mxu0 %v909
    %1320 = vmatmul.mubr.bf16.gmra.mrb[0].mxu0 %v622
    %v1321 = vpop.f32.mrb[0].mxu0
    %v1322 = vadd.f32 0.0, %v1321
    %v1323 = vpop.f32.mrb[0].mxu0
    %v1324 = vpop.f32.mrb[0].mxu0
    %v1325 = vadd.f32 0.0, %v1324
    %v1326 = vpop.f32.mrb[0].mxu0
    %1327 = vmatprep.mubr.bf16.mxu0 %v912
    %1328 = vmatmul.mubr.bf16.gmra.mrb[0].mxu0 %v624
    %v1329 = vpop.f32.mrb[0].mxu0
    %v1330 = vadd.f32 0.0, %v1329
    %v1331 = vpop.f32.mrb[0].mxu0
    %v1332 = vpop.f32.mrb[0].mxu0
    %v1333 = vadd.f32 0.0, %v1332
    %v1334 = vpop.f32.mrb[0].mxu0
    %1335 = vmatprep.mubr.bf16.mxu0 %v915
    %1336 = vmatmul.mubr.bf16.gmra.mrb[0].mxu0 %v626
    %v1337 = vpop.f32.mrb[0].mxu0
    %v1338 = vadd.f32 0.0, %v1337
    %v1339 = vpop.f32.mrb[0].mxu0
    %v1340 = vpop.f32.mrb[0].mxu0
    %v1341 = vadd.f32 0.0, %v1340
    %v1342 = vpop.f32.mrb[0].mxu0
    %1343 = vmatprep.mubr.bf16.mxu0 %v918
    %1344 = vmatmul.mubr.bf16.gmra.mrb[0].mxu0 %v628
    %v1345 = vpop.f32.mrb[0].mxu0
    %v1346 = vadd.f32 0.0, %v1345
    %v1347 = vpop.f32.mrb[0].mxu0
    %v1348 = vpop.f32.mrb[0].mxu0
    %v1349 = vadd.f32 0.0, %v1348
    %v1350 = vpop.f32.mrb[0].mxu0
    %1351 = vmatprep.mubr.bf16.mxu0 %v921
    %1352 = vmatmul.mubr.bf16.gmra.mrb[0].mxu0 %v630
    %v1353 = vpop.f32.mrb[0].mxu0
    %v1354 = vadd.f32 0.0, %v1353
    %v1355 = vpop.f32.mrb[0].mxu0
    %v1356 = vpop.f32.mrb[0].mxu0
    %v1357 = vadd.f32 0.0, %v1356
    %v1358 = vpop.f32.mrb[0].mxu0
    %1359 = vmatprep.mubr.bf16.mxu0 %v924
    %1360 = vmatmul.mubr.bf16.gmra.mrb[0].mxu0 %v632
    %v1361 = vpop.f32.mrb[0].mxu0
    %v1362 = vadd.f32 0.0, %v1361
    %v1363 = vpop.f32.mrb[0].mxu0
    %v1364 = vpop.f32.mrb[0].mxu0
    %v1365 = vadd.f32 0.0, %v1364
    %v1366 = vpop.f32.mrb[0].mxu0
    %1367 = vmatprep.mubr.bf16.mxu0 %v927
    %1368 = vmatmul.mubr.bf16.gmra.mrb[0].mxu0 %v634
    %v1369 = vpop.f32.mrb[0].mxu0
    %v1370 = vadd.f32 0.0, %v1369
    %v1371 = vpop.f32.mrb[0].mxu0
    %v1372 = vpop.f32.mrb[0].mxu0
    %v1373 = vadd.f32 0.0, %v1372
    %v1374 = vpop.f32.mrb[0].mxu0
    %1375 = vmatprep.mubr.bf16.mxu0 %v930
    %1376 = vmatmul.mubr.bf16.gmra.mrb[0].mxu0 %v636
    %v1377 = vpop.f32.mrb[0].mxu0
    %v1378 = vadd.f32 0.0, %v1377
    %v1379 = vpop.f32.mrb[0].mxu0
    %v1380 = vpop.f32.mrb[0].mxu0
    %v1381 = vadd.f32 0.0, %v1380
    %v1382 = vpop.f32.mrb[0].mxu0
    %1383 = vmatprep.mubr.bf16.mxu0 %v933
    %1384 = vmatmul.mubr.bf16.gmra.mrb[0].mxu0 %v638
    %v1385 = vpop.f32.mrb[0].mxu0
    %v1386 = vadd.f32 0.0, %v1385
    %v1387 = vpop.f32.mrb[0].mxu0
    %v1388 = vpop.f32.mrb[0].mxu0
    %v1389 = vadd.f32 0.0, %v1388
    %v1390 = vpop.f32.mrb[0].mxu0
    %1391 = vmatprep.mubr.bf16.mxu0 %v936
    %1392 = vmatmul.mubr.bf16.gmra.mrb[0].mxu0 %v640
    %v1393 = vpop.f32.mrb[0].mxu0
    %v1394 = vadd.f32 0.0, %v1393
    %v1395 = vpop.f32.mrb[0].mxu0
    %v1396 = vpop.f32.mrb[0].mxu0
    %v1397 = vadd.f32 0.0, %v1396
    %v1398 = vpop.f32.mrb[0].mxu0
    %1399 = vmatprep.mubr.bf16.mxu0 %v939
    %1400 = vmatmul.mubr.bf16.gmra.mrb[0].mxu0 %v642
    %v1401 = vpop.f32.mrb[0].mxu0
    %v1402 = vadd.f32 0.0, %v1401
    %v1403 = vpop.f32.mrb[0].mxu0
    %v1404 = vpop.f32.mrb[0].mxu0
    %v1405 = vadd.f32 0.0, %v1404
    %v1406 = vpop.f32.mrb[0].mxu0
    %1407 = vmatprep.mubr.bf16.mxu0 %v942
    %1408 = vmatmul.mubr.bf16.gmra.mrb[0].mxu0 %v644
    %v1409 = vpop.f32.mrb[0].mxu0
    %v1410 = vadd.f32 0.0, %v1409
    %v1411 = vpop.f32.mrb[0].mxu0
    %v1412 = vpop.f32.mrb[0].mxu0
    %v1413 = vadd.f32 0.0, %v1412
    %v1414 = vpop.f32.mrb[0].mxu0
    %1415 = vmatprep.mubr.bf16.mxu0 %v945
    %1416 = vmatmul.mubr.bf16.gmra.mrb[0].mxu0 %v646
    %v1417 = vpop.f32.mrb[0].mxu0
    %v1418 = vadd.f32 0.0, %v1417
    %v1419 = vpop.f32.mrb[0].mxu0
    %v1420 = vpop.f32.mrb[0].mxu0
    %v1421 = vadd.f32 0.0, %v1420
    %v1422 = vpop.f32.mrb[0].mxu0
    %1423 = vmatprep.mubr.bf16.mxu0 %v948
    %1424 = vmatmul.mubr.bf16.gmra.mrb[0].mxu0 %v648
    %v1425 = vpop.f32.mrb[0].mxu0
    %v1426 = vadd.f32 0.0, %v1425
    %v1427 = vpop.f32.mrb[0].mxu0
    %v1428 = vpop.f32.mrb[0].mxu0
    %v1429 = vadd.f32 0.0, %v1428
    %v1430 = vpop.f32.mrb[0].mxu0
    %1431 = vmatprep.mubr.bf16.mxu0 %v951
    %1432 = vmatmul.mubr.bf16.gmra.mrb[0].mxu0 %v650
    %v1433 = vpop.f32.mrb[0].mxu0
    %v1434 = vadd.f32 0.0, %v1433
    %v1435 = vpop.f32.mrb[0].mxu0
    %v1436 = vpop.f32.mrb[0].mxu0
    %v1437 = vadd.f32 0.0, %v1436
    %v1438 = vpop.f32.mrb[0].mxu0
    %1439 = vmatprep.mubr.bf16.mxu0 %v954
    %1440 = vmatmul.mubr.bf16.gmra.mrb[0].mxu0 %v652
    %v1441 = vpop.f32.mrb[0].mxu0
    %v1442 = vadd.f32 0.0, %v1441
    %v1443 = vpop.f32.mrb[0].mxu0
    %v1444 = vpop.f32.mrb[0].mxu0
    %v1445 = vadd.f32 0.0, %v1444
    %v1446 = vpop.f32.mrb[0].mxu0
    %1447 = vmatprep.mubr.bf16.mxu0 %v957
    %1448 = vmatmul.mubr.bf16.gmra.mrb[0].mxu0 %v654
    %v1449 = vpop.f32.mrb[0].mxu0
    %v1450 = vadd.f32 0.0, %v1449
    %v1451 = vpop.f32.mrb[0].mxu0
    %v1452 = vpop.f32.mrb[0].mxu0
    %v1453 = vadd.f32 0.0, %v1452
    %v1454 = vpop.f32.mrb[0].mxu0
    %1455 = vmatprep.mubr.bf16.mxu0 %v960
    %1456 = vmatmul.mubr.bf16.gmra.mrb[0].mxu0 %v656
    %v1457 = vpop.f32.mrb[0].mxu0
    %v1458 = vadd.f32 0.0, %v1457
    %v1459 = vpop.f32.mrb[0].mxu0
    %v1460 = vpop.f32.mrb[0].mxu0
    %v1461 = vadd.f32 0.0, %v1460
    %v1462 = vpop.f32.mrb[0].mxu0
    %1463 = vmatprep.mubr.bf16.mxu0 %v963
    %1464 = vmatmul.mubr.bf16.gmra.mrb[0].mxu0 %v658
    %v1465 = vpop.f32.mrb[0].mxu0
    %v1466 = vadd.f32 0.0, %v1465
    %v1467 = vpop.f32.mrb[0].mxu0
    %v1468 = vpop.f32.mrb[0].mxu0
    %v1469 = vadd.f32 0.0, %v1468
    %v1470 = vpop.f32.mrb[0].mxu0
    %1471 = vmatprep.mubr.bf16.mxu0 %v966
    %1472 = vmatmul.mubr.bf16.gmra.mrb[0].mxu0 %v660
    %v1473 = vpop.f32.mrb[0].mxu0
    %v1474 = vadd.f32 0.0, %v1473
    %v1475 = vpop.f32.mrb[0].mxu0
    %v1476 = vpop.f32.mrb[0].mxu0
    %v1477 = vadd.f32 0.0, %v1476
    %v1478 = vpop.f32.mrb[0].mxu0
    %1479 = vmatprep.mubr.bf16.mxu0 %v969
    %1480 = vmatmul.mubr.bf16.gmra.mrb[0].mxu0 %v662
    %v1481 = vpop.f32.mrb[0].mxu0
    %v1482 = vadd.f32 0.0, %v1481
    %v1483 = vpop.f32.mrb[0].mxu0
    %v1484 = vpop.f32.mrb[0].mxu0
    %v1485 = vadd.f32 0.0, %v1484
    %v1486 = vpop.f32.mrb[0].mxu0
    %1487 = vmatprep.mubr.bf16.mxu0 %v972
    %1488 = vmatmul.mubr.bf16.gmra.mrb[0].mxu0 %v664
    %v1489 = vpop.f32.mrb[0].mxu0
    %v1490 = vadd.f32 0.0, %v1489
    %v1491 = vpop.f32.mrb[0].mxu0
    %v1492 = vpop.f32.mrb[0].mxu0
    %v1493 = vadd.f32 0.0, %v1492
    %v1494 = vpop.f32.mrb[0].mxu0
    %1495 = vmatprep.mubr.bf16.mxu0 %v975
    %1496 = vmatmul.mubr.bf16.gmra.mrb[0].mxu0 %v666
    %v1497 = vpop.f32.mrb[0].mxu0
    %v1498 = vadd.f32 0.0, %v1497
    %v1499 = vpop.f32.mrb[0].mxu0
    %v1500 = vpop.f32.mrb[0].mxu0
    %v1501 = vadd.f32 0.0, %v1500
    %v1502 = vpop.f32.mrb[0].mxu0
    %1503 = vmatprep.mubr.bf16.mxu0 %v978
    %1504 = vmatmul.mubr.bf16.gmra.mrb[0].mxu0 %v668
    %v1505 = vpop.f32.mrb[0].mxu0
    %v1506 = vadd.f32 0.0, %v1505
    %v1507 = vpop.f32.mrb[0].mxu0
    %v1508 = vpop.f32.mrb[0].mxu0
    %v1509 = vadd.f32 0.0, %v1508
    %v1510 = vpop.f32.mrb[0].mxu0
    %1511 = vmatprep.mubr.bf16.mxu0 %v981
    %1512 = vmatmul.mubr.bf16.gmra.mrb[0].mxu0 %v670
    %v1513 = vpop.f32.mrb[0].mxu0
    %v1514 = vadd.f32 0.0, %v1513
    %v1515 = vpop.f32.mrb[0].mxu0
    %v1516 = vpop.f32.mrb[0].mxu0
    %v1517 = vadd.f32 0.0, %v1516
    %v1518 = vpop.f32.mrb[0].mxu0
    %1519 = vmatprep.mubr.bf16.mxu0 %v984
    %1520 = vmatmul.mubr.bf16.gmra.mrb[0].mxu0 %v672
    %v1521 = vpop.f32.mrb[0].mxu0
    %v1522 = vadd.f32 0.0, %v1521
    %v1523 = vpop.f32.mrb[0].mxu0
    %v1524 = vpop.f32.mrb[0].mxu0
    %v1525 = vadd.f32 0.0, %v1524
    %v1526 = vpop.f32.mrb[0].mxu0
    %1527 = vmatprep.mubr.bf16.mxu0 %v987
    %1528 = vmatmul.mubr.bf16.gmra.mrb[0].mxu0 %v674
    %v1529 = vpop.f32.mrb[0].mxu0
    %v1530 = vadd.f32 0.0, %v1529
    %v1531 = vpop.f32.mrb[0].mxu0
    %v1532 = vpop.f32.mrb[0].mxu0
    %v1533 = vadd.f32 0.0, %v1532
    %v1534 = vpop.f32.mrb[0].mxu0
    %1535 = vmatprep.mubr.bf16.mxu0 %v990
    %1536 = vmatmul.mubr.bf16.gmra.mrb[0].mxu0 %v676
    %v1537 = vpop.f32.mrb[0].mxu0
    %v1538 = vadd.f32 0.0, %v1537
    %v1539 = vpop.f32.mrb[0].mxu0
    %v1540 = vpop.f32.mrb[0].mxu0
    %v1541 = vadd.f32 0.0, %v1540
    %v1542 = vpop.f32.mrb[0].mxu0
    %1543 = vdwg.mxu0
    %v1544 = vadd.f32 %v1034, %v1037
    %v1545 = vadd.f32 %v1544, %v1042
    %v1546 = vadd.f32 %v1545, %v1045
    %v1547 = vadd.f32 %v1546, %v1050
    %v1548 = vadd.f32 %v1547, %v1053
    %v1549 = vadd.f32 %v1548, %v1058
    %v1550 = vadd.f32 %v1549, %v1061
    %v1551 = vadd.f32 %v1550, %v1066
    %v1552 = vadd.f32 %v1551, %v1069
    %v1553 = vadd.f32 %v1552, %v1074
    %v1554 = vadd.f32 %v1553, %v1077
    %v1555 = vadd.f32 %v1554, %v1082
    %v1556 = vadd.f32 %v1555, %v1085
    %v1557 = vadd.f32 %v1556, %v1090
    %v1558 = vadd.f32 %v1557, %v1093
    %v1559 = vadd.f32 %v1558, %v1098
    %v1560 = vadd.f32 %v1559, %v1101
    %v1561 = vadd.f32 %v1560, %v1106
    %v1562 = vadd.f32 %v1561, %v1109
    %v1563 = vadd.f32 %v1562, %v1114
    %v1564 = vadd.f32 %v1563, %v1117
    %v1565 = vadd.f32 %v1564, %v1122
    %v1566 = vadd.f32 %v1565, %v1125
    %v1567 = vadd.f32 %v1566, %v1130
    %v1568 = vadd.f32 %v1567, %v1133
    %v1569 = vadd.f32 %v1568, %v1138
    %v1570 = vadd.f32 %v1569, %v1141
    %v1571 = vadd.f32 %v1570, %v1146
    %v1572 = vadd.f32 %v1571, %v1149
    %v1573 = vadd.f32 %v1572, %v1154
    %v1574 = vadd.f32 %v1573, %v1157
    %v1575 = vadd.f32 %v1574, %v1162
    %v1576 = vadd.f32 %v1575, %v1165
    %v1577 = vadd.f32 %v1576, %v1170
    %v1578 = vadd.f32 %v1577, %v1173
    %v1579 = vadd.f32 %v1578, %v1178
    %v1580 = vadd.f32 %v1579, %v1181
    %v1581 = vadd.f32 %v1580, %v1186
    %v1582 = vadd.f32 %v1581, %v1189
    %v1583 = vadd.f32 %v1582, %v1194
    %v1584 = vadd.f32 %v1583, %v1197
    %v1585 = vadd.f32 %v1584, %v1202
    %v1586 = vadd.f32 %v1585, %v1205
    %v1587 = vadd.f32 %v1586, %v1210
    %v1588 = vadd.f32 %v1587, %v1213
    %v1589 = vadd.f32 %v1588, %v1218
    %v1590 = vadd.f32 %v1589, %v1221
    %v1591 = vadd.f32 %v1590, %v1226
    %v1592 = vadd.f32 %v1591, %v1229
    %v1593 = vadd.f32 %v1592, %v1234
    %v1594 = vadd.f32 %v1593, %v1237
    %v1595 = vadd.f32 %v1594, %v1242
    %v1596 = vadd.f32 %v1595, %v1245
    %v1597 = vadd.f32 %v1596, %v1250
    %v1598 = vadd.f32 %v1597, %v1253
    %v1599 = vadd.f32 %v1598, %v1258
    %v1600 = vadd.f32 %v1599, %v1261
    %v1601 = vadd.f32 %v1600, %v1266
    %v1602 = vadd.f32 %v1601, %v1269
    %v1603 = vadd.f32 %v1602, %v1274
    %v1604 = vadd.f32 %v1603, %v1277
    %v1605 = vadd.f32 %v1604, %v1282
    %v1606 = vadd.f32 %v1605, %v1285
    %v1607 = vadd.f32 %v1606, %v1290
    %v1608 = vadd.f32 %v1607, %v1293
    %v1609 = vadd.f32 %v1608, %v1298
    %v1610 = vadd.f32 %v1609, %v1301
    %v1611 = vadd.f32 %v1610, %v1306
    %v1612 = vadd.f32 %v1611, %v1309
    %v1613 = vadd.f32 %v1612, %v1314
    %v1614 = vadd.f32 %v1613, %v1317
    %v1615 = vadd.f32 %v1614, %v1322
    %v1616 = vadd.f32 %v1615, %v1325
    %v1617 = vadd.f32 %v1616, %v1330
    %v1618 = vadd.f32 %v1617, %v1333
    %v1619 = vadd.f32 %v1618, %v1338
    %v1620 = vadd.f32 %v1619, %v1341
    %v1621 = vadd.f32 %v1620, %v1346
    %v1622 = vadd.f32 %v1621, %v1349
    %v1623 = vadd.f32 %v1622, %v1354
    %v1624 = vadd.f32 %v1623, %v1357
    %v1625 = vadd.f32 %v1624, %v1362
    %v1626 = vadd.f32 %v1625, %v1365
    %v1627 = vadd.f32 %v1626, %v1370
    %v1628 = vadd.f32 %v1627, %v1373
    %v1629 = vadd.f32 %v1628, %v1378
    %v1630 = vadd.f32 %v1629, %v1381
    %v1631 = vadd.f32 %v1630, %v1386
    %v1632 = vadd.f32 %v1631, %v1389
    %v1633 = vadd.f32 %v1632, %v1394
    %v1634 = vadd.f32 %v1633, %v1397
    %v1635 = vadd.f32 %v1634, %v1402
    %v1636 = vadd.f32 %v1635, %v1405
    %v1637 = vadd.f32 %v1636, %v1410
    %v1638 = vadd.f32 %v1637, %v1413
    %v1639 = vadd.f32 %v1638, %v1418
    %v1640 = vadd.f32 %v1639, %v1421
    %v1641 = vadd.f32 %v1640, %v1426
    %v1642 = vadd.f32 %v1641, %v1429
    %v1643 = vadd.f32 %v1642, %v1434
    %v1644 = vadd.f32 %v1643, %v1437
    %v1645 = vadd.f32 %v1644, %v1442
    %v1646 = vadd.f32 %v1645, %v1445
    %v1647 = vadd.f32 %v1646, %v1450
    %v1648 = vadd.f32 %v1647, %v1453
    %v1649 = vadd.f32 %v1648, %v1458
    %v1650 = vadd.f32 %v1649, %v1461
    %v1651 = vadd.f32 %v1650, %v1466
    %v1652 = vadd.f32 %v1651, %v1469
    %v1653 = vadd.f32 %v1652, %v1474
    %v1654 = vadd.f32 %v1653, %v1477
    %v1655 = vadd.f32 %v1654, %v1482
    %v1656 = vadd.f32 %v1655, %v1485
    %v1657 = vadd.f32 %v1656, %v1490
    %v1658 = vadd.f32 %v1657, %v1493
    %v1659 = vadd.f32 %v1658, %v1498
    %v1660 = vadd.f32 %v1659, %v1501
    %v1661 = vadd.f32 %v1660, %v1506
    %v1662 = vadd.f32 %v1661, %v1509
    %v1663 = vadd.f32 %v1662, %v1514
    %v1664 = vadd.f32 %v1663, %v1517
    %v1665 = vadd.f32 %v1664, %v1522
    %v1666 = vadd.f32 %v1665, %v1525
    %v1667 = vadd.f32 %v1666, %v1530
    %v1668 = vadd.f32 %v1667, %v1533
    %v1669 = vadd.f32 %v1668, %v1538
    %v1670 = vadd.f32 %v1669, %v1541
    %v1671 = vrot.slane %v1670, 4
    %v1672 = vadd.f32 %v1670, %v1671
    %v1673 = vrot.slane %v1672, 2
    %v1674 = vadd.f32 %v1672, %v1673
    %v1675 = vrot.slane %v1674, 1
    %v1676 = vadd.f32 %v1674, %v1675
    %v1677 = vrcp.pop 1024.0
    %v1678 = vmul.f32 %v1676, %v1677
    %v1679 = vsub.f32 %v1034, %v1678
    %v1680 = vsub.f32 %v1037, %v1678
    %v1681 = vsub.f32 %v1042, %v1678
    %v1682 = vsub.f32 %v1045, %v1678
    %v1683 = vsub.f32 %v1050, %v1678
    %v1684 = vsub.f32 %v1053, %v1678
    %v1685 = vsub.f32 %v1058, %v1678
    %v1686 = vsub.f32 %v1061, %v1678
    %v1687 = vsub.f32 %v1066, %v1678
    %v1688 = vsub.f32 %v1069, %v1678
    %v1689 = vsub.f32 %v1074, %v1678
    %v1690 = vsub.f32 %v1077, %v1678
    %v1691 = vsub.f32 %v1082, %v1678
    %v1692 = vsub.f32 %v1085, %v1678
    %v1693 = vsub.f32 %v1090, %v1678
    %v1694 = vsub.f32 %v1093, %v1678
    %v1695 = vsub.f32 %v1098, %v1678
    %v1696 = vsub.f32 %v1101, %v1678
    %v1697 = vsub.f32 %v1106, %v1678
    %v1698 = vsub.f32 %v1109, %v1678
    %v1699 = vsub.f32 %v1114, %v1678
    %v1700 = vsub.f32 %v1117, %v1678
    %v1701 = vsub.f32 %v1122, %v1678
    %v1702 = vsub.f32 %v1125, %v1678
    %v1703 = vsub.f32 %v1130, %v1678
    %v1704 = vsub.f32 %v1133, %v1678
    %v1705 = vsub.f32 %v1138, %v1678
    %v1706 = vsub.f32 %v1141, %v1678
    %v1707 = vsub.f32 %v1146, %v1678
    %v1708 = vsub.f32 %v1149, %v1678
    %v1709 = vsub.f32 %v1154, %v1678
    %v1710 = vsub.f32 %v1157, %v1678
    %v1711 = vsub.f32 %v1162, %v1678
    %v1712 = vsub.f32 %v1165, %v1678
    %v1713 = vsub.f32 %v1170, %v1678
    %v1714 = vsub.f32 %v1173, %v1678
    %v1715 = vsub.f32 %v1178, %v1678
    %v1716 = vsub.f32 %v1181, %v1678
    %v1717 = vsub.f32 %v1186, %v1678
    %v1718 = vsub.f32 %v1189, %v1678
    %v1719 = vsub.f32 %v1194, %v1678
    %v1720 = vsub.f32 %v1197, %v1678
    %v1721 = vsub.f32 %v1202, %v1678
    %v1722 = vsub.f32 %v1205, %v1678
    %v1723 = vsub.f32 %v1210, %v1678
    %v1724 = vsub.f32 %v1213, %v1678
    %v1725 = vsub.f32 %v1218, %v1678
    %v1726 = vsub.f32 %v1221, %v1678
    %v1727 = vsub.f32 %v1226, %v1678
    %v1728 = vsub.f32 %v1229, %v1678
    %v1729 = vsub.f32 %v1234, %v1678
    %v1730 = vsub.f32 %v1237, %v1678
    %v1731 = vsub.f32 %v1242, %v1678
    %v1732 = vsub.f32 %v1245, %v1678
    %v1733 = vsub.f32 %v1250, %v1678
    %v1734 = vsub.f32 %v1253, %v1678
    %v1735 = vsub.f32 %v1258, %v1678
    %v1736 = vsub.f32 %v1261, %v1678
    %v1737 = vsub.f32 %v1266, %v1678
    %v1738 = vsub.f32 %v1269, %v1678
    %v1739 = vsub.f32 %v1274, %v1678
    %v1740 = vsub.f32 %v1277, %v1678
    %v1741 = vsub.f32 %v1282, %v1678
    %v1742 = vsub.f32 %v1285, %v1678
    %v1743 = vsub.f32 %v1290, %v1678
    %v1744 = vsub.f32 %v1293, %v1678
    %v1745 = vsub.f32 %v1298, %v1678
    %v1746 = vsub.f32 %v1301, %v1678
    %v1747 = vsub.f32 %v1306, %v1678
    %v1748 = vsub.f32 %v1309, %v1678
    %v1749 = vsub.f32 %v1314, %v1678
    %v1750 = vsub.f32 %v1317, %v1678
    %v1751 = vsub.f32 %v1322, %v1678
    %v1752 = vsub.f32 %v1325, %v1678
    %v1753 = vsub.f32 %v1330, %v1678
    %v1754 = vsub.f32 %v1333, %v1678
    %v1755 = vsub.f32 %v1338, %v1678
    %v1756 = vsub.f32 %v1341, %v1678
    %v1757 = vsub.f32 %v1346, %v1678
    %v1758 = vsub.f32 %v1349, %v1678
    %v1759 = vsub.f32 %v1354, %v1678
    %v1760 = vsub.f32 %v1357, %v1678
    %v1761 = vsub.f32 %v1362, %v1678
    %v1762 = vsub.f32 %v1365, %v1678
    %v1763 = vsub.f32 %v1370, %v1678
    %v1764 = vsub.f32 %v1373, %v1678
    %v1765 = vsub.f32 %v1378, %v1678
    %v1766 = vsub.f32 %v1381, %v1678
    %v1767 = vsub.f32 %v1386, %v1678
    %v1768 = vsub.f32 %v1389, %v1678
    %v1769 = vsub.f32 %v1394, %v1678
    %v1770 = vsub.f32 %v1397, %v1678
    %v1771 = vsub.f32 %v1402, %v1678
    %v1772 = vsub.f32 %v1405, %v1678
    %v1773 = vsub.f32 %v1410, %v1678
    %v1774 = vsub.f32 %v1413, %v1678
    %v1775 = vsub.f32 %v1418, %v1678
    %v1776 = vsub.f32 %v1421, %v1678
    %v1777 = vsub.f32 %v1426, %v1678
    %v1778 = vsub.f32 %v1429, %v1678
    %v1779 = vsub.f32 %v1434, %v1678
    %v1780 = vsub.f32 %v1437, %v1678
    %v1781 = vsub.f32 %v1442, %v1678
    %v1782 = vsub.f32 %v1445, %v1678
    %v1783 = vsub.f32 %v1450, %v1678
    %v1784 = vsub.f32 %v1453, %v1678
    %v1785 = vsub.f32 %v1458, %v1678
    %v1786 = vsub.f32 %v1461, %v1678
    %v1787 = vsub.f32 %v1466, %v1678
    %v1788 = vsub.f32 %v1469, %v1678
    %v1789 = vsub.f32 %v1474, %v1678
    %v1790 = vsub.f32 %v1477, %v1678
    %v1791 = vsub.f32 %v1482, %v1678
    %v1792 = vsub.f32 %v1485, %v1678
    %v1793 = vsub.f32 %v1490, %v1678
    %v1794 = vsub.f32 %v1493, %v1678
    %v1795 = vsub.f32 %v1498, %v1678
    %v1796 = vsub.f32 %v1501, %v1678
    %v1797 = vsub.f32 %v1506, %v1678
    %v1798 = vsub.f32 %v1509, %v1678
    %v1799 = vsub.f32 %v1514, %v1678
    %v1800 = vsub.f32 %v1517, %v1678
    %v1801 = vsub.f32 %v1522, %v1678
    %v1802 = vsub.f32 %v1525, %v1678
    %v1803 = vsub.f32 %v1530, %v1678
    %v1804 = vsub.f32 %v1533, %v1678
    %v1805 = vsub.f32 %v1538, %v1678
    %v1806 = vsub.f32 %v1541, %v1678
    %v1807 = vmul.f32 %v1679, %v1679
    %v1808 = vmul.f32 %v1680, %v1680
    %v1809 = vmul.f32 %v1681, %v1681
    %v1810 = vmul.f32 %v1682, %v1682
    %v1811 = vmul.f32 %v1683, %v1683
    %v1812 = vmul.f32 %v1684, %v1684
    %v1813 = vmul.f32 %v1685, %v1685
    %v1814 = vmul.f32 %v1686, %v1686
    %v1815 = vmul.f32 %v1687, %v1687
    %v1816 = vmul.f32 %v1688, %v1688
    %v1817 = vmul.f32 %v1689, %v1689
    %v1818 = vmul.f32 %v1690, %v1690
    %v1819 = vmul.f32 %v1691, %v1691
    %v1820 = vmul.f32 %v1692, %v1692
    %v1821 = vmul.f32 %v1693, %v1693
    %v1822 = vmul.f32 %v1694, %v1694
    %v1823 = vmul.f32 %v1695, %v1695
    %v1824 = vmul.f32 %v1696, %v1696
    %v1825 = vmul.f32 %v1697, %v1697
    %v1826 = vmul.f32 %v1698, %v1698
    %v1827 = vmul.f32 %v1699, %v1699
    %v1828 = vmul.f32 %v1700, %v1700
    %v1829 = vmul.f32 %v1701, %v1701
    %v1830 = vmul.f32 %v1702, %v1702
    %v1831 = vmul.f32 %v1703, %v1703
    %v1832 = vmul.f32 %v1704, %v1704
    %v1833 = vmul.f32 %v1705, %v1705
    %v1834 = vmul.f32 %v1706, %v1706
    %v1835 = vmul.f32 %v1707, %v1707
    %v1836 = vmul.f32 %v1708, %v1708
    %v1837 = vmul.f32 %v1709, %v1709
    %v1838 = vmul.f32 %v1710, %v1710
    %v1839 = vmul.f32 %v1711, %v1711
    %v1840 = vmul.f32 %v1712, %v1712
    %v1841 = vmul.f32 %v1713, %v1713
    %v1842 = vmul.f32 %v1714, %v1714
    %v1843 = vmul.f32 %v1715, %v1715
    %v1844 = vmul.f32 %v1716, %v1716
    %v1845 = vmul.f32 %v1717, %v1717
    %v1846 = vmul.f32 %v1718, %v1718
    %v1847 = vmul.f32 %v1719, %v1719
    %v1848 = vmul.f32 %v1720, %v1720
    %v1849 = vmul.f32 %v1721, %v1721
    %v1850 = vmul.f32 %v1722, %v1722
    %v1851 = vmul.f32 %v1723, %v1723
    %v1852 = vmul.f32 %v1724, %v1724
    %v1853 = vmul.f32 %v1725, %v1725
    %v1854 = vmul.f32 %v1726, %v1726
    %v1855 = vmul.f32 %v1727, %v1727
    %v1856 = vmul.f32 %v1728, %v1728
    %v1857 = vmul.f32 %v1729, %v1729
    %v1858 = vmul.f32 %v1730, %v1730
    %v1859 = vmul.f32 %v1731, %v1731
    %v1860 = vmul.f32 %v1732, %v1732
    %v1861 = vmul.f32 %v1733, %v1733
    %v1862 = vmul.f32 %v1734, %v1734
    %v1863 = vmul.f32 %v1735, %v1735
    %v1864 = vmul.f32 %v1736, %v1736
    %v1865 = vmul.f32 %v1737, %v1737
    %v1866 = vmul.f32 %v1738, %v1738
    %v1867 = vmul.f32 %v1739, %v1739
    %v1868 = vmul.f32 %v1740, %v1740
    %v1869 = vmul.f32 %v1741, %v1741
    %v1870 = vmul.f32 %v1742, %v1742
    %v1871 = vmul.f32 %v1743, %v1743
    %v1872 = vmul.f32 %v1744, %v1744
    %v1873 = vmul.f32 %v1745, %v1745
    %v1874 = vmul.f32 %v1746, %v1746
    %v1875 = vmul.f32 %v1747, %v1747
    %v1876 = vmul.f32 %v1748, %v1748
    %v1877 = vmul.f32 %v1749, %v1749
    %v1878 = vmul.f32 %v1750, %v1750
    %v1879 = vmul.f32 %v1751, %v1751
    %v1880 = vmul.f32 %v1752, %v1752
    %v1881 = vmul.f32 %v1753, %v1753
    %v1882 = vmul.f32 %v1754, %v1754
    %v1883 = vmul.f32 %v1755, %v1755
    %v1884 = vmul.f32 %v1756, %v1756
    %v1885 = vmul.f32 %v1757, %v1757
    %v1886 = vmul.f32 %v1758, %v1758
    %v1887 = vmul.f32 %v1759, %v1759
    %v1888 = vmul.f32 %v1760, %v1760
    %v1889 = vmul.f32 %v1761, %v1761
    %v1890 = vmul.f32 %v1762, %v1762
    %v1891 = vmul.f32 %v1763, %v1763
    %v1892 = vmul.f32 %v1764, %v1764
    %v1893 = vmul.f32 %v1765, %v1765
    %v1894 = vmul.f32 %v1766, %v1766
    %v1895 = vmul.f32 %v1767, %v1767
    %v1896 = vmul.f32 %v1768, %v1768
    %v1897 = vmul.f32 %v1769, %v1769
    %v1898 = vmul.f32 %v1770, %v1770
    %v1899 = vmul.f32 %v1771, %v1771
    %v1900 = vmul.f32 %v1772, %v1772
    %v1901 = vmul.f32 %v1773, %v1773
    %v1902 = vmul.f32 %v1774, %v1774
    %v1903 = vmul.f32 %v1775, %v1775
    %v1904 = vmul.f32 %v1776, %v1776
    %v1905 = vmul.f32 %v1777, %v1777
    %v1906 = vmul.f32 %v1778, %v1778
    %v1907 = vmul.f32 %v1779, %v1779
    %v1908 = vmul.f32 %v1780, %v1780
    %v1909 = vmul.f32 %v1781, %v1781
    %v1910 = vmul.f32 %v1782, %v1782
    %v1911 = vmul.f32 %v1783, %v1783
    %v1912 = vmul.f32 %v1784, %v1784
    %v1913 = vmul.f32 %v1785, %v1785
    %v1914 = vmul.f32 %v1786, %v1786
    %v1915 = vmul.f32 %v1787, %v1787
    %v1916 = vmul.f32 %v1788, %v1788
    %v1917 = vmul.f32 %v1789, %v1789
    %v1918 = vmul.f32 %v1790, %v1790
    %v1919 = vmul.f32 %v1791, %v1791
    %v1920 = vmul.f32 %v1792, %v1792
    %v1921 = vmul.f32 %v1793, %v1793
    %v1922 = vmul.f32 %v1794, %v1794
    %v1923 = vmul.f32 %v1795, %v1795
    %v1924 = vmul.f32 %v1796, %v1796
    %v1925 = vmul.f32 %v1797, %v1797
    %v1926 = vmul.f32 %v1798, %v1798
    %v1927 = vmul.f32 %v1799, %v1799
    %v1928 = vmul.f32 %v1800, %v1800
    %v1929 = vmul.f32 %v1801, %v1801
    %v1930 = vmul.f32 %v1802, %v1802
    %v1931 = vmul.f32 %v1803, %v1803
    %v1932 = vmul.f32 %v1804, %v1804
    %v1933 = vmul.f32 %v1805, %v1805
    %v1934 = vmul.f32 %v1806, %v1806
    %v1935 = vadd.f32 %v1807, %v1808
    %v1936 = vadd.f32 %v1935, %v1809
    %v1937 = vadd.f32 %v1936, %v1810
    %v1938 = vadd.f32 %v1937, %v1811
    %v1939 = vadd.f32 %v1938, %v1812
    %v1940 = vadd.f32 %v1939, %v1813
    %v1941 = vadd.f32 %v1940, %v1814
    %v1942 = vadd.f32 %v1941, %v1815
    %v1943 = vadd.f32 %v1942, %v1816
    %v1944 = vadd.f32 %v1943, %v1817
    %v1945 = vadd.f32 %v1944, %v1818
    %v1946 = vadd.f32 %v1945, %v1819
    %v1947 = vadd.f32 %v1946, %v1820
    %v1948 = vadd.f32 %v1947, %v1821
    %v1949 = vadd.f32 %v1948, %v1822
    %v1950 = vadd.f32 %v1949, %v1823
    %v1951 = vadd.f32 %v1950, %v1824
    %v1952 = vadd.f32 %v1951, %v1825
    %v1953 = vadd.f32 %v1952, %v1826
    %v1954 = vadd.f32 %v1953, %v1827
    %v1955 = vadd.f32 %v1954, %v1828
    %v1956 = vadd.f32 %v1955, %v1829
    %v1957 = vadd.f32 %v1956, %v1830
    %v1958 = vadd.f32 %v1957, %v1831
    %v1959 = vadd.f32 %v1958, %v1832
    %v1960 = vadd.f32 %v1959, %v1833
    %v1961 = vadd.f32 %v1960, %v1834
    %v1962 = vadd.f32 %v1961, %v1835
    %v1963 = vadd.f32 %v1962, %v1836
    %v1964 = vadd.f32 %v1963, %v1837
    %v1965 = vadd.f32 %v1964, %v1838
    %v1966 = vadd.f32 %v1965, %v1839
    %v1967 = vadd.f32 %v1966, %v1840
    %v1968 = vadd.f32 %v1967, %v1841
    %v1969 = vadd.f32 %v1968, %v1842
    %v1970 = vadd.f32 %v1969, %v1843
    %v1971 = vadd.f32 %v1970, %v1844
    %v1972 = vadd.f32 %v1971, %v1845
    %v1973 = vadd.f32 %v1972, %v1846
    %v1974 = vadd.f32 %v1973, %v1847
    %v1975 = vadd.f32 %v1974, %v1848
    %v1976 = vadd.f32 %v1975, %v1849
    %v1977 = vadd.f32 %v1976, %v1850
    %v1978 = vadd.f32 %v1977, %v1851
    %v1979 = vadd.f32 %v1978, %v1852
    %v1980 = vadd.f32 %v1979, %v1853
    %v1981 = vadd.f32 %v1980, %v1854
    %v1982 = vadd.f32 %v1981, %v1855
    %v1983 = vadd.f32 %v1982, %v1856
    %v1984 = vadd.f32 %v1983, %v1857
    %v1985 = vadd.f32 %v1984, %v1858
    %v1986 = vadd.f32 %v1985, %v1859
    %v1987 = vadd.f32 %v1986, %v1860
    %v1988 = vadd.f32 %v1987, %v1861
    %v1989 = vadd.f32 %v1988, %v1862
    %v1990 = vadd.f32 %v1989, %v1863
    %v1991 = vadd.f32 %v1990, %v1864
    %v1992 = vadd.f32 %v1991, %v1865
    %v1993 = vadd.f32 %v1992, %v1866
    %v1994 = vadd.f32 %v1993, %v1867
    %v1995 = vadd.f32 %v1994, %v1868
    %v1996 = vadd.f32 %v1995, %v1869
    %v1997 = vadd.f32 %v1996, %v1870
    %v1998 = vadd.f32 %v1997, %v1871
    %v1999 = vadd.f32 %v1998, %v1872
    %v2000 = vadd.f32 %v1999, %v1873
    %v2001 = vadd.f32 %v2000, %v1874
    %v2002 = vadd.f32 %v2001, %v1875
    %v2003 = vadd.f32 %v2002, %v1876
    %v2004 = vadd.f32 %v2003, %v1877
    %v2005 = vadd.f32 %v2004, %v1878
    %v2006 = vadd.f32 %v2005, %v1879
    %v2007 = vadd.f32 %v2006, %v1880
    %v2008 = vadd.f32 %v2007, %v1881
    %v2009 = vadd.f32 %v2008, %v1882
    %v2010 = vadd.f32 %v2009, %v1883
    %v2011 = vadd.f32 %v2010, %v1884
    %v2012 = vadd.f32 %v2011, %v1885
    %v2013 = vadd.f32 %v2012, %v1886
    %v2014 = vadd.f32 %v2013, %v1887
    %v2015 = vadd.f32 %v2014, %v1888
    %v2016 = vadd.f32 %v2015, %v1889
    %v2017 = vadd.f32 %v2016, %v1890
    %v2018 = vadd.f32 %v2017, %v1891
    %v2019 = vadd.f32 %v2018, %v1892
    %v2020 = vadd.f32 %v2019, %v1893
    %v2021 = vadd.f32 %v2020, %v1894
    %v2022 = vadd.f32 %v2021, %v1895
    %v2023 = vadd.f32 %v2022, %v1896
    %v2024 = vadd.f32 %v2023, %v1897
    %v2025 = vadd.f32 %v2024, %v1898
    %v2026 = vadd.f32 %v2025, %v1899
    %v2027 = vadd.f32 %v2026, %v1900
    %v2028 = vadd.f32 %v2027, %v1901
    %v2029 = vadd.f32 %v2028, %v1902
    %v2030 = vadd.f32 %v2029, %v1903
    %v2031 = vadd.f32 %v2030, %v1904
    %v2032 = vadd.f32 %v2031, %v1905
    %v2033 = vadd.f32 %v2032, %v1906
    %v2034 = vadd.f32 %v2033, %v1907
    %v2035 = vadd.f32 %v2034, %v1908
    %v2036 = vadd.f32 %v2035, %v1909
    %v2037 = vadd.f32 %v2036, %v1910
    %v2038 = vadd.f32 %v2037, %v1911
    %v2039 = vadd.f32 %v2038, %v1912
    %v2040 = vadd.f32 %v2039, %v1913
    %v2041 = vadd.f32 %v2040, %v1914
    %v2042 = vadd.f32 %v2041, %v1915
    %v2043 = vadd.f32 %v2042, %v1916
    %v2044 = vadd.f32 %v2043, %v1917
    %v2045 = vadd.f32 %v2044, %v1918
    %v2046 = vadd.f32 %v2045, %v1919
    %v2047 = vadd.f32 %v2046, %v1920
    %v2048 = vadd.f32 %v2047, %v1921
    %v2049 = vadd.f32 %v2048, %v1922
    %v2050 = vadd.f32 %v2049, %v1923
    %v2051 = vadd.f32 %v2050, %v1924
    %v2052 = vadd.f32 %v2051, %v1925
    %v2053 = vadd.f32 %v2052, %v1926
    %v2054 = vadd.f32 %v2053, %v1927
    %v2055 = vadd.f32 %v2054, %v1928
    %v2056 = vadd.f32 %v2055, %v1929
    %v2057 = vadd.f32 %v2056, %v1930
    %v2058 = vadd.f32 %v2057, %v1931
    %v2059 = vadd.f32 %v2058, %v1932
    %v2060 = vadd.f32 %v2059, %v1933
    %v2061 = vadd.f32 %v2060, %v1934
    %v2062 = vrot.slane %v2061, 4
    %v2063 = vadd.f32 %v2061, %v2062
    %v2064 = vrot.slane %v2063, 2
    %v2065 = vadd.f32 %v2063, %v2064
    %v2066 = vrot.slane %v2065, 1
    %v2067 = vadd.f32 %v2065, %v2066
    %v2068 = vmul.f32 %v2067, %v1677
    %v2069 = vadd.f32 %v2068, 1e-05
    %v2070 = vrsqrt.pop %v2069
    %v2071 = vmul.f32 %v1679, %v2070
    %v2072 = vmul.f32 %v1680, %v2070
    %v2073 = vmul.f32 %v1681, %v2070
    %v2074 = vmul.f32 %v1682, %v2070
    %v2075 = vmul.f32 %v1683, %v2070
    %v2076 = vmul.f32 %v1684, %v2070
    %v2077 = vmul.f32 %v1685, %v2070
    %v2078 = vmul.f32 %v1686, %v2070
    %v2079 = vmul.f32 %v1687, %v2070
    %v2080 = vmul.f32 %v1688, %v2070
    %v2081 = vmul.f32 %v1689, %v2070
    %v2082 = vmul.f32 %v1690, %v2070
    %v2083 = vmul.f32 %v1691, %v2070
    %v2084 = vmul.f32 %v1692, %v2070
    %v2085 = vmul.f32 %v1693, %v2070
    %v2086 = vmul.f32 %v1694, %v2070
    %v2087 = vmul.f32 %v1695, %v2070
    %v2088 = vmul.f32 %v1696, %v2070
    %v2089 = vmul.f32 %v1697, %v2070
    %v2090 = vmul.f32 %v1698, %v2070
    %v2091 = vmul.f32 %v1699, %v2070
    %v2092 = vmul.f32 %v1700, %v2070
    %v2093 = vmul.f32 %v1701, %v2070
    %v2094 = vmul.f32 %v1702, %v2070
    %v2095 = vmul.f32 %v1703, %v2070
    %v2096 = vmul.f32 %v1704, %v2070
    %v2097 = vmul.f32 %v1705, %v2070
    %v2098 = vmul.f32 %v1706, %v2070
    %v2099 = vmul.f32 %v1707, %v2070
    %v2100 = vmul.f32 %v1708, %v2070
    %v2101 = vmul.f32 %v1709, %v2070
    %v2102 = vmul.f32 %v1710, %v2070
    %v2103 = vmul.f32 %v1711, %v2070
    %v2104 = vmul.f32 %v1712, %v2070
    %v2105 = vmul.f32 %v1713, %v2070
    %v2106 = vmul.f32 %v1714, %v2070
    %v2107 = vmul.f32 %v1715, %v2070
    %v2108 = vmul.f32 %v1716, %v2070
    %v2109 = vmul.f32 %v1717, %v2070
    %v2110 = vmul.f32 %v1718, %v2070
    %v2111 = vmul.f32 %v1719, %v2070
    %v2112 = vmul.f32 %v1720, %v2070
    %v2113 = vmul.f32 %v1721, %v2070
    %v2114 = vmul.f32 %v1722, %v2070
    %v2115 = vmul.f32 %v1723, %v2070
    %v2116 = vmul.f32 %v1724, %v2070
    %v2117 = vmul.f32 %v1725, %v2070
    %v2118 = vmul.f32 %v1726, %v2070
    %v2119 = vmul.f32 %v1727, %v2070
    %v2120 = vmul.f32 %v1728, %v2070
    %v2121 = vmul.f32 %v1729, %v2070
    %v2122 = vmul.f32 %v1730, %v2070
    %v2123 = vmul.f32 %v1731, %v2070
    %v2124 = vmul.f32 %v1732, %v2070
    %v2125 = vmul.f32 %v1733, %v2070
    %v2126 = vmul.f32 %v1734, %v2070
    %v2127 = vmul.f32 %v1735, %v2070
    %v2128 = vmul.f32 %v1736, %v2070
    %v2129 = vmul.f32 %v1737, %v2070
    %v2130 = vmul.f32 %v1738, %v2070
    %v2131 = vmul.f32 %v1739, %v2070
    %v2132 = vmul.f32 %v1740, %v2070
    %v2133 = vmul.f32 %v1741, %v2070
    %v2134 = vmul.f32 %v1742, %v2070
    %v2135 = vmul.f32 %v1743, %v2070
    %v2136 = vmul.f32 %v1744, %v2070
    %v2137 = vmul.f32 %v1745, %v2070
    %v2138 = vmul.f32 %v1746, %v2070
    %v2139 = vmul.f32 %v1747, %v2070
    %v2140 = vmul.f32 %v1748, %v2070
    %v2141 = vmul.f32 %v1749, %v2070
    %v2142 = vmul.f32 %v1750, %v2070
    %v2143 = vmul.f32 %v1751, %v2070
    %v2144 = vmul.f32 %v1752, %v2070
    %v2145 = vmul.f32 %v1753, %v2070
    %v2146 = vmul.f32 %v1754, %v2070
    %v2147 = vmul.f32 %v1755, %v2070
    %v2148 = vmul.f32 %v1756, %v2070
    %v2149 = vmul.f32 %v1757, %v2070
    %v2150 = vmul.f32 %v1758, %v2070
    %v2151 = vmul.f32 %v1759, %v2070
    %v2152 = vmul.f32 %v1760, %v2070
    %v2153 = vmul.f32 %v1761, %v2070
    %v2154 = vmul.f32 %v1762, %v2070
    %v2155 = vmul.f32 %v1763, %v2070
    %v2156 = vmul.f32 %v1764, %v2070
    %v2157 = vmul.f32 %v1765, %v2070
    %v2158 = vmul.f32 %v1766, %v2070
    %v2159 = vmul.f32 %v1767, %v2070
    %v2160 = vmul.f32 %v1768, %v2070
    %v2161 = vmul.f32 %v1769, %v2070
    %v2162 = vmul.f32 %v1770, %v2070
    %v2163 = vmul.f32 %v1771, %v2070
    %v2164 = vmul.f32 %v1772, %v2070
    %v2165 = vmul.f32 %v1773, %v2070
    %v2166 = vmul.f32 %v1774, %v2070
    %v2167 = vmul.f32 %v1775, %v2070
    %v2168 = vmul.f32 %v1776, %v2070
    %v2169 = vmul.f32 %v1777, %v2070
    %v2170 = vmul.f32 %v1778, %v2070
    %v2171 = vmul.f32 %v1779, %v2070
    %v2172 = vmul.f32 %v1780, %v2070
    %v2173 = vmul.f32 %v1781, %v2070
    %v2174 = vmul.f32 %v1782, %v2070
    %v2175 = vmul.f32 %v1783, %v2070
    %v2176 = vmul.f32 %v1784, %v2070
    %v2177 = vmul.f32 %v1785, %v2070
    %v2178 = vmul.f32 %v1786, %v2070
    %v2179 = vmul.f32 %v1787, %v2070
    %v2180 = vmul.f32 %v1788, %v2070
    %v2181 = vmul.f32 %v1789, %v2070
    %v2182 = vmul.f32 %v1790, %v2070
    %v2183 = vmul.f32 %v1791, %v2070
    %v2184 = vmul.f32 %v1792, %v2070
    %v2185 = vmul.f32 %v1793, %v2070
    %v2186 = vmul.f32 %v1794, %v2070
    %v2187 = vmul.f32 %v1795, %v2070
    %v2188 = vmul.f32 %v1796, %v2070
    %v2189 = vmul.f32 %v1797, %v2070
    %v2190 = vmul.f32 %v1798, %v2070
    %v2191 = vmul.f32 %v1799, %v2070
    %v2192 = vmul.f32 %v1800, %v2070
    %v2193 = vmul.f32 %v1801, %v2070
    %v2194 = vmul.f32 %v1802, %v2070
    %v2195 = vmul.f32 %v1803, %v2070
    %v2196 = vmul.f32 %v1804, %v2070
    %v2197 = vmul.f32 %v1805, %v2070
    %v2198 = vmul.f32 %v1806, %v2070
    %v2199 = vld [vmem:[%s2] sm:$0x1]
    %v2201 = vlaneseq
    %v2202 = vshrl.u32 %v2201, 7
    %v2203 = vsub.s32 0, %v2202
    %v2204 = vrot.slane %v2199, %v2203
    %v2206 = vmul.f32 %v2071, %v2204
    %v2207 = vmul.f32 %v2072, %v2204
    %v2208 = vmul.f32 %v2073, %v2204
    %v2209 = vmul.f32 %v2074, %v2204
    %v2210 = vmul.f32 %v2075, %v2204
    %v2211 = vmul.f32 %v2076, %v2204
    %v2212 = vmul.f32 %v2077, %v2204
    %v2213 = vmul.f32 %v2078, %v2204
    %v2214 = vmul.f32 %v2079, %v2204
    %v2215 = vmul.f32 %v2080, %v2204
    %v2216 = vmul.f32 %v2081, %v2204
    %v2217 = vmul.f32 %v2082, %v2204
    %v2218 = vmul.f32 %v2083, %v2204
    %v2219 = vmul.f32 %v2084, %v2204
    %v2220 = vmul.f32 %v2085, %v2204
    %v2221 = vmul.f32 %v2086, %v2204
    %v2222 = vmul.f32 %v2087, %v2204
    %v2223 = vmul.f32 %v2088, %v2204
    %v2224 = vmul.f32 %v2089, %v2204
    %v2225 = vmul.f32 %v2090, %v2204
    %v2226 = vmul.f32 %v2091, %v2204
    %v2227 = vmul.f32 %v2092, %v2204
    %v2228 = vmul.f32 %v2093, %v2204
    %v2229 = vmul.f32 %v2094, %v2204
    %v2230 = vmul.f32 %v2095, %v2204
    %v2231 = vmul.f32 %v2096, %v2204
    %v2232 = vmul.f32 %v2097, %v2204
    %v2233 = vmul.f32 %v2098, %v2204
    %v2234 = vmul.f32 %v2099, %v2204
    %v2235 = vmul.f32 %v2100, %v2204
    %v2236 = vmul.f32 %v2101, %v2204
    %v2237 = vmul.f32 %v2102, %v2204
    %v2238 = vmul.f32 %v2103, %v2204
    %v2239 = vmul.f32 %v2104, %v2204
    %v2240 = vmul.f32 %v2105, %v2204
    %v2241 = vmul.f32 %v2106, %v2204
    %v2242 = vmul.f32 %v2107, %v2204
    %v2243 = vmul.f32 %v2108, %v2204
    %v2244 = vmul.f32 %v2109, %v2204
    %v2245 = vmul.f32 %v2110, %v2204
    %v2246 = vmul.f32 %v2111, %v2204
    %v2247 = vmul.f32 %v2112, %v2204
    %v2248 = vmul.f32 %v2113, %v2204
    %v2249 = vmul.f32 %v2114, %v2204
    %v2250 = vmul.f32 %v2115, %v2204
    %v2251 = vmul.f32 %v2116, %v2204
    %v2252 = vmul.f32 %v2117, %v2204
    %v2253 = vmul.f32 %v2118, %v2204
    %v2254 = vmul.f32 %v2119, %v2204
    %v2255 = vmul.f32 %v2120, %v2204
    %v2256 = vmul.f32 %v2121, %v2204
    %v2257 = vmul.f32 %v2122, %v2204
    %v2258 = vmul.f32 %v2123, %v2204
    %v2259 = vmul.f32 %v2124, %v2204
    %v2260 = vmul.f32 %v2125, %v2204
    %v2261 = vmul.f32 %v2126, %v2204
    %v2262 = vmul.f32 %v2127, %v2204
    %v2263 = vmul.f32 %v2128, %v2204
    %v2264 = vmul.f32 %v2129, %v2204
    %v2265 = vmul.f32 %v2130, %v2204
    %v2266 = vmul.f32 %v2131, %v2204
    %v2267 = vmul.f32 %v2132, %v2204
    %v2268 = vmul.f32 %v2133, %v2204
    %v2269 = vmul.f32 %v2134, %v2204
    %v2270 = vmul.f32 %v2135, %v2204
    %v2271 = vmul.f32 %v2136, %v2204
    %v2272 = vmul.f32 %v2137, %v2204
    %v2273 = vmul.f32 %v2138, %v2204
    %v2274 = vmul.f32 %v2139, %v2204
    %v2275 = vmul.f32 %v2140, %v2204
    %v2276 = vmul.f32 %v2141, %v2204
    %v2277 = vmul.f32 %v2142, %v2204
    %v2278 = vmul.f32 %v2143, %v2204
    %v2279 = vmul.f32 %v2144, %v2204
    %v2280 = vmul.f32 %v2145, %v2204
    %v2281 = vmul.f32 %v2146, %v2204
    %v2282 = vmul.f32 %v2147, %v2204
    %v2283 = vmul.f32 %v2148, %v2204
    %v2284 = vmul.f32 %v2149, %v2204
    %v2285 = vmul.f32 %v2150, %v2204
    %v2286 = vmul.f32 %v2151, %v2204
    %v2287 = vmul.f32 %v2152, %v2204
    %v2288 = vmul.f32 %v2153, %v2204
    %v2289 = vmul.f32 %v2154, %v2204
    %v2290 = vmul.f32 %v2155, %v2204
    %v2291 = vmul.f32 %v2156, %v2204
    %v2292 = vmul.f32 %v2157, %v2204
    %v2293 = vmul.f32 %v2158, %v2204
    %v2294 = vmul.f32 %v2159, %v2204
    %v2295 = vmul.f32 %v2160, %v2204
    %v2296 = vmul.f32 %v2161, %v2204
    %v2297 = vmul.f32 %v2162, %v2204
    %v2298 = vmul.f32 %v2163, %v2204
    %v2299 = vmul.f32 %v2164, %v2204
    %v2300 = vmul.f32 %v2165, %v2204
    %v2301 = vmul.f32 %v2166, %v2204
    %v2302 = vmul.f32 %v2167, %v2204
    %v2303 = vmul.f32 %v2168, %v2204
    %v2304 = vmul.f32 %v2169, %v2204
    %v2305 = vmul.f32 %v2170, %v2204
    %v2306 = vmul.f32 %v2171, %v2204
    %v2307 = vmul.f32 %v2172, %v2204
    %v2308 = vmul.f32 %v2173, %v2204
    %v2309 = vmul.f32 %v2174, %v2204
    %v2310 = vmul.f32 %v2175, %v2204
    %v2311 = vmul.f32 %v2176, %v2204
    %v2312 = vmul.f32 %v2177, %v2204
    %v2313 = vmul.f32 %v2178, %v2204
    %v2314 = vmul.f32 %v2179, %v2204
    %v2315 = vmul.f32 %v2180, %v2204
    %v2316 = vmul.f32 %v2181, %v2204
    %v2317 = vmul.f32 %v2182, %v2204
    %v2318 = vmul.f32 %v2183, %v2204
    %v2319 = vmul.f32 %v2184, %v2204
    %v2320 = vmul.f32 %v2185, %v2204
    %v2321 = vmul.f32 %v2186, %v2204
    %v2322 = vmul.f32 %v2187, %v2204
    %v2323 = vmul.f32 %v2188, %v2204
    %v2324 = vmul.f32 %v2189, %v2204
    %v2325 = vmul.f32 %v2190, %v2204
    %v2326 = vmul.f32 %v2191, %v2204
    %v2327 = vmul.f32 %v2192, %v2204
    %v2328 = vmul.f32 %v2193, %v2204
    %v2329 = vmul.f32 %v2194, %v2204
    %v2330 = vmul.f32 %v2195, %v2204
    %v2331 = vmul.f32 %v2196, %v2204
    %v2332 = vmul.f32 %v2197, %v2204
    %v2333 = vmul.f32 %v2198, %v2204
    %v2334 = vld [vmem:[%s3] sm:$0x1]
    %v2336 = vlaneseq
    %v2337 = vshrl.u32 %v2336, 7
    %v2338 = vsub.s32 0, %v2337
    %v2339 = vrot.slane %v2334, %v2338
    %v2341 = vadd.f32 %v2206, %v2339
    %v2342 = vadd.f32 %v2207, %v2339
    %v2343 = vadd.f32 %v2208, %v2339
    %v2344 = vadd.f32 %v2209, %v2339
    %v2345 = vadd.f32 %v2210, %v2339
    %v2346 = vadd.f32 %v2211, %v2339
    %v2347 = vadd.f32 %v2212, %v2339
    %v2348 = vadd.f32 %v2213, %v2339
    %v2349 = vadd.f32 %v2214, %v2339
    %v2350 = vadd.f32 %v2215, %v2339
    %v2351 = vadd.f32 %v2216, %v2339
    %v2352 = vadd.f32 %v2217, %v2339
    %v2353 = vadd.f32 %v2218, %v2339
    %v2354 = vadd.f32 %v2219, %v2339
    %v2355 = vadd.f32 %v2220, %v2339
    %v2356 = vadd.f32 %v2221, %v2339
    %v2357 = vadd.f32 %v2222, %v2339
    %v2358 = vadd.f32 %v2223, %v2339
    %v2359 = vadd.f32 %v2224, %v2339
    %v2360 = vadd.f32 %v2225, %v2339
    %v2361 = vadd.f32 %v2226, %v2339
    %v2362 = vadd.f32 %v2227, %v2339
    %v2363 = vadd.f32 %v2228, %v2339
    %v2364 = vadd.f32 %v2229, %v2339
    %v2365 = vadd.f32 %v2230, %v2339
    %v2366 = vadd.f32 %v2231, %v2339
    %v2367 = vadd.f32 %v2232, %v2339
    %v2368 = vadd.f32 %v2233, %v2339
    %v2369 = vadd.f32 %v2234, %v2339
    %v2370 = vadd.f32 %v2235, %v2339
    %v2371 = vadd.f32 %v2236, %v2339
    %v2372 = vadd.f32 %v2237, %v2339
    %v2373 = vadd.f32 %v2238, %v2339
    %v2374 = vadd.f32 %v2239, %v2339
    %v2375 = vadd.f32 %v2240, %v2339
    %v2376 = vadd.f32 %v2241, %v2339
    %v2377 = vadd.f32 %v2242, %v2339
    %v2378 = vadd.f32 %v2243, %v2339
    %v2379 = vadd.f32 %v2244, %v2339
    %v2380 = vadd.f32 %v2245, %v2339
    %v2381 = vadd.f32 %v2246, %v2339
    %v2382 = vadd.f32 %v2247, %v2339
    %v2383 = vadd.f32 %v2248, %v2339
    %v2384 = vadd.f32 %v2249, %v2339
    %v2385 = vadd.f32 %v2250, %v2339
    %v2386 = vadd.f32 %v2251, %v2339
    %v2387 = vadd.f32 %v2252, %v2339
    %v2388 = vadd.f32 %v2253, %v2339
    %v2389 = vadd.f32 %v2254, %v2339
    %v2390 = vadd.f32 %v2255, %v2339
    %v2391 = vadd.f32 %v2256, %v2339
    %v2392 = vadd.f32 %v2257, %v2339
    %v2393 = vadd.f32 %v2258, %v2339
    %v2394 = vadd.f32 %v2259, %v2339
    %v2395 = vadd.f32 %v2260, %v2339
    %v2396 = vadd.f32 %v2261, %v2339
    %v2397 = vadd.f32 %v2262, %v2339
    %v2398 = vadd.f32 %v2263, %v2339
    %v2399 = vadd.f32 %v2264, %v2339
    %v2400 = vadd.f32 %v2265, %v2339
    %v2401 = vadd.f32 %v2266, %v2339
    %v2402 = vadd.f32 %v2267, %v2339
    %v2403 = vadd.f32 %v2268, %v2339
    %v2404 = vadd.f32 %v2269, %v2339
    %v2405 = vadd.f32 %v2270, %v2339
    %v2406 = vadd.f32 %v2271, %v2339
    %v2407 = vadd.f32 %v2272, %v2339
    %v2408 = vadd.f32 %v2273, %v2339
    %v2409 = vadd.f32 %v2274, %v2339
    %v2410 = vadd.f32 %v2275, %v2339
    %v2411 = vadd.f32 %v2276, %v2339
    %v2412 = vadd.f32 %v2277, %v2339
    %v2413 = vadd.f32 %v2278, %v2339
    %v2414 = vadd.f32 %v2279, %v2339
    %v2415 = vadd.f32 %v2280, %v2339
    %v2416 = vadd.f32 %v2281, %v2339
    %v2417 = vadd.f32 %v2282, %v2339
    %v2418 = vadd.f32 %v2283, %v2339
    %v2419 = vadd.f32 %v2284, %v2339
    %v2420 = vadd.f32 %v2285, %v2339
    %v2421 = vadd.f32 %v2286, %v2339
    %v2422 = vadd.f32 %v2287, %v2339
    %v2423 = vadd.f32 %v2288, %v2339
    %v2424 = vadd.f32 %v2289, %v2339
    %v2425 = vadd.f32 %v2290, %v2339
    %v2426 = vadd.f32 %v2291, %v2339
    %v2427 = vadd.f32 %v2292, %v2339
    %v2428 = vadd.f32 %v2293, %v2339
    %v2429 = vadd.f32 %v2294, %v2339
    %v2430 = vadd.f32 %v2295, %v2339
    %v2431 = vadd.f32 %v2296, %v2339
    %v2432 = vadd.f32 %v2297, %v2339
    %v2433 = vadd.f32 %v2298, %v2339
    %v2434 = vadd.f32 %v2299, %v2339
    %v2435 = vadd.f32 %v2300, %v2339
    %v2436 = vadd.f32 %v2301, %v2339
    %v2437 = vadd.f32 %v2302, %v2339
    %v2438 = vadd.f32 %v2303, %v2339
    %v2439 = vadd.f32 %v2304, %v2339
    %v2440 = vadd.f32 %v2305, %v2339
    %v2441 = vadd.f32 %v2306, %v2339
    %v2442 = vadd.f32 %v2307, %v2339
    %v2443 = vadd.f32 %v2308, %v2339
    %v2444 = vadd.f32 %v2309, %v2339
    %v2445 = vadd.f32 %v2310, %v2339
    %v2446 = vadd.f32 %v2311, %v2339
    %v2447 = vadd.f32 %v2312, %v2339
    %v2448 = vadd.f32 %v2313, %v2339
    %v2449 = vadd.f32 %v2314, %v2339
    %v2450 = vadd.f32 %v2315, %v2339
    %v2451 = vadd.f32 %v2316, %v2339
    %v2452 = vadd.f32 %v2317, %v2339
    %v2453 = vadd.f32 %v2318, %v2339
    %v2454 = vadd.f32 %v2319, %v2339
    %v2455 = vadd.f32 %v2320, %v2339
    %v2456 = vadd.f32 %v2321, %v2339
    %v2457 = vadd.f32 %v2322, %v2339
    %v2458 = vadd.f32 %v2323, %v2339
    %v2459 = vadd.f32 %v2324, %v2339
    %v2460 = vadd.f32 %v2325, %v2339
    %v2461 = vadd.f32 %v2326, %v2339
    %v2462 = vadd.f32 %v2327, %v2339
    %v2463 = vadd.f32 %v2328, %v2339
    %v2464 = vadd.f32 %v2329, %v2339
    %v2465 = vadd.f32 %v2330, %v2339
    %v2466 = vadd.f32 %v2331, %v2339
    %v2467 = vadd.f32 %v2332, %v2339
    %v2468 = vadd.f32 %v2333, %v2339
    %v2469 = vmax.f32 %v2341, 0.0
    %v2470 = vmax.f32 %v2342, 0.0
    %v2471 = vmax.f32 %v2343, 0.0
    %v2472 = vmax.f32 %v2344, 0.0
    %v2473 = vmax.f32 %v2345, 0.0
    %v2474 = vmax.f32 %v2346, 0.0
    %v2475 = vmax.f32 %v2347, 0.0
    %v2476 = vmax.f32 %v2348, 0.0
    %v2477 = vmax.f32 %v2349, 0.0
    %v2478 = vmax.f32 %v2350, 0.0
    %v2479 = vmax.f32 %v2351, 0.0
    %v2480 = vmax.f32 %v2352, 0.0
    %v2481 = vmax.f32 %v2353, 0.0
    %v2482 = vmax.f32 %v2354, 0.0
    %v2483 = vmax.f32 %v2355, 0.0
    %v2484 = vmax.f32 %v2356, 0.0
    %v2485 = vmax.f32 %v2357, 0.0
    %v2486 = vmax.f32 %v2358, 0.0
    %v2487 = vmax.f32 %v2359, 0.0
    %v2488 = vmax.f32 %v2360, 0.0
    %v2489 = vmax.f32 %v2361, 0.0
    %v2490 = vmax.f32 %v2362, 0.0
    %v2491 = vmax.f32 %v2363, 0.0
    %v2492 = vmax.f32 %v2364, 0.0
    %v2493 = vmax.f32 %v2365, 0.0
    %v2494 = vmax.f32 %v2366, 0.0
    %v2495 = vmax.f32 %v2367, 0.0
    %v2496 = vmax.f32 %v2368, 0.0
    %v2497 = vmax.f32 %v2369, 0.0
    %v2498 = vmax.f32 %v2370, 0.0
    %v2499 = vmax.f32 %v2371, 0.0
    %v2500 = vmax.f32 %v2372, 0.0
    %v2501 = vmax.f32 %v2373, 0.0
    %v2502 = vmax.f32 %v2374, 0.0
    %v2503 = vmax.f32 %v2375, 0.0
    %v2504 = vmax.f32 %v2376, 0.0
    %v2505 = vmax.f32 %v2377, 0.0
    %v2506 = vmax.f32 %v2378, 0.0
    %v2507 = vmax.f32 %v2379, 0.0
    %v2508 = vmax.f32 %v2380, 0.0
    %v2509 = vmax.f32 %v2381, 0.0
    %v2510 = vmax.f32 %v2382, 0.0
    %v2511 = vmax.f32 %v2383, 0.0
    %v2512 = vmax.f32 %v2384, 0.0
    %v2513 = vmax.f32 %v2385, 0.0
    %v2514 = vmax.f32 %v2386, 0.0
    %v2515 = vmax.f32 %v2387, 0.0
    %v2516 = vmax.f32 %v2388, 0.0
    %v2517 = vmax.f32 %v2389, 0.0
    %v2518 = vmax.f32 %v2390, 0.0
    %v2519 = vmax.f32 %v2391, 0.0
    %v2520 = vmax.f32 %v2392, 0.0
    %v2521 = vmax.f32 %v2393, 0.0
    %v2522 = vmax.f32 %v2394, 0.0
    %v2523 = vmax.f32 %v2395, 0.0
    %v2524 = vmax.f32 %v2396, 0.0
    %v2525 = vmax.f32 %v2397, 0.0
    %v2526 = vmax.f32 %v2398, 0.0
    %v2527 = vmax.f32 %v2399, 0.0
    %v2528 = vmax.f32 %v2400, 0.0
    %v2529 = vmax.f32 %v2401, 0.0
    %v2530 = vmax.f32 %v2402, 0.0
    %v2531 = vmax.f32 %v2403, 0.0
    %v2532 = vmax.f32 %v2404, 0.0
    %v2533 = vmax.f32 %v2405, 0.0
    %v2534 = vmax.f32 %v2406, 0.0
    %v2535 = vmax.f32 %v2407, 0.0
    %v2536 = vmax.f32 %v2408, 0.0
    %v2537 = vmax.f32 %v2409, 0.0
    %v2538 = vmax.f32 %v2410, 0.0
    %v2539 = vmax.f32 %v2411, 0.0
    %v2540 = vmax.f32 %v2412, 0.0
    %v2541 = vmax.f32 %v2413, 0.0
    %v2542 = vmax.f32 %v2414, 0.0
    %v2543 = vmax.f32 %v2415, 0.0
    %v2544 = vmax.f32 %v2416, 0.0
    %v2545 = vmax.f32 %v2417, 0.0
    %v2546 = vmax.f32 %v2418, 0.0
    %v2547 = vmax.f32 %v2419, 0.0
    %v2548 = vmax.f32 %v2420, 0.0
    %v2549 = vmax.f32 %v2421, 0.0
    %v2550 = vmax.f32 %v2422, 0.0
    %v2551 = vmax.f32 %v2423, 0.0
    %v2552 = vmax.f32 %v2424, 0.0
    %v2553 = vmax.f32 %v2425, 0.0
    %v2554 = vmax.f32 %v2426, 0.0
    %v2555 = vmax.f32 %v2427, 0.0
    %v2556 = vmax.f32 %v2428, 0.0
    %v2557 = vmax.f32 %v2429, 0.0
    %v2558 = vmax.f32 %v2430, 0.0
    %v2559 = vmax.f32 %v2431, 0.0
    %v2560 = vmax.f32 %v2432, 0.0
    %v2561 = vmax.f32 %v2433, 0.0
    %v2562 = vmax.f32 %v2434, 0.0
    %v2563 = vmax.f32 %v2435, 0.0
    %v2564 = vmax.f32 %v2436, 0.0
    %v2565 = vmax.f32 %v2437, 0.0
    %v2566 = vmax.f32 %v2438, 0.0
    %v2567 = vmax.f32 %v2439, 0.0
    %v2568 = vmax.f32 %v2440, 0.0
    %v2569 = vmax.f32 %v2441, 0.0
    %v2570 = vmax.f32 %v2442, 0.0
    %v2571 = vmax.f32 %v2443, 0.0
    %v2572 = vmax.f32 %v2444, 0.0
    %v2573 = vmax.f32 %v2445, 0.0
    %v2574 = vmax.f32 %v2446, 0.0
    %v2575 = vmax.f32 %v2447, 0.0
    %v2576 = vmax.f32 %v2448, 0.0
    %v2577 = vmax.f32 %v2449, 0.0
    %v2578 = vmax.f32 %v2450, 0.0
    %v2579 = vmax.f32 %v2451, 0.0
    %v2580 = vmax.f32 %v2452, 0.0
    %v2581 = vmax.f32 %v2453, 0.0
    %v2582 = vmax.f32 %v2454, 0.0
    %v2583 = vmax.f32 %v2455, 0.0
    %v2584 = vmax.f32 %v2456, 0.0
    %v2585 = vmax.f32 %v2457, 0.0
    %v2586 = vmax.f32 %v2458, 0.0
    %v2587 = vmax.f32 %v2459, 0.0
    %v2588 = vmax.f32 %v2460, 0.0
    %v2589 = vmax.f32 %v2461, 0.0
    %v2590 = vmax.f32 %v2462, 0.0
    %v2591 = vmax.f32 %v2463, 0.0
    %v2592 = vmax.f32 %v2464, 0.0
    %v2593 = vmax.f32 %v2465, 0.0
    %v2594 = vmax.f32 %v2466, 0.0
    %v2595 = vmax.f32 %v2467, 0.0
    %v2596 = vmax.f32 %v2468, 0.0
    %v2597 = vpack.c.bf16 %v2470, %v2469
    %v2598 = vpack.c.bf16 %v2472, %v2471
    %v2599 = vpack.c.bf16 %v2474, %v2473
    %v2600 = vpack.c.bf16 %v2476, %v2475
    %v2601 = vpack.c.bf16 %v2478, %v2477
    %v2602 = vpack.c.bf16 %v2480, %v2479
    %v2603 = vpack.c.bf16 %v2482, %v2481
    %v2604 = vpack.c.bf16 %v2484, %v2483
    %v2605 = vpack.c.bf16 %v2486, %v2485
    %v2606 = vpack.c.bf16 %v2488, %v2487
    %v2607 = vpack.c.bf16 %v2490, %v2489
    %v2608 = vpack.c.bf16 %v2492, %v2491
    %v2609 = vpack.c.bf16 %v2494, %v2493
    %v2610 = vpack.c.bf16 %v2496, %v2495
    %v2611 = vpack.c.bf16 %v2498, %v2497
    %v2612 = vpack.c.bf16 %v2500, %v2499
    %v2613 = vpack.c.bf16 %v2502, %v2501
    %v2614 = vpack.c.bf16 %v2504, %v2503
    %v2615 = vpack.c.bf16 %v2506, %v2505
    %v2616 = vpack.c.bf16 %v2508, %v2507
    %v2617 = vpack.c.bf16 %v2510, %v2509
    %v2618 = vpack.c.bf16 %v2512, %v2511
    %v2619 = vpack.c.bf16 %v2514, %v2513
    %v2620 = vpack.c.bf16 %v2516, %v2515
    %v2621 = vpack.c.bf16 %v2518, %v2517
    %v2622 = vpack.c.bf16 %v2520, %v2519
    %v2623 = vpack.c.bf16 %v2522, %v2521
    %v2624 = vpack.c.bf16 %v2524, %v2523
    %v2625 = vpack.c.bf16 %v2526, %v2525
    %v2626 = vpack.c.bf16 %v2528, %v2527
    %v2627 = vpack.c.bf16 %v2530, %v2529
    %v2628 = vpack.c.bf16 %v2532, %v2531
    %v2629 = vpack.c.bf16 %v2534, %v2533
    %v2630 = vpack.c.bf16 %v2536, %v2535
    %v2631 = vpack.c.bf16 %v2538, %v2537
    %v2632 = vpack.c.bf16 %v2540, %v2539
    %v2633 = vpack.c.bf16 %v2542, %v2541
    %v2634 = vpack.c.bf16 %v2544, %v2543
    %v2635 = vpack.c.bf16 %v2546, %v2545
    %v2636 = vpack.c.bf16 %v2548, %v2547
    %v2637 = vpack.c.bf16 %v2550, %v2549
    %v2638 = vpack.c.bf16 %v2552, %v2551
    %v2639 = vpack.c.bf16 %v2554, %v2553
    %v2640 = vpack.c.bf16 %v2556, %v2555
    %v2641 = vpack.c.bf16 %v2558, %v2557
    %v2642 = vpack.c.bf16 %v2560, %v2559
    %v2643 = vpack.c.bf16 %v2562, %v2561
    %v2644 = vpack.c.bf16 %v2564, %v2563
    %v2645 = vpack.c.bf16 %v2566, %v2565
    %v2646 = vpack.c.bf16 %v2568, %v2567
    %v2647 = vpack.c.bf16 %v2570, %v2569
    %v2648 = vpack.c.bf16 %v2572, %v2571
    %v2649 = vpack.c.bf16 %v2574, %v2573
    %v2650 = vpack.c.bf16 %v2576, %v2575
    %v2651 = vpack.c.bf16 %v2578, %v2577
    %v2652 = vpack.c.bf16 %v2580, %v2579
    %v2653 = vpack.c.bf16 %v2582, %v2581
    %v2654 = vpack.c.bf16 %v2584, %v2583
    %v2655 = vpack.c.bf16 %v2586, %v2585
    %v2656 = vpack.c.bf16 %v2588, %v2587
    %v2657 = vpack.c.bf16 %v2590, %v2589
    %v2658 = vpack.c.bf16 %v2592, %v2591
    %v2659 = vpack.c.bf16 %v2594, %v2593
    %v2660 = vpack.c.bf16 %v2596, %v2595
    %v2725 = vunpack.c.l.b16 %v2597
    %v2726 = vunpack.c.h.b16 %v2597
    %v2727 = vunpack.c.l.b16 %v2598
    %v2728 = vunpack.c.h.b16 %v2598
    %v2729 = vunpack.c.l.b16 %v2599
    %v2730 = vunpack.c.h.b16 %v2599
    %v2731 = vunpack.c.l.b16 %v2600
    %v2732 = vunpack.c.h.b16 %v2600
    %v2733 = vunpack.c.l.b16 %v2601
    %v2734 = vunpack.c.h.b16 %v2601
    %v2735 = vunpack.c.l.b16 %v2602
    %v2736 = vunpack.c.h.b16 %v2602
    %v2737 = vunpack.c.l.b16 %v2603
    %v2738 = vunpack.c.h.b16 %v2603
    %v2739 = vunpack.c.l.b16 %v2604
    %v2740 = vunpack.c.h.b16 %v2604
    %v2741 = vunpack.c.l.b16 %v2605
    %v2742 = vunpack.c.h.b16 %v2605
    %v2743 = vunpack.c.l.b16 %v2606
    %v2744 = vunpack.c.h.b16 %v2606
    %v2745 = vunpack.c.l.b16 %v2607
    %v2746 = vunpack.c.h.b16 %v2607
    %v2747 = vunpack.c.l.b16 %v2608
    %v2748 = vunpack.c.h.b16 %v2608
    %v2749 = vunpack.c.l.b16 %v2609
    %v2750 = vunpack.c.h.b16 %v2609
    %v2751 = vunpack.c.l.b16 %v2610
    %v2752 = vunpack.c.h.b16 %v2610
    %v2753 = vunpack.c.l.b16 %v2611
    %v2754 = vunpack.c.h.b16 %v2611
    %v2755 = vunpack.c.l.b16 %v2612
    %v2756 = vunpack.c.h.b16 %v2612
    %v2757 = vunpack.c.l.b16 %v2613
    %v2758 = vunpack.c.h.b16 %v2613
    %v2759 = vunpack.c.l.b16 %v2614
    %v2760 = vunpack.c.h.b16 %v2614
    %v2761 = vunpack.c.l.b16 %v2615
    %v2762 = vunpack.c.h.b16 %v2615
    %v2763 = vunpack.c.l.b16 %v2616
    %v2764 = vunpack.c.h.b16 %v2616
    %v2765 = vunpack.c.l.b16 %v2617
    %v2766 = vunpack.c.h.b16 %v2617
    %v2767 = vunpack.c.l.b16 %v2618
    %v2768 = vunpack.c.h.b16 %v2618
    %v2769 = vunpack.c.l.b16 %v2619
    %v2770 = vunpack.c.h.b16 %v2619
    %v2771 = vunpack.c.l.b16 %v2620
    %v2772 = vunpack.c.h.b16 %v2620
    %v2773 = vunpack.c.l.b16 %v2621
    %v2774 = vunpack.c.h.b16 %v2621
    %v2775 = vunpack.c.l.b16 %v2622
    %v2776 = vunpack.c.h.b16 %v2622
    %v2777 = vunpack.c.l.b16 %v2623
    %v2778 = vunpack.c.h.b16 %v2623
    %v2779 = vunpack.c.l.b16 %v2624
    %v2780 = vunpack.c.h.b16 %v2624
    %v2781 = vunpack.c.l.b16 %v2625
    %v2782 = vunpack.c.h.b16 %v2625
    %v2783 = vunpack.c.l.b16 %v2626
    %v2784 = vunpack.c.h.b16 %v2626
    %v2785 = vunpack.c.l.b16 %v2627
    %v2786 = vunpack.c.h.b16 %v2627
    %v2787 = vunpack.c.l.b16 %v2628
    %v2788 = vunpack.c.h.b16 %v2628
    %v2789 = vunpack.c.l.b16 %v2629
    %v2790 = vunpack.c.h.b16 %v2629
    %v2791 = vunpack.c.l.b16 %v2630
    %v2792 = vunpack.c.h.b16 %v2630
    %v2793 = vunpack.c.l.b16 %v2631
    %v2794 = vunpack.c.h.b16 %v2631
    %v2795 = vunpack.c.l.b16 %v2632
    %v2796 = vunpack.c.h.b16 %v2632
    %v2797 = vunpack.c.l.b16 %v2633
    %v2798 = vunpack.c.h.b16 %v2633
    %v2799 = vunpack.c.l.b16 %v2634
    %v2800 = vunpack.c.h.b16 %v2634
    %v2801 = vunpack.c.l.b16 %v2635
    %v2802 = vunpack.c.h.b16 %v2635
    %v2803 = vunpack.c.l.b16 %v2636
    %v2804 = vunpack.c.h.b16 %v2636
    %v2805 = vunpack.c.l.b16 %v2637
    %v2806 = vunpack.c.h.b16 %v2637
    %v2807 = vunpack.c.l.b16 %v2638
    %v2808 = vunpack.c.h.b16 %v2638
    %v2809 = vunpack.c.l.b16 %v2639
    %v2810 = vunpack.c.h.b16 %v2639
    %v2811 = vunpack.c.l.b16 %v2640
    %v2812 = vunpack.c.h.b16 %v2640
    %v2813 = vunpack.c.l.b16 %v2641
    %v2814 = vunpack.c.h.b16 %v2641
    %v2815 = vunpack.c.l.b16 %v2642
    %v2816 = vunpack.c.h.b16 %v2642
    %v2817 = vunpack.c.l.b16 %v2643
    %v2818 = vunpack.c.h.b16 %v2643
    %v2819 = vunpack.c.l.b16 %v2644
    %v2820 = vunpack.c.h.b16 %v2644
    %v2821 = vunpack.c.l.b16 %v2645
    %v2822 = vunpack.c.h.b16 %v2645
    %v2823 = vunpack.c.l.b16 %v2646
    %v2824 = vunpack.c.h.b16 %v2646
    %v2825 = vunpack.c.l.b16 %v2647
    %v2826 = vunpack.c.h.b16 %v2647
    %v2827 = vunpack.c.l.b16 %v2648
    %v2828 = vunpack.c.h.b16 %v2648
    %v2829 = vunpack.c.l.b16 %v2649
    %v2830 = vunpack.c.h.b16 %v2649
    %v2831 = vunpack.c.l.b16 %v2650
    %v2832 = vunpack.c.h.b16 %v2650
    %v2833 = vunpack.c.l.b16 %v2651
    %v2834 = vunpack.c.h.b16 %v2651
    %v2835 = vunpack.c.l.b16 %v2652
    %v2836 = vunpack.c.h.b16 %v2652
    %v2837 = vunpack.c.l.b16 %v2653
    %v2838 = vunpack.c.h.b16 %v2653
    %v2839 = vunpack.c.l.b16 %v2654
    %v2840 = vunpack.c.h.b16 %v2654
    %v2841 = vunpack.c.l.b16 %v2655
    %v2842 = vunpack.c.h.b16 %v2655
    %v2843 = vunpack.c.l.b16 %v2656
    %v2844 = vunpack.c.h.b16 %v2656
    %v2845 = vunpack.c.l.b16 %v2657
    %v2846 = vunpack.c.h.b16 %v2657
    %v2847 = vunpack.c.l.b16 %v2658
    %v2848 = vunpack.c.h.b16 %v2658
    %v2849 = vunpack.c.l.b16 %v2659
    %v2850 = vunpack.c.h.b16 %v2659
    %v2851 = vunpack.c.l.b16 %v2660
    %v2852 = vunpack.c.h.b16 %v2660
    %v2853 = vpack.c.b16 %v2725, %v2725
    %v2854 = vpack.c.b16 %v2726, %v2726
    %v2855 = vpack.c.b16 %v2727, %v2727
    %v2856 = vpack.c.b16 %v2728, %v2728
    %v2857 = vpack.c.b16 %v2729, %v2729
    %v2858 = vpack.c.b16 %v2730, %v2730
    %v2859 = vpack.c.b16 %v2731, %v2731
    %v2860 = vpack.c.b16 %v2732, %v2732
    %v2861 = vpack.c.b16 %v2733, %v2733
    %v2862 = vpack.c.b16 %v2734, %v2734
    %v2863 = vpack.c.b16 %v2735, %v2735
    %v2864 = vpack.c.b16 %v2736, %v2736
    %v2865 = vpack.c.b16 %v2737, %v2737
    %v2866 = vpack.c.b16 %v2738, %v2738
    %v2867 = vpack.c.b16 %v2739, %v2739
    %v2868 = vpack.c.b16 %v2740, %v2740
    %v2869 = vpack.c.b16 %v2741, %v2741
    %v2870 = vpack.c.b16 %v2742, %v2742
    %v2871 = vpack.c.b16 %v2743, %v2743
    %v2872 = vpack.c.b16 %v2744, %v2744
    %v2873 = vpack.c.b16 %v2745, %v2745
    %v2874 = vpack.c.b16 %v2746, %v2746
    %v2875 = vpack.c.b16 %v2747, %v2747
    %v2876 = vpack.c.b16 %v2748, %v2748
    %v2877 = vpack.c.b16 %v2749, %v2749
    %v2878 = vpack.c.b16 %v2750, %v2750
    %v2879 = vpack.c.b16 %v2751, %v2751
    %v2880 = vpack.c.b16 %v2752, %v2752
    %v2881 = vpack.c.b16 %v2753, %v2753
    %v2882 = vpack.c.b16 %v2754, %v2754
    %v2883 = vpack.c.b16 %v2755, %v2755
    %v2884 = vpack.c.b16 %v2756, %v2756
    %v2885 = vpack.c.b16 %v2757, %v2757
    %v2886 = vpack.c.b16 %v2758, %v2758
    %v2887 = vpack.c.b16 %v2759, %v2759
    %v2888 = vpack.c.b16 %v2760, %v2760
    %v2889 = vpack.c.b16 %v2761, %v2761
    %v2890 = vpack.c.b16 %v2762, %v2762
    %v2891 = vpack.c.b16 %v2763, %v2763
    %v2892 = vpack.c.b16 %v2764, %v2764
    %v2893 = vpack.c.b16 %v2765, %v2765
    %v2894 = vpack.c.b16 %v2766, %v2766
    %v2895 = vpack.c.b16 %v2767, %v2767
    %v2896 = vpack.c.b16 %v2768, %v2768
    %v2897 = vpack.c.b16 %v2769, %v2769
    %v2898 = vpack.c.b16 %v2770, %v2770
    %v2899 = vpack.c.b16 %v2771, %v2771
    %v2900 = vpack.c.b16 %v2772, %v2772
    %v2901 = vpack.c.b16 %v2773, %v2773
    %v2902 = vpack.c.b16 %v2774, %v2774
    %v2903 = vpack.c.b16 %v2775, %v2775
    %v2904 = vpack.c.b16 %v2776, %v2776
    %v2905 = vpack.c.b16 %v2777, %v2777
    %v2906 = vpack.c.b16 %v2778, %v2778
    %v2907 = vpack.c.b16 %v2779, %v2779
    %v2908 = vpack.c.b16 %v2780, %v2780
    %v2909 = vpack.c.b16 %v2781, %v2781
    %v2910 = vpack.c.b16 %v2782, %v2782
    %v2911 = vpack.c.b16 %v2783, %v2783
    %v2912 = vpack.c.b16 %v2784, %v2784
    %v2913 = vpack.c.b16 %v2785, %v2785
    %v2914 = vpack.c.b16 %v2786, %v2786
    %v2915 = vpack.c.b16 %v2787, %v2787
    %v2916 = vpack.c.b16 %v2788, %v2788
    %v2917 = vpack.c.b16 %v2789, %v2789
    %v2918 = vpack.c.b16 %v2790, %v2790
    %v2919 = vpack.c.b16 %v2791, %v2791
    %v2920 = vpack.c.b16 %v2792, %v2792
    %v2921 = vpack.c.b16 %v2793, %v2793
    %v2922 = vpack.c.b16 %v2794, %v2794
    %v2923 = vpack.c.b16 %v2795, %v2795
    %v2924 = vpack.c.b16 %v2796, %v2796
    %v2925 = vpack.c.b16 %v2797, %v2797
    %v2926 = vpack.c.b16 %v2798, %v2798
    %v2927 = vpack.c.b16 %v2799, %v2799
    %v2928 = vpack.c.b16 %v2800, %v2800
    %v2929 = vpack.c.b16 %v2801, %v2801
    %v2930 = vpack.c.b16 %v2802, %v2802
    %v2931 = vpack.c.b16 %v2803, %v2803
    %v2932 = vpack.c.b16 %v2804, %v2804
    %v2933 = vpack.c.b16 %v2805, %v2805
    %v2934 = vpack.c.b16 %v2806, %v2806
    %v2935 = vpack.c.b16 %v2807, %v2807
    %v2936 = vpack.c.b16 %v2808, %v2808
    %v2937 = vpack.c.b16 %v2809, %v2809
    %v2938 = vpack.c.b16 %v2810, %v2810
    %v2939 = vpack.c.b16 %v2811, %v2811
    %v2940 = vpack.c.b16 %v2812, %v2812
    %v2941 = vpack.c.b16 %v2813, %v2813
    %v2942 = vpack.c.b16 %v2814, %v2814
    %v2943 = vpack.c.b16 %v2815, %v2815
    %v2944 = vpack.c.b16 %v2816, %v2816
    %v2945 = vpack.c.b16 %v2817, %v2817
    %v2946 = vpack.c.b16 %v2818, %v2818
    %v2947 = vpack.c.b16 %v2819, %v2819
    %v2948 = vpack.c.b16 %v2820, %v2820
    %v2949 = vpack.c.b16 %v2821, %v2821
    %v2950 = vpack.c.b16 %v2822, %v2822
    %v2951 = vpack.c.b16 %v2823, %v2823
    %v2952 = vpack.c.b16 %v2824, %v2824
    %v2953 = vpack.c.b16 %v2825, %v2825
    %v2954 = vpack.c.b16 %v2826, %v2826
    %v2955 = vpack.c.b16 %v2827, %v2827
    %v2956 = vpack.c.b16 %v2828, %v2828
    %v2957 = vpack.c.b16 %v2829, %v2829
    %v2958 = vpack.c.b16 %v2830, %v2830
    %v2959 = vpack.c.b16 %v2831, %v2831
    %v2960 = vpack.c.b16 %v2832, %v2832
    %v2961 = vpack.c.b16 %v2833, %v2833
    %v2962 = vpack.c.b16 %v2834, %v2834
    %v2963 = vpack.c.b16 %v2835, %v2835
    %v2964 = vpack.c.b16 %v2836, %v2836
    %v2965 = vpack.c.b16 %v2837, %v2837
    %v2966 = vpack.c.b16 %v2838, %v2838
    %v2967 = vpack.c.b16 %v2839, %v2839
    %v2968 = vpack.c.b16 %v2840, %v2840
    %v2969 = vpack.c.b16 %v2841, %v2841
    %v2970 = vpack.c.b16 %v2842, %v2842
    %v2971 = vpack.c.b16 %v2843, %v2843
    %v2972 = vpack.c.b16 %v2844, %v2844
    %v2973 = vpack.c.b16 %v2845, %v2845
    %v2974 = vpack.c.b16 %v2846, %v2846
    %v2975 = vpack.c.b16 %v2847, %v2847
    %v2976 = vpack.c.b16 %v2848, %v2848
    %v2977 = vpack.c.b16 %v2849, %v2849
    %v2978 = vpack.c.b16 %v2850, %v2850
    %v2979 = vpack.c.b16 %v2851, %v2851
    %v2980 = vpack.c.b16 %v2852, %v2852
    %3109 = vst [vmem:[#allocation2] sm:$0xf] %v2853
    %3110 = vst [vmem:[#allocation2 + $0x4] sm:$0xf] %v2854
    %3111 = vst [vmem:[#allocation2 + $0x8] sm:$0xf] %v2855
    %3112 = vst [vmem:[#allocation2 + $0xc] sm:$0xf] %v2856
    %3113 = vst [vmem:[#allocation2 + $0x10] sm:$0xf] %v2857
    %3114 = vst [vmem:[#allocation2 + $0x14] sm:$0xf] %v2858
    %3115 = vst [vmem:[#allocation2 + $0x18] sm:$0xf] %v2859
    %3116 = vst [vmem:[#allocation2 + $0x1c] sm:$0xf] %v2860
    %3117 = vst [vmem:[#allocation2 + $0x20] sm:$0xf] %v2861
    %3118 = vst [vmem:[#allocation2 + $0x24] sm:$0xf] %v2862
    %3119 = vst [vmem:[#allocation2 + $0x28] sm:$0xf] %v2863
    %3120 = vst [vmem:[#allocation2 + $0x2c] sm:$0xf] %v2864
    %3121 = vst [vmem:[#allocation2 + $0x30] sm:$0xf] %v2865
    %3122 = vst [vmem:[#allocation2 + $0x34] sm:$0xf] %v2866
    %3123 = vst [vmem:[#allocation2 + $0x38] sm:$0xf] %v2867
    %3124 = vst [vmem:[#allocation2 + $0x3c] sm:$0xf] %v2868
    %3125 = vst [vmem:[#allocation2 + $0x40] sm:$0xf] %v2869
    %3126 = vst [vmem:[#allocation2 + $0x44] sm:$0xf] %v2870
    %3127 = vst [vmem:[#allocation2 + $0x48] sm:$0xf] %v2871
    %3128 = vst [vmem:[#allocation2 + $0x4c] sm:$0xf] %v2872
    %3129 = vst [vmem:[#allocation2 + $0x50] sm:$0xf] %v2873
    %3130 = vst [vmem:[#allocation2 + $0x54] sm:$0xf] %v2874
    %3131 = vst [vmem:[#allocation2 + $0x58] sm:$0xf] %v2875
    %3132 = vst [vmem:[#allocation2 + $0x5c] sm:$0xf] %v2876
    %3133 = vst [vmem:[#allocation2 + $0x60] sm:$0xf] %v2877
    %3134 = vst [vmem:[#allocation2 + $0x64] sm:$0xf] %v2878
    %3135 = vst [vmem:[#allocation2 + $0x68] sm:$0xf] %v2879
    %3136 = vst [vmem:[#allocation2 + $0x6c] sm:$0xf] %v2880
    %3137 = vst [vmem:[#allocation2 + $0x70] sm:$0xf] %v2881
    %3138 = vst [vmem:[#allocation2 + $0x74] sm:$0xf] %v2882
    %3139 = vst [vmem:[#allocation2 + $0x78] sm:$0xf] %v2883
    %3140 = vst [vmem:[#allocation2 + $0x7c] sm:$0xf] %v2884
    %3141 = vst [vmem:[#allocation2 + $0x80] sm:$0xf] %v2885
    %3142 = vst [vmem:[#allocation2 + $0x84] sm:$0xf] %v2886
    %3143 = vst [vmem:[#allocation2 + $0x88] sm:$0xf] %v2887
    %3144 = vst [vmem:[#allocation2 + $0x8c] sm:$0xf] %v2888
    %3145 = vst [vmem:[#allocation2 + $0x90] sm:$0xf] %v2889
    %3146 = vst [vmem:[#allocation2 + $0x94] sm:$0xf] %v2890
    %3147 = vst [vmem:[#allocation2 + $0x98] sm:$0xf] %v2891
    %3148 = vst [vmem:[#allocation2 + $0x9c] sm:$0xf] %v2892
    %3149 = vst [vmem:[#allocation2 + $0xa0] sm:$0xf] %v2893
    %3150 = vst [vmem:[#allocation2 + $0xa4] sm:$0xf] %v2894
    %3151 = vst [vmem:[#allocation2 + $0xa8] sm:$0xf] %v2895
    %3152 = vst [vmem:[#allocation2 + $0xac] sm:$0xf] %v2896
    %3153 = vst [vmem:[#allocation2 + $0xb0] sm:$0xf] %v2897
    %3154 = vst [vmem:[#allocation2 + $0xb4] sm:$0xf] %v2898
    %3155 = vst [vmem:[#allocation2 + $0xb8] sm:$0xf] %v2899
    %3156 = vst [vmem:[#allocation2 + $0xbc] sm:$0xf] %v2900
    %3157 = vst [vmem:[#allocation2 + $0xc0] sm:$0xf] %v2901
    %3158 = vst [vmem:[#allocation2 + $0xc4] sm:$0xf] %v2902
    %3159 = vst [vmem:[#allocation2 + $0xc8] sm:$0xf] %v2903
    %3160 = vst [vmem:[#allocation2 + $0xcc] sm:$0xf] %v2904
    %3161 = vst [vmem:[#allocation2 + $0xd0] sm:$0xf] %v2905
    %3162 = vst [vmem:[#allocation2 + $0xd4] sm:$0xf] %v2906
    %3163 = vst [vmem:[#allocation2 + $0xd8] sm:$0xf] %v2907
    %3164 = vst [vmem:[#allocation2 + $0xdc] sm:$0xf] %v2908
    %3165 = vst [vmem:[#allocation2 + $0xe0] sm:$0xf] %v2909
    %3166 = vst [vmem:[#allocation2 + $0xe4] sm:$0xf] %v2910
    %3167 = vst [vmem:[#allocation2 + $0xe8] sm:$0xf] %v2911
    %3168 = vst [vmem:[#allocation2 + $0xec] sm:$0xf] %v2912
    %3169 = vst [vmem:[#allocation2 + $0xf0] sm:$0xf] %v2913
    %3170 = vst [vmem:[#allocation2 + $0xf4] sm:$0xf] %v2914
    %3171 = vst [vmem:[#allocation2 + $0xf8] sm:$0xf] %v2915
    %3172 = vst [vmem:[#allocation2 + $0xfc] sm:$0xf] %v2916
    %3173 = vst [vmem:[#allocation2 + $0x100] sm:$0xf] %v2917
    %3174 = vst [vmem:[#allocation2 + $0x104] sm:$0xf] %v2918
    %3175 = vst [vmem:[#allocation2 + $0x108] sm:$0xf] %v2919
    %3176 = vst [vmem:[#allocation2 + $0x10c] sm:$0xf] %v2920
    %3177 = vst [vmem:[#allocation2 + $0x110] sm:$0xf] %v2921
    %3178 = vst [vmem:[#allocation2 + $0x114] sm:$0xf] %v2922
    %3179 = vst [vmem:[#allocation2 + $0x118] sm:$0xf] %v2923
    %3180 = vst [vmem:[#allocation2 + $0x11c] sm:$0xf] %v2924
    %3181 = vst [vmem:[#allocation2 + $0x120] sm:$0xf] %v2925
    %3182 = vst [vmem:[#allocation2 + $0x124] sm:$0xf] %v2926
    %3183 = vst [vmem:[#allocation2 + $0x128] sm:$0xf] %v2927
    %3184 = vst [vmem:[#allocation2 + $0x12c] sm:$0xf] %v2928
    %3185 = vst [vmem:[#allocation2 + $0x130] sm:$0xf] %v2929
    %3186 = vst [vmem:[#allocation2 + $0x134] sm:$0xf] %v2930
    %3187 = vst [vmem:[#allocation2 + $0x138] sm:$0xf] %v2931
    %3188 = vst [vmem:[#allocation2 + $0x13c] sm:$0xf] %v2932
    %3189 = vst [vmem:[#allocation2 + $0x140] sm:$0xf] %v2933
    %3190 = vst [vmem:[#allocation2 + $0x144] sm:$0xf] %v2934
    %3191 = vst [vmem:[#allocation2 + $0x148] sm:$0xf] %v2935
    %3192 = vst [vmem:[#allocation2 + $0x14c] sm:$0xf] %v2936
    %3193 = vst [vmem:[#allocation2 + $0x150] sm:$0xf] %v2937
    %3194 = vst [vmem:[#allocation2 + $0x154] sm:$0xf] %v2938
    %3195 = vst [vmem:[#allocation2 + $0x158] sm:$0xf] %v2939
    %3196 = vst [vmem:[#allocation2 + $0x15c] sm:$0xf] %v2940
    %3197 = vst [vmem:[#allocation2 + $0x160] sm:$0xf] %v2941
    %3198 = vst [vmem:[#allocation2 + $0x164] sm:$0xf] %v2942
    %3199 = vst [vmem:[#allocation2 + $0x168] sm:$0xf] %v2943
    %3200 = vst [vmem:[#allocation2 + $0x16c] sm:$0xf] %v2944
    %3201 = vst [vmem:[#allocation2 + $0x170] sm:$0xf] %v2945
    %3202 = vst [vmem:[#allocation2 + $0x174] sm:$0xf] %v2946
    %3203 = vst [vmem:[#allocation2 + $0x178] sm:$0xf] %v2947
    %3204 = vst [vmem:[#allocation2 + $0x17c] sm:$0xf] %v2948
    %3205 = vst [vmem:[#allocation2 + $0x180] sm:$0xf] %v2949
    %3206 = vst [vmem:[#allocation2 + $0x184] sm:$0xf] %v2950
    %3207 = vst [vmem:[#allocation2 + $0x188] sm:$0xf] %v2951
    %3208 = vst [vmem:[#allocation2 + $0x18c] sm:$0xf] %v2952
    %3209 = vst [vmem:[#allocation2 + $0x190] sm:$0xf] %v2953
    %3210 = vst [vmem:[#allocation2 + $0x194] sm:$0xf] %v2954
    %3211 = vst [vmem:[#allocation2 + $0x198] sm:$0xf] %v2955
    %3212 = vst [vmem:[#allocation2 + $0x19c] sm:$0xf] %v2956
    %3213 = vst [vmem:[#allocation2 + $0x1a0] sm:$0xf] %v2957
    %3214 = vst [vmem:[#allocation2 + $0x1a4] sm:$0xf] %v2958
    %3215 = vst [vmem:[#allocation2 + $0x1a8] sm:$0xf] %v2959
    %3216 = vst [vmem:[#allocation2 + $0x1ac] sm:$0xf] %v2960
    %3217 = vst [vmem:[#allocation2 + $0x1b0] sm:$0xf] %v2961
    %3218 = vst [vmem:[#allocation2 + $0x1b4] sm:$0xf] %v2962
    %3219 = vst [vmem:[#allocation2 + $0x1b8] sm:$0xf] %v2963
    %3220 = vst [vmem:[#allocation2 + $0x1bc] sm:$0xf] %v2964
    %3221 = vst [vmem:[#allocation2 + $0x1c0] sm:$0xf] %v2965
    %3222 = vst [vmem:[#allocation2 + $0x1c4] sm:$0xf] %v2966
    %3223 = vst [vmem:[#allocation2 + $0x1c8] sm:$0xf] %v2967
    %3224 = vst [vmem:[#allocation2 + $0x1cc] sm:$0xf] %v2968
    %3225 = vst [vmem:[#allocation2 + $0x1d0] sm:$0xf] %v2969
    %3226 = vst [vmem:[#allocation2 + $0x1d4] sm:$0xf] %v2970
    %3227 = vst [vmem:[#allocation2 + $0x1d8] sm:$0xf] %v2971
    %3228 = vst [vmem:[#allocation2 + $0x1dc] sm:$0xf] %v2972
    %3229 = vst [vmem:[#allocation2 + $0x1e0] sm:$0xf] %v2973
    %3230 = vst [vmem:[#allocation2 + $0x1e4] sm:$0xf] %v2974
    %3231 = vst [vmem:[#allocation2 + $0x1e8] sm:$0xf] %v2975
    %3232 = vst [vmem:[#allocation2 + $0x1ec] sm:$0xf] %v2976
    %3233 = vst [vmem:[#allocation2 + $0x1f0] sm:$0xf] %v2977
    %3234 = vst [vmem:[#allocation2 + $0x1f4] sm:$0xf] %v2978
    %3235 = vst [vmem:[#allocation2 + $0x1f8] sm:$0xf] %v2979
    %3236 = vst [vmem:[#allocation2 + $0x1fc] sm:$0xf] %v2980
    // Predicated region
    $region18: #{tpu_custom_call.1} parent=1 // pred_check
      _
    $region19: #{tpu_custom_call.1} parent=1 // pred_check_branch
      %3238 = sbr.rel (0) target = $region21
    $region20: #{tpu_custom_call.1} parent=1 // pred_region
      %s3240 = ssub.s32 8192, 8192
      %3241 = vsyncadd [#allocation3], %s3240
      %s3242 = sshll.u32 [#allocation2], 4
      %s3243 = int_to_ptr.vmem [resolvable:$true] %s3242
      %3248 = dma.vmem_to_hbm [thread:$0]  %s3243, 8192, %s4, [#allocation3], 64, 64, 4
    $region21: #{tpu_custom_call.1} parent=1 // pred_fallthru
      _
    // Predicated region
    $region22: #{tpu_custom_call.1} parent=1 // pred_check
      _
    $region23: #{tpu_custom_call.1} parent=1 // pred_check_branch
      %3250 = sbr.rel (0) target = $region25
    $region24: #{tpu_custom_call.1} parent=1 // pred_region
      %3251 = dma.done [#allocation3], 8192
    $region25: #{tpu_custom_call.1} parent=1 // pred_fallthru
      _
    %3252 = vsyncpa [#allocation3], 1

</llo_original>
